<compile_context>
chip_gen: v6e
topology: v6e:2x2x1
jax: 0.10.0
libtpu: 0.0.40
codegen_flags: <defaults>
</compile_context>

<pallas_src>
import jax
import jax.numpy as jnp
from jax import lax
from jax.experimental import pallas as pl
from jax.experimental.pallas import tpu as pltpu


# ----------------------------------------------------------------------------
# Fused forward kernel (one batch tile per grid step)
# ----------------------------------------------------------------------------
def _mnist_fused_kernel(x_ref, t1_ref, b1_ref, t2_ref, b2_ref,
                        fw1_ref, fb1_ref, fw2_ref, fb2_ref, o_ref):
    TB = x_ref.shape[0]
    f32 = jnp.float32
    bf16 = jnp.bfloat16

    x = x_ref[...].astype(f32)                                 # (TB, 28, 28)

    # --- conv1 (5x5, 1->10): 5 accumulated per-row-tap matmuls --------------
    # rows = (batch, out_row); RHS lanes: [0:120) = even out-cols (w*10 + c),
    # [128:248) = odd out-cols (parity block aligned to lane 128).
    def c1_tap(ki):
        xk = x[:, ki:ki + 24, :].reshape(TB * 24, 28).astype(bf16)
        return jnp.dot(xk, t1_ref[ki], preferred_element_type=f32)

    c1 = c1_tap(0)
    for ki in range(1, 5):
        c1 = c1 + c1_tap(ki)                                   # (TB*24, 256) f32

    p1 = jnp.maximum(c1[:, :120], c1[:, 128:248])              # width pool, aligned halves
    h1 = p1.reshape(TB, 12, 2, 120).max(axis=2)                # height pool
    h1 = jnp.maximum(h1 + b1_ref[...], 0.0)                    # bias + ReLU, (TB, 12, 120)

    # conv2_drop (nn.Dropout2d): eval-mode identity.
    # --- conv2 (5x5, 10->20): 5 accumulated per-row-tap matmuls -------------
    def c2_tap(ki):
        hk = h1[:, ki:ki + 8, :].reshape(TB * 8, 120).astype(bf16)
        return jnp.dot(hk, t2_ref[ki], preferred_element_type=f32)

    c2 = c2_tap(0)
    for ki in range(1, 5):
        c2 = c2 + c2_tap(ki)                                   # (TB*8, 256) f32

    p2 = jnp.maximum(c2[:, :80], c2[:, 128:208])               # width pool, aligned halves
    g = p2.reshape(TB, 4, 2, 80).max(axis=2)                   # height pool
    g = jnp.maximum(g + b2_ref[...], 0.0)                      # (TB, 4, 80)

    # --- fc1: 4 accumulated matmuls (no (h,w,c) lane-concat) ----------------
    # fw1 rows are pre-permuted so per-h blocks match g's (w, c) lane order.
    z = jnp.dot(g[:, 0, :].astype(bf16), fw1_ref[0], preferred_element_type=f32)
    for h in range(1, 4):
        z = z + jnp.dot(g[:, h, :].astype(bf16), fw1_ref[h],
                        preferred_element_type=f32)
    z = jnp.maximum(z + fb1_ref[...], 0.0)                     # (TB, 50)
    # TODO(synk): F.dropout(training=True) stochastic masking not implemented;
    #             eval-mode identity is used (matches model.eval()).

    # --- fc2, lane-dense (10 -> 128 padded) output --------------------------
    out = jnp.dot(z.astype(bf16), fw2_ref[...], preferred_element_type=f32)
    o_ref[...] = (out + fb2_ref[...]).astype(o_ref.dtype)      # (TB, 128)


# ----------------------------------------------------------------------------
# One-time parameter repack (pure JAX, outside the kernel)
# ----------------------------------------------------------------------------
def prepare_params(p):
    """Repack PyTorch-layout params into banded / permuted bf16 operands."""
    f32 = jnp.float32
    bf16 = jnp.bfloat16
    w1 = p["w1"].astype(f32)      # (5, 5, 1, 10)  HWIO
    w2 = p["w2"].astype(f32)      # (5, 5, 10, 20) HWIO
    b1 = p["b1"].astype(f32)      # (10,)
    b2 = p["b2"].astype(f32)      # (20,)
    fw1 = p["fw1"].astype(f32)    # (320, 50), rows in PyTorch (c, h, w) order
    fb1 = p["fb1"].astype(f32)    # (50,)
    fw2 = p["fw2"].astype(f32)    # (50, 10)
    fb2 = p["fb2"].astype(f32)    # (10,)

    # conv1 per-row-tap banded matrices, shape (5, 28, 256):
    #   t1[ki, ic, wp*128 + w*10 + c] = w1[ki, ic - (2w + wp), 0, c] (band-masked)
    ic = jnp.arange(28)
    kj = ic[:, None, None] - (2 * jnp.arange(12)[None, None, :]
                              + jnp.arange(2)[None, :, None])       # (28, 2, 12)
    band1 = ((kj >= 0) & (kj < 5)).astype(f32)
    t1 = w1[:, :, 0, :][:, jnp.clip(kj, 0, 4), :]                   # (5, 28, 2, 12, 10)
    t1 = (t1 * band1[None, :, :, :, None]).reshape(5, 28, 2, 120)
    t1 = jnp.pad(t1, ((0, 0), (0, 0), (0, 0), (0, 8))).reshape(5, 28, 256)

    # conv2 per-row-tap banded matrices, shape (5, 120, 256):
    #   t2[ki, win*10 + cin, wp*128 + w*20 + c2] = w2[ki, win - (2w+wp), cin, c2]
    win = jnp.arange(12)
    kj2 = win[:, None, None] - (2 * jnp.arange(4)[None, None, :]
                                + jnp.arange(2)[None, :, None])     # (12, 2, 4)
    band2 = ((kj2 >= 0) & (kj2 < 5)).astype(f32)
    t2 = w2[:, jnp.clip(kj2, 0, 4), :, :]                           # (5, 12, 2, 4, 10, 20)
    t2 = t2 * band2[None, :, :, :, None, None]
    t2 = t2.transpose(0, 1, 4, 2, 3, 5).reshape(5, 120, 2, 80)      # (ki, win*cin, wp, w*c2)
    t2 = jnp.pad(t2, ((0, 0), (0, 0), (0, 0), (0, 48))).reshape(5, 120, 256)

    # fc1 rows: PyTorch flatten (c, h, w) -> per-h (w, c) blocks of 80.
    fw1k = fw1.reshape(20, 4, 4, 50).transpose(1, 2, 0, 3).reshape(4, 80, 50)

    # fc2: lane-dense padded output (10 -> 128).
    fw2p = jnp.pad(fw2, ((0, 0), (0, 118)))
    fb2p = jnp.pad(fb2.reshape(1, 10), ((0, 0), (0, 118)))

    return {
        "t1": t1.astype(bf16), "b1t": jnp.tile(b1, 12).reshape(1, 120),
        "t2": t2.astype(bf16), "b2t": jnp.tile(b2, 4).reshape(1, 80),
        "fw1k": fw1k.astype(bf16), "fb1": fb1.reshape(1, 50),
        "fw2p": fw2p.astype(bf16), "fb2p": fb2p,
    }


# ----------------------------------------------------------------------------
# Wrapper: single fused pallas_call, batch-tiled grid (>= 2 steps)
# ----------------------------------------------------------------------------
def _round_up(a, m):
    return ((a + m - 1) // m) * m


def mnist_forward(x_nchw, kp, *, max_batch_tile=128):
    """x_nchw: (B, 1, 28, 28) f32; kp: output of prepare_params()."""
    B = x_nchw.shape[0]
    x = x_nchw.reshape(B, 28, 28)                  # cin == 1: drop channel dim

    # Batch tile: multiple of 8, capped, and chosen so the grid always has at
    # least 2 steps (so the "parallel" axis shards across both v7x TCs).
    tb = min(max_batch_tile, _round_up(pl.cdiv(B, 2), 8))
    bp = max(_round_up(B, tb), 2 * tb)
    if bp != B:
        x = jnp.pad(x, ((0, bp - B), (0, 0), (0, 0)))

    def _const_spec(shape):
        n = len(shape)
        return pl.BlockSpec(shape, lambda *_: (0,) * n)

    out = pl.pallas_call(
        _mnist_fused_kernel,
        out_shape=jax.ShapeDtypeStruct((bp, 128), jnp.float32),
        grid=(bp // tb,),
        in_specs=[
            pl.BlockSpec((tb, 28, 28), lambda i: (i, 0, 0)),
            _const_spec((5, 28, 256)),    # t1 (bf16, per-tap, parity at lane 128)
            _const_spec((1, 120)),        # b1 (tiled per output column)
            _const_spec((5, 120, 256)),   # t2 (bf16, per-tap, parity at lane 128)
            _const_spec((1, 80)),         # b2 (tiled)
            _const_spec((4, 80, 50)),     # fc1 weight (bf16, per-h blocks)
            _const_spec((1, 50)),         # fc1 bias
            _const_spec((50, 128)),       # fc2 weight (bf16, lane padded)
            _const_spec((1, 128)),        # fc2 bias (lane padded)
        ],
        out_specs=pl.BlockSpec((tb, 128), lambda i: (i, 0)),
        compiler_params=pltpu.CompilerParams(
            dimension_semantics=("parallel",),
            vmem_limit_bytes=48 * 1024 * 1024),
    )(x, kp["t1"], kp["b1t"], kp["t2"], kp["b2t"],
      kp["fw1k"], kp["fb1"], kp["fw2p"], kp["fb2p"])
    return out[:B, :10]


# ----------------------------------------------------------------------------
# Pure-JAX f32 reference (uses the original, un-repacked parameters)
# ----------------------------------------------------------------------------
def reference_forward(x_nchw, p):
    x = jnp.transpose(x_nchw, (0, 2, 3, 1))

    def conv(y, w, b):
        y = lax.conv_general_dilated(
            y, w, (1, 1), "VALID",
            dimension_numbers=("NHWC", "HWIO", "NHWC"))
        return y + b

    def pool_relu(y):
        y = lax.reduce_window(y, -jnp.inf, lax.max,
                              (1, 2, 2, 1), (1, 2, 2, 1), "VALID")
        return jnp.maximum(y, 0.0)

    y = pool_relu(conv(x, p["w1"], p["b1"]))
    y = pool_relu(conv(y, p["w2"], p["b2"]))
    y = jnp.transpose(y, (0, 3, 1, 2)).reshape(y.shape[0], 320)  # (c, h, w) flatten
    h = jnp.maximum(y @ p["fw1"] + p["fb1"], 0.0)
    return h @ p["fw2"] + p["fb2"]


if __name__ == "__main__":
    key = jax.random.PRNGKey(0)
    ks = jax.random.split(key, 9)

    # Deterministic synthetic parameters (shapes from MnistModel.__init__):
    #   conv1: (10, 1, 5, 5)  -> HWIO (5, 5, 1, 10)
    #   conv2: (20, 10, 5, 5) -> HWIO (5, 5, 10, 20)
    #   fc1:   (50, 320)      -> (320, 50) used as x @ W
    #   fc2:   (10, 50)       -> (50, 10)
    params = {
        "w1": jax.random.normal(ks[0], (5, 5, 1, 10), jnp.float32) * 0.1,
        "b1": jax.random.normal(ks[1], (10,), jnp.float32) * 0.1,
        "w2": jax.random.normal(ks[2], (5, 5, 10, 20), jnp.float32) * 0.05,
        "b2": jax.random.normal(ks[3], (20,), jnp.float32) * 0.1,
        "fw1": jax.random.normal(ks[4], (320, 50), jnp.float32) * 0.05,
        "fb1": jax.random.normal(ks[5], (50,), jnp.float32) * 0.1,
        "fw2": jax.random.normal(ks[6], (50, 10), jnp.float32) * 0.1,
        "fb2": jax.random.normal(ks[7], (10,), jnp.float32) * 0.1,
    }

    # MNIST-shaped input (28x28 is required for the 320-feature flatten).
    x = jax.random.normal(ks[8], (2, 1, 28, 28), jnp.float32)

    kp = prepare_params(params)
    out = jax.block_until_ready(mnist_forward(x, kp))
    assert out.shape == (2, 10), out.shape

    ref = jax.block_until_ready(reference_forward(x, params))
    # bf16 MXU operands vs f32 reference -> relaxed tolerance (acc stays f32).
    assert jnp.allclose(out, ref, atol=5e-2, rtol=5e-2), (
        "mismatch vs reference:\n%s\n%s" % (out, ref))

    print("KERNEL_OK")
</pallas_src>

<mosaic_0001>
module attributes {stable_mosaic.version = 11 : i64} {
  func.func @_mnist_fused_kernel(%arg0: i32, %arg1: memref<8x28x28xf32, #tpu.memory_space<vmem>>, %arg2: memref<5x28x256xbf16, #tpu.memory_space<vmem>>, %arg3: memref<1x120xf32, #tpu.memory_space<vmem>>, %arg4: memref<5x120x256xbf16, #tpu.memory_space<vmem>>, %arg5: memref<1x80xf32, #tpu.memory_space<vmem>>, %arg6: memref<4x80x50xbf16, #tpu.memory_space<vmem>>, %arg7: memref<1x50xf32, #tpu.memory_space<vmem>>, %arg8: memref<50x128xbf16, #tpu.memory_space<vmem>>, %arg9: memref<1x128xf32, #tpu.memory_space<vmem>>, %arg10: memref<8x128xf32, #tpu.memory_space<vmem>>) attributes {dimension_semantics = [#tpu.dimension_semantics<parallel>], iteration_bounds = array<i64: 2>, scalar_prefetch = 0 : i64, scratch_operands = 0 : i64, tpu.core_type = #tpu.core_type<tc>, window_params = [{transform_indices = @transform_0, window_bounds = array<i64: 8, 28, 28>}, {pipeline_mode = #tpu.pipeline_mode<synchronous>, transform_indices = @transform_1, window_bounds = array<i64: 5, 28, 256>}, {pipeline_mode = #tpu.pipeline_mode<synchronous>, transform_indices = @transform_2, window_bounds = array<i64: 1, 120>}, {pipeline_mode = #tpu.pipeline_mode<synchronous>, transform_indices = @transform_3, window_bounds = array<i64: 5, 120, 256>}, {pipeline_mode = #tpu.pipeline_mode<synchronous>, transform_indices = @transform_4, window_bounds = array<i64: 1, 80>}, {pipeline_mode = #tpu.pipeline_mode<synchronous>, transform_indices = @transform_5, window_bounds = array<i64: 4, 80, 50>}, {pipeline_mode = #tpu.pipeline_mode<synchronous>, transform_indices = @transform_6, window_bounds = array<i64: 1, 50>}, {pipeline_mode = #tpu.pipeline_mode<synchronous>, transform_indices = @transform_7, window_bounds = array<i64: 50, 128>}, {pipeline_mode = #tpu.pipeline_mode<synchronous>, transform_indices = @transform_8, window_bounds = array<i64: 1, 128>}, {transform_indices = @transform_9, window_bounds = array<i64: 8, 128>}]} {
    %c0 = arith.constant 0 : index
    %c0_0 = arith.constant 0 : index
    %c0_1 = arith.constant 0 : index
    %0 = vector.load %arg1[%c0, %c0_0, %c0_1] : memref<8x28x28xf32, #tpu.memory_space<vmem>>, vector<8x28x28xf32>
    %1 = vector.extract_strided_slice %0 {offsets = [0, 0, 0], sizes = [8, 24, 28], strides = [1, 1, 1]} : vector<8x28x28xf32> to vector<8x24x28xf32>
    %2 = vector.shape_cast %1 : vector<8x24x28xf32> to vector<192x28xf32>
    %3 = arith.truncf %2 : vector<192x28xf32> to vector<192x28xbf16>
    %c0_2 = arith.constant 0 : index
    %c0_3 = arith.constant 0 : index
    %c0_4 = arith.constant 0 : index
    %4 = vector.load %arg2[%c0_2, %c0_3, %c0_4] : memref<5x28x256xbf16, #tpu.memory_space<vmem>>, vector<1x28x256xbf16>
    %5 = vector.shape_cast %4 : vector<1x28x256xbf16> to vector<28x256xbf16>
    %cst = arith.constant dense<0.000000e+00> : vector<192x256xf32>
    %6 = tpu.matmul %3, %5, %cst {dimension_numbers = #tpu.dot_dimension_numbers<[1], [0], [0], [1], [0, 0, 1, 1], [], []>} : vector<192x28xbf16>, vector<28x256xbf16>, vector<192x256xf32> -> vector<192x256xf32>
    %7 = vector.extract_strided_slice %0 {offsets = [0, 1, 0], sizes = [8, 24, 28], strides = [1, 1, 1]} : vector<8x28x28xf32> to vector<8x24x28xf32>
    %8 = vector.shape_cast %7 : vector<8x24x28xf32> to vector<192x28xf32>
    %9 = arith.truncf %8 : vector<192x28xf32> to vector<192x28xbf16>
    %c1 = arith.constant 1 : index
    %c0_5 = arith.constant 0 : index
    %c0_6 = arith.constant 0 : index
    %10 = vector.load %arg2[%c1, %c0_5, %c0_6] : memref<5x28x256xbf16, #tpu.memory_space<vmem>>, vector<1x28x256xbf16>
    %11 = vector.shape_cast %10 : vector<1x28x256xbf16> to vector<28x256xbf16>
    %cst_7 = arith.constant dense<0.000000e+00> : vector<192x256xf32>
    %12 = tpu.matmul %9, %11, %cst_7 {dimension_numbers = #tpu.dot_dimension_numbers<[1], [0], [0], [1], [0, 0, 1, 1], [], []>} : vector<192x28xbf16>, vector<28x256xbf16>, vector<192x256xf32> -> vector<192x256xf32>
    %13 = arith.addf %6, %12 : vector<192x256xf32>
    %14 = vector.extract_strided_slice %0 {offsets = [0, 2, 0], sizes = [8, 24, 28], strides = [1, 1, 1]} : vector<8x28x28xf32> to vector<8x24x28xf32>
    %15 = vector.shape_cast %14 : vector<8x24x28xf32> to vector<192x28xf32>
    %16 = arith.truncf %15 : vector<192x28xf32> to vector<192x28xbf16>
    %c2 = arith.constant 2 : index
    %c0_8 = arith.constant 0 : index
    %c0_9 = arith.constant 0 : index
    %17 = vector.load %arg2[%c2, %c0_8, %c0_9] : memref<5x28x256xbf16, #tpu.memory_space<vmem>>, vector<1x28x256xbf16>
    %18 = vector.shape_cast %17 : vector<1x28x256xbf16> to vector<28x256xbf16>
    %cst_10 = arith.constant dense<0.000000e+00> : vector<192x256xf32>
    %19 = tpu.matmul %16, %18, %cst_10 {dimension_numbers = #tpu.dot_dimension_numbers<[1], [0], [0], [1], [0, 0, 1, 1], [], []>} : vector<192x28xbf16>, vector<28x256xbf16>, vector<192x256xf32> -> vector<192x256xf32>
    %20 = arith.addf %13, %19 : vector<192x256xf32>
    %21 = vector.extract_strided_slice %0 {offsets = [0, 3, 0], sizes = [8, 24, 28], strides = [1, 1, 1]} : vector<8x28x28xf32> to vector<8x24x28xf32>
    %22 = vector.shape_cast %21 : vector<8x24x28xf32> to vector<192x28xf32>
    %23 = arith.truncf %22 : vector<192x28xf32> to vector<192x28xbf16>
    %c3 = arith.constant 3 : index
    %c0_11 = arith.constant 0 : index
    %c0_12 = arith.constant 0 : index
    %24 = vector.load %arg2[%c3, %c0_11, %c0_12] : memref<5x28x256xbf16, #tpu.memory_space<vmem>>, vector<1x28x256xbf16>
    %25 = vector.shape_cast %24 : vector<1x28x256xbf16> to vector<28x256xbf16>
    %cst_13 = arith.constant dense<0.000000e+00> : vector<192x256xf32>
    %26 = tpu.matmul %23, %25, %cst_13 {dimension_numbers = #tpu.dot_dimension_numbers<[1], [0], [0], [1], [0, 0, 1, 1], [], []>} : vector<192x28xbf16>, vector<28x256xbf16>, vector<192x256xf32> -> vector<192x256xf32>
    %27 = arith.addf %20, %26 : vector<192x256xf32>
    %28 = vector.extract_strided_slice %0 {offsets = [0, 4, 0], sizes = [8, 24, 28], strides = [1, 1, 1]} : vector<8x28x28xf32> to vector<8x24x28xf32>
    %29 = vector.shape_cast %28 : vector<8x24x28xf32> to vector<192x28xf32>
    %30 = arith.truncf %29 : vector<192x28xf32> to vector<192x28xbf16>
    %c4 = arith.constant 4 : index
    %c0_14 = arith.constant 0 : index
    %c0_15 = arith.constant 0 : index
    %31 = vector.load %arg2[%c4, %c0_14, %c0_15] : memref<5x28x256xbf16, #tpu.memory_space<vmem>>, vector<1x28x256xbf16>
    %32 = vector.shape_cast %31 : vector<1x28x256xbf16> to vector<28x256xbf16>
    %cst_16 = arith.constant dense<0.000000e+00> : vector<192x256xf32>
    %33 = tpu.matmul %30, %32, %cst_16 {dimension_numbers = #tpu.dot_dimension_numbers<[1], [0], [0], [1], [0, 0, 1, 1], [], []>} : vector<192x28xbf16>, vector<28x256xbf16>, vector<192x256xf32> -> vector<192x256xf32>
    %34 = arith.addf %27, %33 : vector<192x256xf32>
    %35 = vector.extract_strided_slice %34 {offsets = [0, 0], sizes = [192, 120], strides = [1, 1]} : vector<192x256xf32> to vector<192x120xf32>
    %36 = vector.extract_strided_slice %34 {offsets = [0, 128], sizes = [192, 120], strides = [1, 1]} : vector<192x256xf32> to vector<192x120xf32>
    %37 = arith.maximumf %35, %36 : vector<192x120xf32>
    %38 = vector.shape_cast %37 : vector<192x120xf32> to vector<8x12x2x120xf32>
    %cst_17 = arith.constant dense<0xFF800000> : vector<8x12x120xf32>
    %39 = vector.multi_reduction <maximumf>, %38, %cst_17 [2] : vector<8x12x2x120xf32> to vector<8x12x120xf32>
    %c0_18 = arith.constant 0 : index
    %c0_19 = arith.constant 0 : index
    %40 = vector.load %arg3[%c0_18, %c0_19] : memref<1x120xf32, #tpu.memory_space<vmem>>, vector<1x120xf32>
    %41 = vector.shape_cast %40 : vector<1x120xf32> to vector<1x1x120xf32>
    %42 = vector.broadcast %41 : vector<1x1x120xf32> to vector<8x12x120xf32>
    %43 = arith.addf %39, %42 : vector<8x12x120xf32>
    %cst_20 = arith.constant 0.000000e+00 : f32
    %44 = vector.broadcast %cst_20 : f32 to vector<8x12x120xf32>
    %45 = arith.maximumf %43, %44 : vector<8x12x120xf32>
    %46 = vector.extract_strided_slice %45 {offsets = [0, 0, 0], sizes = [8, 8, 120], strides = [1, 1, 1]} : vector<8x12x120xf32> to vector<8x8x120xf32>
    %47 = vector.shape_cast %46 : vector<8x8x120xf32> to vector<64x120xf32>
    %48 = arith.truncf %47 : vector<64x120xf32> to vector<64x120xbf16>
    %c0_21 = arith.constant 0 : index
    %c0_22 = arith.constant 0 : index
    %c0_23 = arith.constant 0 : index
    %49 = vector.load %arg4[%c0_21, %c0_22, %c0_23] : memref<5x120x256xbf16, #tpu.memory_space<vmem>>, vector<1x120x256xbf16>
    %50 = vector.shape_cast %49 : vector<1x120x256xbf16> to vector<120x256xbf16>
    %cst_24 = arith.constant dense<0.000000e+00> : vector<64x256xf32>
    %51 = tpu.matmul %48, %50, %cst_24 {dimension_numbers = #tpu.dot_dimension_numbers<[1], [0], [0], [1], [0, 0, 1, 1], [], []>} : vector<64x120xbf16>, vector<120x256xbf16>, vector<64x256xf32> -> vector<64x256xf32>
    %52 = vector.extract_strided_slice %45 {offsets = [0, 1, 0], sizes = [8, 8, 120], strides = [1, 1, 1]} : vector<8x12x120xf32> to vector<8x8x120xf32>
    %53 = vector.shape_cast %52 : vector<8x8x120xf32> to vector<64x120xf32>
    %54 = arith.truncf %53 : vector<64x120xf32> to vector<64x120xbf16>
    %c1_25 = arith.constant 1 : index
    %c0_26 = arith.constant 0 : index
    %c0_27 = arith.constant 0 : index
    %55 = vector.load %arg4[%c1_25, %c0_26, %c0_27] : memref<5x120x256xbf16, #tpu.memory_space<vmem>>, vector<1x120x256xbf16>
    %56 = vector.shape_cast %55 : vector<1x120x256xbf16> to vector<120x256xbf16>
    %cst_28 = arith.constant dense<0.000000e+00> : vector<64x256xf32>
    %57 = tpu.matmul %54, %56, %cst_28 {dimension_numbers = #tpu.dot_dimension_numbers<[1], [0], [0], [1], [0, 0, 1, 1], [], []>} : vector<64x120xbf16>, vector<120x256xbf16>, vector<64x256xf32> -> vector<64x256xf32>
    %58 = arith.addf %51, %57 : vector<64x256xf32>
    %59 = vector.extract_strided_slice %45 {offsets = [0, 2, 0], sizes = [8, 8, 120], strides = [1, 1, 1]} : vector<8x12x120xf32> to vector<8x8x120xf32>
    %60 = vector.shape_cast %59 : vector<8x8x120xf32> to vector<64x120xf32>
    %61 = arith.truncf %60 : vector<64x120xf32> to vector<64x120xbf16>
    %c2_29 = arith.constant 2 : index
    %c0_30 = arith.constant 0 : index
    %c0_31 = arith.constant 0 : index
    %62 = vector.load %arg4[%c2_29, %c0_30, %c0_31] : memref<5x120x256xbf16, #tpu.memory_space<vmem>>, vector<1x120x256xbf16>
    %63 = vector.shape_cast %62 : vector<1x120x256xbf16> to vector<120x256xbf16>
    %cst_32 = arith.constant dense<0.000000e+00> : vector<64x256xf32>
    %64 = tpu.matmul %61, %63, %cst_32 {dimension_numbers = #tpu.dot_dimension_numbers<[1], [0], [0], [1], [0, 0, 1, 1], [], []>} : vector<64x120xbf16>, vector<120x256xbf16>, vector<64x256xf32> -> vector<64x256xf32>
    %65 = arith.addf %58, %64 : vector<64x256xf32>
    %66 = vector.extract_strided_slice %45 {offsets = [0, 3, 0], sizes = [8, 8, 120], strides = [1, 1, 1]} : vector<8x12x120xf32> to vector<8x8x120xf32>
    %67 = vector.shape_cast %66 : vector<8x8x120xf32> to vector<64x120xf32>
    %68 = arith.truncf %67 : vector<64x120xf32> to vector<64x120xbf16>
    %c3_33 = arith.constant 3 : index
    %c0_34 = arith.constant 0 : index
    %c0_35 = arith.constant 0 : index
    %69 = vector.load %arg4[%c3_33, %c0_34, %c0_35] : memref<5x120x256xbf16, #tpu.memory_space<vmem>>, vector<1x120x256xbf16>
    %70 = vector.shape_cast %69 : vector<1x120x256xbf16> to vector<120x256xbf16>
    %cst_36 = arith.constant dense<0.000000e+00> : vector<64x256xf32>
    %71 = tpu.matmul %68, %70, %cst_36 {dimension_numbers = #tpu.dot_dimension_numbers<[1], [0], [0], [1], [0, 0, 1, 1], [], []>} : vector<64x120xbf16>, vector<120x256xbf16>, vector<64x256xf32> -> vector<64x256xf32>
    %72 = arith.addf %65, %71 : vector<64x256xf32>
    %73 = vector.extract_strided_slice %45 {offsets = [0, 4, 0], sizes = [8, 8, 120], strides = [1, 1, 1]} : vector<8x12x120xf32> to vector<8x8x120xf32>
    %74 = vector.shape_cast %73 : vector<8x8x120xf32> to vector<64x120xf32>
    %75 = arith.truncf %74 : vector<64x120xf32> to vector<64x120xbf16>
    %c4_37 = arith.constant 4 : index
    %c0_38 = arith.constant 0 : index
    %c0_39 = arith.constant 0 : index
    %76 = vector.load %arg4[%c4_37, %c0_38, %c0_39] : memref<5x120x256xbf16, #tpu.memory_space<vmem>>, vector<1x120x256xbf16>
    %77 = vector.shape_cast %76 : vector<1x120x256xbf16> to vector<120x256xbf16>
    %cst_40 = arith.constant dense<0.000000e+00> : vector<64x256xf32>
    %78 = tpu.matmul %75, %77, %cst_40 {dimension_numbers = #tpu.dot_dimension_numbers<[1], [0], [0], [1], [0, 0, 1, 1], [], []>} : vector<64x120xbf16>, vector<120x256xbf16>, vector<64x256xf32> -> vector<64x256xf32>
    %79 = arith.addf %72, %78 : vector<64x256xf32>
    %80 = vector.extract_strided_slice %79 {offsets = [0, 0], sizes = [64, 80], strides = [1, 1]} : vector<64x256xf32> to vector<64x80xf32>
    %81 = vector.extract_strided_slice %79 {offsets = [0, 128], sizes = [64, 80], strides = [1, 1]} : vector<64x256xf32> to vector<64x80xf32>
    %82 = arith.maximumf %80, %81 : vector<64x80xf32>
    %83 = vector.shape_cast %82 : vector<64x80xf32> to vector<8x4x2x80xf32>
    %cst_41 = arith.constant dense<0xFF800000> : vector<8x4x80xf32>
    %84 = vector.multi_reduction <maximumf>, %83, %cst_41 [2] : vector<8x4x2x80xf32> to vector<8x4x80xf32>
    %c0_42 = arith.constant 0 : index
    %c0_43 = arith.constant 0 : index
    %85 = vector.load %arg5[%c0_42, %c0_43] : memref<1x80xf32, #tpu.memory_space<vmem>>, vector<1x80xf32>
    %86 = vector.shape_cast %85 : vector<1x80xf32> to vector<1x1x80xf32>
    %87 = vector.broadcast %86 : vector<1x1x80xf32> to vector<8x4x80xf32>
    %88 = arith.addf %84, %87 : vector<8x4x80xf32>
    %cst_44 = arith.constant 0.000000e+00 : f32
    %89 = vector.broadcast %cst_44 : f32 to vector<8x4x80xf32>
    %90 = arith.maximumf %88, %89 : vector<8x4x80xf32>
    %91 = vector.extract_strided_slice %90 {offsets = [0, 0, 0], sizes = [8, 1, 80], strides = [1, 1, 1]} : vector<8x4x80xf32> to vector<8x1x80xf32>
    %92 = vector.shape_cast %91 : vector<8x1x80xf32> to vector<8x80xf32>
    %93 = arith.truncf %92 : vector<8x80xf32> to vector<8x80xbf16>
    %c0_45 = arith.constant 0 : index
    %c0_46 = arith.constant 0 : index
    %c0_47 = arith.constant 0 : index
    %94 = vector.load %arg6[%c0_45, %c0_46, %c0_47] : memref<4x80x50xbf16, #tpu.memory_space<vmem>>, vector<1x80x50xbf16>
    %95 = vector.shape_cast %94 : vector<1x80x50xbf16> to vector<80x50xbf16>
    %cst_48 = arith.constant dense<0.000000e+00> : vector<8x50xf32>
    %96 = tpu.matmul %93, %95, %cst_48 {dimension_numbers = #tpu.dot_dimension_numbers<[1], [0], [0], [1], [0, 0, 1, 1], [], []>} : vector<8x80xbf16>, vector<80x50xbf16>, vector<8x50xf32> -> vector<8x50xf32>
    %97 = vector.extract_strided_slice %90 {offsets = [0, 1, 0], sizes = [8, 1, 80], strides = [1, 1, 1]} : vector<8x4x80xf32> to vector<8x1x80xf32>
    %98 = vector.shape_cast %97 : vector<8x1x80xf32> to vector<8x80xf32>
    %99 = arith.truncf %98 : vector<8x80xf32> to vector<8x80xbf16>
    %c1_49 = arith.constant 1 : index
    %c0_50 = arith.constant 0 : index
    %c0_51 = arith.constant 0 : index
    %100 = vector.load %arg6[%c1_49, %c0_50, %c0_51] : memref<4x80x50xbf16, #tpu.memory_space<vmem>>, vector<1x80x50xbf16>
    %101 = vector.shape_cast %100 : vector<1x80x50xbf16> to vector<80x50xbf16>
    %cst_52 = arith.constant dense<0.000000e+00> : vector<8x50xf32>
    %102 = tpu.matmul %99, %101, %cst_52 {dimension_numbers = #tpu.dot_dimension_numbers<[1], [0], [0], [1], [0, 0, 1, 1], [], []>} : vector<8x80xbf16>, vector<80x50xbf16>, vector<8x50xf32> -> vector<8x50xf32>
    %103 = arith.addf %96, %102 : vector<8x50xf32>
    %104 = vector.extract_strided_slice %90 {offsets = [0, 2, 0], sizes = [8, 1, 80], strides = [1, 1, 1]} : vector<8x4x80xf32> to vector<8x1x80xf32>
    %105 = vector.shape_cast %104 : vector<8x1x80xf32> to vector<8x80xf32>
    %106 = arith.truncf %105 : vector<8x80xf32> to vector<8x80xbf16>
    %c2_53 = arith.constant 2 : index
    %c0_54 = arith.constant 0 : index
    %c0_55 = arith.constant 0 : index
    %107 = vector.load %arg6[%c2_53, %c0_54, %c0_55] : memref<4x80x50xbf16, #tpu.memory_space<vmem>>, vector<1x80x50xbf16>
    %108 = vector.shape_cast %107 : vector<1x80x50xbf16> to vector<80x50xbf16>
    %cst_56 = arith.constant dense<0.000000e+00> : vector<8x50xf32>
    %109 = tpu.matmul %106, %108, %cst_56 {dimension_numbers = #tpu.dot_dimension_numbers<[1], [0], [0], [1], [0, 0, 1, 1], [], []>} : vector<8x80xbf16>, vector<80x50xbf16>, vector<8x50xf32> -> vector<8x50xf32>
    %110 = arith.addf %103, %109 : vector<8x50xf32>
    %111 = vector.extract_strided_slice %90 {offsets = [0, 3, 0], sizes = [8, 1, 80], strides = [1, 1, 1]} : vector<8x4x80xf32> to vector<8x1x80xf32>
    %112 = vector.shape_cast %111 : vector<8x1x80xf32> to vector<8x80xf32>
    %113 = arith.truncf %112 : vector<8x80xf32> to vector<8x80xbf16>
    %c3_57 = arith.constant 3 : index
    %c0_58 = arith.constant 0 : index
    %c0_59 = arith.constant 0 : index
    %114 = vector.load %arg6[%c3_57, %c0_58, %c0_59] : memref<4x80x50xbf16, #tpu.memory_space<vmem>>, vector<1x80x50xbf16>
    %115 = vector.shape_cast %114 : vector<1x80x50xbf16> to vector<80x50xbf16>
    %cst_60 = arith.constant dense<0.000000e+00> : vector<8x50xf32>
    %116 = tpu.matmul %113, %115, %cst_60 {dimension_numbers = #tpu.dot_dimension_numbers<[1], [0], [0], [1], [0, 0, 1, 1], [], []>} : vector<8x80xbf16>, vector<80x50xbf16>, vector<8x50xf32> -> vector<8x50xf32>
    %117 = arith.addf %110, %116 : vector<8x50xf32>
    %c0_61 = arith.constant 0 : index
    %c0_62 = arith.constant 0 : index
    %118 = vector.load %arg7[%c0_61, %c0_62] : memref<1x50xf32, #tpu.memory_space<vmem>>, vector<1x50xf32>
    %119 = vector.broadcast %118 : vector<1x50xf32> to vector<8x50xf32>
    %120 = arith.addf %117, %119 : vector<8x50xf32>
    %cst_63 = arith.constant 0.000000e+00 : f32
    %121 = vector.broadcast %cst_63 : f32 to vector<8x50xf32>
    %122 = arith.maximumf %120, %121 : vector<8x50xf32>
    %123 = arith.truncf %122 : vector<8x50xf32> to vector<8x50xbf16>
    %c0_64 = arith.constant 0 : index
    %c0_65 = arith.constant 0 : index
    %124 = vector.load %arg8[%c0_64, %c0_65] : memref<50x128xbf16, #tpu.memory_space<vmem>>, vector<50x128xbf16>
    %cst_66 = arith.constant dense<0.000000e+00> : vector<8x128xf32>
    %125 = tpu.matmul %123, %124, %cst_66 {dimension_numbers = #tpu.dot_dimension_numbers<[1], [0], [0], [1], [0, 0, 1, 1], [], []>} : vector<8x50xbf16>, vector<50x128xbf16>, vector<8x128xf32> -> vector<8x128xf32>
    %c0_67 = arith.constant 0 : index
    %c0_68 = arith.constant 0 : index
    %126 = vector.load %arg9[%c0_67, %c0_68] : memref<1x128xf32, #tpu.memory_space<vmem>>, vector<1x128xf32>
    %127 = vector.broadcast %126 : vector<1x128xf32> to vector<8x128xf32>
    %128 = arith.addf %125, %127 : vector<8x128xf32>
    %c0_69 = arith.constant 0 : index
    %c0_70 = arith.constant 0 : index
    %129 = vector.load %arg10[%c0_69, %c0_70] : memref<8x128xf32, #tpu.memory_space<vmem>>, vector<8x128xf32>
    tpu.vector_store %arg10[%c0_69, %c0_70], %128 {strides = array<i32>} : memref<8x128xf32, #tpu.memory_space<vmem>>, vector<8x128xf32>,
    return
  }
  func.func @transform_0(%arg0: i32) -> (i32, i32, i32) {
    %c0_i32 = arith.constant 0 : i32
    %c0_i32_0 = arith.constant 0 : i32
    %c0_i32_1 = arith.constant 0 : i32
    return %arg0, %c0_i32, %c0_i32_0 : i32, i32, i32
  }
  func.func @transform_1(%arg0: i32) -> (i32, i32, i32) {
    %c0_i32 = arith.constant 0 : i32
    %c0_i32_0 = arith.constant 0 : i32
    %c0_i32_1 = arith.constant 0 : i32
    %c0_i32_2 = arith.constant 0 : i32
    return %c0_i32, %c0_i32_0, %c0_i32_1 : i32, i32, i32
  }
  func.func @transform_2(%arg0: i32) -> (i32, i32) {
    %c0_i32 = arith.constant 0 : i32
    %c0_i32_0 = arith.constant 0 : i32
    %c0_i32_1 = arith.constant 0 : i32
    return %c0_i32, %c0_i32_0 : i32, i32
  }
  func.func @transform_3(%arg0: i32) -> (i32, i32, i32) {
    %c0_i32 = arith.constant 0 : i32
    %c0_i32_0 = arith.constant 0 : i32
    %c0_i32_1 = arith.constant 0 : i32
    %c0_i32_2 = arith.constant 0 : i32
    return %c0_i32, %c0_i32_0, %c0_i32_1 : i32, i32, i32
  }
  func.func @transform_4(%arg0: i32) -> (i32, i32) {
    %c0_i32 = arith.constant 0 : i32
    %c0_i32_0 = arith.constant 0 : i32
    %c0_i32_1 = arith.constant 0 : i32
    return %c0_i32, %c0_i32_0 : i32, i32
  }
  func.func @transform_5(%arg0: i32) -> (i32, i32, i32) {
    %c0_i32 = arith.constant 0 : i32
    %c0_i32_0 = arith.constant 0 : i32
    %c0_i32_1 = arith.constant 0 : i32
    %c0_i32_2 = arith.constant 0 : i32
    return %c0_i32, %c0_i32_0, %c0_i32_1 : i32, i32, i32
  }
  func.func @transform_6(%arg0: i32) -> (i32, i32) {
    %c0_i32 = arith.constant 0 : i32
    %c0_i32_0 = arith.constant 0 : i32
    %c0_i32_1 = arith.constant 0 : i32
    return %c0_i32, %c0_i32_0 : i32, i32
  }
  func.func @transform_7(%arg0: i32) -> (i32, i32) {
    %c0_i32 = arith.constant 0 : i32
    %c0_i32_0 = arith.constant 0 : i32
    %c0_i32_1 = arith.constant 0 : i32
    return %c0_i32, %c0_i32_0 : i32, i32
  }
  func.func @transform_8(%arg0: i32) -> (i32, i32) {
    %c0_i32 = arith.constant 0 : i32
    %c0_i32_0 = arith.constant 0 : i32
    %c0_i32_1 = arith.constant 0 : i32
    return %c0_i32, %c0_i32_0 : i32, i32
  }
  func.func @transform_9(%arg0: i32) -> (i32, i32) {
    %c0_i32 = arith.constant 0 : i32
    %c0_i32_0 = arith.constant 0 : i32
    return %arg0, %c0_i32 : i32, i32
  }
}

</mosaic_0001>

<llo_original>
// kernel: tpu_custom_call.1
$region0: #{tpu_custom_call.1}
  #allocation0 [shape = 'u32[]', space=smem, size = 0x4, offset = 0x4, fixed_abs, tag = 'smem constant byte address 0x4 - core index']
  #allocation1 [shape = 'u32[144,128]{1,0:T(1,128)}', space=vmem, size = 0x12000, scoped, tag = 'internal scratch']
  %s0 = inlined_call_operand.vmem [shape: f32[16,28,28], index: 0, kind: input, shape index: {}]
  %s1 = inlined_call_operand.vmem [shape: bf16[5,28,256], index: 1, kind: input, shape index: {}]
  %s2 = inlined_call_operand.vmem [shape: f32[1,120], index: 2, kind: input, shape index: {}]
  %s3 = inlined_call_operand.vmem [shape: bf16[5,120,256], index: 3, kind: input, shape index: {}]
  %s4 = inlined_call_operand.vmem [shape: f32[1,80], index: 4, kind: input, shape index: {}]
  %s5 = inlined_call_operand.vmem [shape: bf16[4,80,50], index: 5, kind: input, shape index: {}]
  %s6 = inlined_call_operand.vmem [shape: f32[1,50], index: 6, kind: input, shape index: {}]
  %s7 = inlined_call_operand.vmem [shape: bf16[50,128], index: 7, kind: input, shape index: {}]
  %s8 = inlined_call_operand.vmem [shape: f32[1,128], index: 8, kind: input, shape index: {}]
  %s9 = inlined_call_operand.hbm [shape: f32[16,128], index: 9, kind: output, shape index: {}]
  %s10 = sld [smem:[#allocation0]]
  $region69: #{tpu_custom_call.1} parent=0
    _
  %s12 = ssub.s32 1, %s10
  %s13 = scalar_select 0, %s12, %s10
  $region1: #{tpu_custom_call.1} parent=0
    #allocation2 [shape = 'u8[8192]{0}', space=vmem, size = 0x2000, scoped, tag = 'output window, operand 0']
    #allocation3 [shape = 's32[2]{0}', space=sflag, size = 0x8, scoped, tag = 'scoped memory for tpu_custom_call.1']
    %14 = vsyncpa [#allocation3], 0
    %s15 = scalar_lea.sflag [#allocation3], 1
    %16 = vsyncpa %s15, 0
    loop: start=0, step=1, limit=4
    $region2: #{tpu_custom_call.1} parent=1 // loop_pre_header
      _
    $region3: #{tpu_custom_call.1} parent=1 // loop_header
      %s18 = sphi 0, %s22
      %p19 = scmp.ge.s32.totalorder %s18, 4
      %s28 = sphi 0, %s30
      %s31 = sphi 0, %s28
      %s32 = sphi 0, %s31
      %s48 = sphi 0, %s32
      %s52 = sphi 0, %s52
      %s54 = sphi 0, %s52
      %s55 = sphi 0, %s54
      %s69 = sphi 0, %s55
      %s73 = sphi 0, %s73
      %s75 = sphi 0, %s73
      %s76 = sphi 0, %s75
      %s90 = sphi 0, %s76
      %s94 = sphi 0, %s94
      %s96 = sphi 0, %s94
      %s97 = sphi 0, %s96
      %s111 = sphi 0, %s97
      %s115 = sphi 0, %s115
      %s117 = sphi 0, %s115
      %s118 = sphi 0, %s117
      %s132 = sphi 0, %s118
      %s136 = sphi 0, %s136
      %s138 = sphi 0, %s136
      %s139 = sphi 0, %s138
      %s153 = sphi 0, %s139
      %s157 = sphi 0, %s157
      %s159 = sphi 0, %s157
      %s160 = sphi 0, %s159
      %s174 = sphi 0, %s160
      %s178 = sphi 0, %s178
      %s180 = sphi 0, %s178
      %s181 = sphi 0, %s180
      %s195 = sphi 0, %s181
      %s199 = sphi 0, %s199
      %s201 = sphi 0, %s199
      %s202 = sphi 0, %s201
      %s216 = sphi 0, %s202
      %s222 = sphi 0, %s224
      %s225 = sphi 0, %s222
      %s226 = sphi 0, %s225
      %s242 = sphi 0, %s226
    $region4: #{tpu_custom_call.1} parent=1 // loop_header_branch
      %21 = sbr.rel (%p19) target = $region8
    $region5: #{tpu_custom_call.1} parent=1 // loop_body
      %s23 = ssub.s32 %s18, 1
      %s24 = ssub.s32 %s18, 2
      %s25 = sadd.s32 %s18, 1
      %s26 = ssub.s32 %s18, %s25
      %p27 = scmp.eq.s32.totalorder %s26, 0
      %s29 = sadd.s32 %s28, 1
      %s30 = scalar_select %p27, %s28, %s29
      %p33 = pneg %p27
      %p34 = scmp.eq.s32.totalorder %s18, 1
      %p35 = por %p33, %p34
      %p36 = scmp.ne.s32.totalorder %s28, %s31
      %p37 = scmp.eq.s32.totalorder %s18, 0
      %p38 = por %p36, %p37
      %p39 = scmp.ne.s32.totalorder %s28, %s31
      %p40 = scmp.eq.s32.totalorder %s23, 1
      %p41 = por %p39, %p40
      %p42 = scmp.ne.s32.totalorder %s31, %s32
      %p43 = scmp.eq.s32.totalorder %s23, 0
      %p44 = por %p42, %p43
      %p45 = scmp.ne.s32.totalorder %s31, %s32
      %p46 = scmp.eq.s32.totalorder %s24, 1
      %p47 = por %p45, %p46
      %p49 = scmp.ne.s32.totalorder %s32, %s48
      %p50 = scmp.eq.s32.totalorder %s24, 0
      %p51 = por %p49, %p50
      %s53 = sadd.s32 %s52, 1
      %p56 = scmp.eq.s32.totalorder %s18, 1
      %p57 = scmp.ne.s32.totalorder %s52, %s54
      %p58 = scmp.eq.s32.totalorder %s18, 0
      %p59 = por %p57, %p58
      %p60 = scmp.ne.s32.totalorder %s52, %s54
      %p61 = scmp.eq.s32.totalorder %s23, 1
      %p62 = por %p60, %p61
      %p63 = scmp.ne.s32.totalorder %s54, %s55
      %p64 = scmp.eq.s32.totalorder %s23, 0
      %p65 = por %p63, %p64
      %p66 = scmp.ne.s32.totalorder %s54, %s55
      %p67 = scmp.eq.s32.totalorder %s24, 1
      %p68 = por %p66, %p67
      %p70 = scmp.ne.s32.totalorder %s55, %s69
      %p71 = scmp.eq.s32.totalorder %s24, 0
      %p72 = por %p70, %p71
      %s74 = sadd.s32 %s73, 1
      %p77 = scmp.eq.s32.totalorder %s18, 1
      %p78 = scmp.ne.s32.totalorder %s73, %s75
      %p79 = scmp.eq.s32.totalorder %s18, 0
      %p80 = por %p78, %p79
      %p81 = scmp.ne.s32.totalorder %s73, %s75
      %p82 = scmp.eq.s32.totalorder %s23, 1
      %p83 = por %p81, %p82
      %p84 = scmp.ne.s32.totalorder %s75, %s76
      %p85 = scmp.eq.s32.totalorder %s23, 0
      %p86 = por %p84, %p85
      %p87 = scmp.ne.s32.totalorder %s75, %s76
      %p88 = scmp.eq.s32.totalorder %s24, 1
      %p89 = por %p87, %p88
      %p91 = scmp.ne.s32.totalorder %s76, %s90
      %p92 = scmp.eq.s32.totalorder %s24, 0
      %p93 = por %p91, %p92
      %s95 = sadd.s32 %s94, 1
      %p98 = scmp.eq.s32.totalorder %s18, 1
      %p99 = scmp.ne.s32.totalorder %s94, %s96
      %p100 = scmp.eq.s32.totalorder %s18, 0
      %p101 = por %p99, %p100
      %p102 = scmp.ne.s32.totalorder %s94, %s96
      %p103 = scmp.eq.s32.totalorder %s23, 1
      %p104 = por %p102, %p103
      %p105 = scmp.ne.s32.totalorder %s96, %s97
      %p106 = scmp.eq.s32.totalorder %s23, 0
      %p107 = por %p105, %p106
      %p108 = scmp.ne.s32.totalorder %s96, %s97
      %p109 = scmp.eq.s32.totalorder %s24, 1
      %p110 = por %p108, %p109
      %p112 = scmp.ne.s32.totalorder %s97, %s111
      %p113 = scmp.eq.s32.totalorder %s24, 0
      %p114 = por %p112, %p113
      %s116 = sadd.s32 %s115, 1
      %p119 = scmp.eq.s32.totalorder %s18, 1
      %p120 = scmp.ne.s32.totalorder %s115, %s117
      %p121 = scmp.eq.s32.totalorder %s18, 0
      %p122 = por %p120, %p121
      %p123 = scmp.ne.s32.totalorder %s115, %s117
      %p124 = scmp.eq.s32.totalorder %s23, 1
      %p125 = por %p123, %p124
      %p126 = scmp.ne.s32.totalorder %s117, %s118
      %p127 = scmp.eq.s32.totalorder %s23, 0
      %p128 = por %p126, %p127
      %p129 = scmp.ne.s32.totalorder %s117, %s118
      %p130 = scmp.eq.s32.totalorder %s24, 1
      %p131 = por %p129, %p130
      %p133 = scmp.ne.s32.totalorder %s118, %s132
      %p134 = scmp.eq.s32.totalorder %s24, 0
      %p135 = por %p133, %p134
      %s137 = sadd.s32 %s136, 1
      %p140 = scmp.eq.s32.totalorder %s18, 1
      %p141 = scmp.ne.s32.totalorder %s136, %s138
      %p142 = scmp.eq.s32.totalorder %s18, 0
      %p143 = por %p141, %p142
      %p144 = scmp.ne.s32.totalorder %s136, %s138
      %p145 = scmp.eq.s32.totalorder %s23, 1
      %p146 = por %p144, %p145
      %p147 = scmp.ne.s32.totalorder %s138, %s139
      %p148 = scmp.eq.s32.totalorder %s23, 0
      %p149 = por %p147, %p148
      %p150 = scmp.ne.s32.totalorder %s138, %s139
      %p151 = scmp.eq.s32.totalorder %s24, 1
      %p152 = por %p150, %p151
      %p154 = scmp.ne.s32.totalorder %s139, %s153
      %p155 = scmp.eq.s32.totalorder %s24, 0
      %p156 = por %p154, %p155
      %s158 = sadd.s32 %s157, 1
      %p161 = scmp.eq.s32.totalorder %s18, 1
      %p162 = scmp.ne.s32.totalorder %s157, %s159
      %p163 = scmp.eq.s32.totalorder %s18, 0
      %p164 = por %p162, %p163
      %p165 = scmp.ne.s32.totalorder %s157, %s159
      %p166 = scmp.eq.s32.totalorder %s23, 1
      %p167 = por %p165, %p166
      %p168 = scmp.ne.s32.totalorder %s159, %s160
      %p169 = scmp.eq.s32.totalorder %s23, 0
      %p170 = por %p168, %p169
      %p171 = scmp.ne.s32.totalorder %s159, %s160
      %p172 = scmp.eq.s32.totalorder %s24, 1
      %p173 = por %p171, %p172
      %p175 = scmp.ne.s32.totalorder %s160, %s174
      %p176 = scmp.eq.s32.totalorder %s24, 0
      %p177 = por %p175, %p176
      %s179 = sadd.s32 %s178, 1
      %p182 = scmp.eq.s32.totalorder %s18, 1
      %p183 = scmp.ne.s32.totalorder %s178, %s180
      %p184 = scmp.eq.s32.totalorder %s18, 0
      %p185 = por %p183, %p184
      %p186 = scmp.ne.s32.totalorder %s178, %s180
      %p187 = scmp.eq.s32.totalorder %s23, 1
      %p188 = por %p186, %p187
      %p189 = scmp.ne.s32.totalorder %s180, %s181
      %p190 = scmp.eq.s32.totalorder %s23, 0
      %p191 = por %p189, %p190
      %p192 = scmp.ne.s32.totalorder %s180, %s181
      %p193 = scmp.eq.s32.totalorder %s24, 1
      %p194 = por %p192, %p193
      %p196 = scmp.ne.s32.totalorder %s181, %s195
      %p197 = scmp.eq.s32.totalorder %s24, 0
      %p198 = por %p196, %p197
      %s200 = sadd.s32 %s199, 1
      %p203 = scmp.eq.s32.totalorder %s18, 1
      %p204 = scmp.ne.s32.totalorder %s199, %s201
      %p205 = scmp.eq.s32.totalorder %s18, 0
      %p206 = por %p204, %p205
      %p207 = scmp.ne.s32.totalorder %s199, %s201
      %p208 = scmp.eq.s32.totalorder %s23, 1
      %p209 = por %p207, %p208
      %p210 = scmp.ne.s32.totalorder %s201, %s202
      %p211 = scmp.eq.s32.totalorder %s23, 0
      %p212 = por %p210, %p211
      %p213 = scmp.ne.s32.totalorder %s201, %s202
      %p214 = scmp.eq.s32.totalorder %s24, 1
      %p215 = por %p213, %p214
      %p217 = scmp.ne.s32.totalorder %s202, %s216
      %p218 = scmp.eq.s32.totalorder %s24, 0
      %p219 = por %p217, %p218
      %s220 = ssub.s32 %s18, %s25
      %p221 = scmp.eq.s32.totalorder %s220, 0
      %s223 = sadd.s32 %s222, 1
      %s224 = scalar_select %p221, %s222, %s223
      %p227 = pneg %p221
      %p228 = scmp.eq.s32.totalorder %s18, 1
      %p229 = por %p227, %p228
      %p230 = scmp.ne.s32.totalorder %s222, %s225
      %p231 = scmp.eq.s32.totalorder %s18, 0
      %p232 = por %p230, %p231
      %p233 = scmp.ne.s32.totalorder %s222, %s225
      %p234 = scmp.eq.s32.totalorder %s23, 1
      %p235 = por %p233, %p234
      %p236 = scmp.ne.s32.totalorder %s225, %s226
      %p237 = scmp.eq.s32.totalorder %s23, 0
      %p238 = por %p236, %p237
      %p239 = scmp.ne.s32.totalorder %s225, %s226
      %p240 = scmp.eq.s32.totalorder %s24, 1
      %p241 = por %p239, %p240
      %p243 = scmp.ne.s32.totalorder %s226, %s242
      %p244 = scmp.eq.s32.totalorder %s24, 0
      %p245 = por %p243, %p244
      %p246 = scmp.le.s32.totalorder 1, %s18
      %p247 = scmp.lt.s32.totalorder %s18, 3
      %p248 = pnand %p246, %p247
      %p249 = pneg %p248
      // Predicated region
      $region9: #{tpu_custom_call.1} parent=5 // pred_check
        _
      $region10: #{tpu_custom_call.1} parent=5 // pred_check_branch
        %251 = sbr.rel (%p248) target = $region12
      $region11: #{tpu_custom_call.1} parent=5 // pred_region
        %s252 = ssub.s32 %s18, 1
        // Predicated region
        $region13: #{tpu_custom_call.1} parent=11 // pred_check
          %p253 = pneg %p65
        $region14: #{tpu_custom_call.1} parent=11 // pred_check_branch
          %255 = sbr.rel (%p253) target = $region16
        $region15: #{tpu_custom_call.1} parent=11 // pred_region
          _
        $region16: #{tpu_custom_call.1} parent=11 // pred_fallthru
          _
        // Predicated region
        $region17: #{tpu_custom_call.1} parent=11 // pred_check
          %p256 = pneg %p86
        $region18: #{tpu_custom_call.1} parent=11 // pred_check_branch
          %258 = sbr.rel (%p256) target = $region20
        $region19: #{tpu_custom_call.1} parent=11 // pred_region
          _
        $region20: #{tpu_custom_call.1} parent=11 // pred_fallthru
          _
        // Predicated region
        $region21: #{tpu_custom_call.1} parent=11 // pred_check
          %p259 = pneg %p107
        $region22: #{tpu_custom_call.1} parent=11 // pred_check_branch
          %261 = sbr.rel (%p259) target = $region24
        $region23: #{tpu_custom_call.1} parent=11 // pred_region
          _
        $region24: #{tpu_custom_call.1} parent=11 // pred_fallthru
          _
        // Predicated region
        $region25: #{tpu_custom_call.1} parent=11 // pred_check
          %p262 = pneg %p128
        $region26: #{tpu_custom_call.1} parent=11 // pred_check_branch
          %264 = sbr.rel (%p262) target = $region28
        $region27: #{tpu_custom_call.1} parent=11 // pred_region
          _
        $region28: #{tpu_custom_call.1} parent=11 // pred_fallthru
          _
        // Predicated region
        $region29: #{tpu_custom_call.1} parent=11 // pred_check
          %p265 = pneg %p149
        $region30: #{tpu_custom_call.1} parent=11 // pred_check_branch
          %267 = sbr.rel (%p265) target = $region32
        $region31: #{tpu_custom_call.1} parent=11 // pred_region
          _
        $region32: #{tpu_custom_call.1} parent=11 // pred_fallthru
          _
        // Predicated region
        $region33: #{tpu_custom_call.1} parent=11 // pred_check
          %p268 = pneg %p170
        $region34: #{tpu_custom_call.1} parent=11 // pred_check_branch
          %270 = sbr.rel (%p268) target = $region36
        $region35: #{tpu_custom_call.1} parent=11 // pred_region
          _
        $region36: #{tpu_custom_call.1} parent=11 // pred_fallthru
          _
        // Predicated region
        $region37: #{tpu_custom_call.1} parent=11 // pred_check
          %p271 = pneg %p191
        $region38: #{tpu_custom_call.1} parent=11 // pred_check_branch
          %273 = sbr.rel (%p271) target = $region40
        $region39: #{tpu_custom_call.1} parent=11 // pred_region
          _
        $region40: #{tpu_custom_call.1} parent=11 // pred_fallthru
          _
        // Predicated region
        $region41: #{tpu_custom_call.1} parent=11 // pred_check
          %p274 = pneg %p212
        $region42: #{tpu_custom_call.1} parent=11 // pred_check_branch
          %276 = sbr.rel (%p274) target = $region44
        $region43: #{tpu_custom_call.1} parent=11 // pred_region
          _
        $region44: #{tpu_custom_call.1} parent=11 // pred_fallthru
          _
      $region12: #{tpu_custom_call.1} parent=5 // pred_fallthru
        _
      %p277 = scmp.lt.s32.totalorder %s18, 2
      // Predicated region
      $region45: #{tpu_custom_call.1} parent=5 // pred_check
        %p278 = pneg %p277
      $region46: #{tpu_custom_call.1} parent=5 // pred_check_branch
        %280 = sbr.rel (%p278) target = $region48
      $region47: #{tpu_custom_call.1} parent=5 // pred_region
        // Predicated region
        $region49: #{tpu_custom_call.1} parent=47 // pred_check
          %p281 = pneg %p38
        $region50: #{tpu_custom_call.1} parent=47 // pred_check_branch
          %283 = sbr.rel (%p281) target = $region52
        $region51: #{tpu_custom_call.1} parent=47 // pred_region
          %s284 = smul.u32 8, %s18
          %p285 = scmp.lt.s32.totalorder %s284, 15
          %s286 = scalar_select %p285, %s284, 15
          %s287 = smul.addr %s286, 4
          %s288 = smul.addr %s287, 8
          %s289 = scalar_lea.vmem %s0, %s288
          %s290 = smul.u32 8, %s18
        $region52: #{tpu_custom_call.1} parent=47 // pred_fallthru
          _
      $region48: #{tpu_custom_call.1} parent=5 // pred_fallthru
        _
      %p291 = scmp.le.s32.totalorder 1, %s18
      %p292 = scmp.lt.s32.totalorder %s18, 3
      %p293 = pnand %p291, %p292
      %p294 = pneg %p293
      // Predicated region
      $region53: #{tpu_custom_call.1} parent=5 // pred_check
        _
      $region54: #{tpu_custom_call.1} parent=5 // pred_check_branch
        %296 = sbr.rel (%p293) target = $region56
      $region55: #{tpu_custom_call.1} parent=5 // pred_region
        %s297 = ssub.s32 %s18, 1
        %s298 = smul.u32 8, %s23
        %p299 = scmp.lt.s32.totalorder %s298, 15
        %s300 = scalar_select %p299, %s298, 15
        %s301 = smul.addr %s300, 4
        %s302 = smul.addr %s301, 8
        %s303 = scalar_lea.vmem %s0, %s302
        %p304 = pneg %p44
        %p305 = pneg %p41
        %p306 = pneg %p65
        %p307 = pneg %p62
        %p308 = pneg %p86
        %p309 = pneg %p83
        %p310 = pneg %p107
        %p311 = pneg %p104
        %p312 = pneg %p128
        %p313 = pneg %p125
        %p314 = pneg %p149
        %p315 = pneg %p146
        %p316 = pneg %p170
        %p317 = pneg %p167
        %p318 = pneg %p191
        %p319 = pneg %p188
        %p320 = pneg %p212
        %p321 = pneg %p209
        %p322 = pneg %p238
        %p323 = pneg %p235
        %s324 = sand.u32 %s225, 1
        %s325 = scalar_lea.sflag [#allocation3], %s324
        %s326 = sand.u32 %s225, 1
        %s327 = smul.addr %s326, 8
        %s328 = scalar_lea.vmem [#allocation2], %s327
        %s329 = smul.u32 8, %s23
        %p330 = scmp.lt.s32.totalorder %s329, 15
        %s331 = scalar_select %p330, %s329, 15
        %s332 = smul.addr %s331, 4
        %s333 = smul.addr %s332, 8
        %s334 = scalar_lea.vmem %s0, %s333
        %s335 = smul.u32 8, %s23
        %v337 = vld [vmem:[%s334] sm:$0xff]
        %v338 = vld [vmem:[%s334 + $0x8] sm:$0xff]
        %v339 = vld [vmem:[%s334 + $0x10] sm:$0xff]
        %v340 = vld [vmem:[%s334 + $0x18] sm:$0xf]
        %v341 = vld [vmem:[%s334 + $0x20] sm:$0xff]
        %v342 = vld [vmem:[%s334 + $0x28] sm:$0xff]
        %v343 = vld [vmem:[%s334 + $0x30] sm:$0xff]
        %v344 = vld [vmem:[%s334 + $0x38] sm:$0xf]
        %v345 = vld [vmem:[%s334 + $0x40] sm:$0xff]
        %v346 = vld [vmem:[%s334 + $0x48] sm:$0xff]
        %v347 = vld [vmem:[%s334 + $0x50] sm:$0xff]
        %v348 = vld [vmem:[%s334 + $0x58] sm:$0xf]
        %v349 = vld [vmem:[%s334 + $0x60] sm:$0xff]
        %v350 = vld [vmem:[%s334 + $0x68] sm:$0xff]
        %v351 = vld [vmem:[%s334 + $0x70] sm:$0xff]
        %v352 = vld [vmem:[%s334 + $0x78] sm:$0xf]
        %v353 = vld [vmem:[%s334 + $0x80] sm:$0xff]
        %v354 = vld [vmem:[%s334 + $0x88] sm:$0xff]
        %v355 = vld [vmem:[%s334 + $0x90] sm:$0xff]
        %v356 = vld [vmem:[%s334 + $0x98] sm:$0xf]
        %v357 = vld [vmem:[%s334 + $0xa0] sm:$0xff]
        %v358 = vld [vmem:[%s334 + $0xa8] sm:$0xff]
        %v359 = vld [vmem:[%s334 + $0xb0] sm:$0xff]
        %v360 = vld [vmem:[%s334 + $0xb8] sm:$0xf]
        %v361 = vld [vmem:[%s334 + $0xc0] sm:$0xff]
        %v362 = vld [vmem:[%s334 + $0xc8] sm:$0xff]
        %v363 = vld [vmem:[%s334 + $0xd0] sm:$0xff]
        %v364 = vld [vmem:[%s334 + $0xd8] sm:$0xf]
        %v365 = vld [vmem:[%s334 + $0xe0] sm:$0xff]
        %v366 = vld [vmem:[%s334 + $0xe8] sm:$0xff]
        %v367 = vld [vmem:[%s334 + $0xf0] sm:$0xff]
        %v368 = vld [vmem:[%s334 + $0xf8] sm:$0xf]
        %v369 = vpack.c.bf16 %v338, %v337
        %v370 = vpack.c.bf16 %v341, %v339
        %v371 = vpack.c.bf16 %v343, %v342
        %v372 = vpack.c.bf16 %v346, %v345
        %v373 = vpack.c.bf16 %v349, %v347
        %v374 = vpack.c.bf16 %v351, %v350
        %v375 = vpack.c.bf16 %v354, %v353
        %v376 = vpack.c.bf16 %v357, %v355
        %v377 = vpack.c.bf16 %v359, %v358
        %v378 = vpack.c.bf16 %v362, %v361
        %v379 = vpack.c.bf16 %v365, %v363
        %v380 = vpack.c.bf16 %v367, %v366
        %v381 = vld [vmem:[%s1] sm:$0xff]
        %v382 = vld [vmem:[%s1 + $0x8] sm:$0xff]
        %v383 = vld [vmem:[%s1 + $0x10] sm:$0xff]
        %v384 = vld [vmem:[%s1 + $0x18] sm:$0x33]
        %vm417 = vcmask 1046528
        %v418 = vrot.slane %v337, 1
        %v419 = vrot.slane %v338, 1
        %v420 = vsel %vm417, %v418, %v419
        %v421 = vrot.slane %v339, 1
        %v422 = vsel %vm417, %v419, %v421
        %v423 = vrot.slane %v340, 1
        %v424 = vsel %vm417, %v421, %v423
        %v425 = vrot.slane %v341, 1
        %v426 = vrot.slane %v342, 1
        %v427 = vsel %vm417, %v425, %v426
        %v428 = vrot.slane %v343, 1
        %v429 = vsel %vm417, %v426, %v428
        %v430 = vrot.slane %v344, 1
        %v431 = vsel %vm417, %v428, %v430
        %v432 = vrot.slane %v345, 1
        %v433 = vrot.slane %v346, 1
        %v434 = vsel %vm417, %v432, %v433
        %v435 = vrot.slane %v347, 1
        %v436 = vsel %vm417, %v433, %v435
        %v437 = vrot.slane %v348, 1
        %v438 = vsel %vm417, %v435, %v437
        %v439 = vrot.slane %v349, 1
        %v440 = vrot.slane %v350, 1
        %v441 = vsel %vm417, %v439, %v440
        %v442 = vrot.slane %v351, 1
        %v443 = vsel %vm417, %v440, %v442
        %v444 = vrot.slane %v352, 1
        %v445 = vsel %vm417, %v442, %v444
        %v446 = vrot.slane %v353, 1
        %v447 = vrot.slane %v354, 1
        %v448 = vsel %vm417, %v446, %v447
        %v449 = vrot.slane %v355, 1
        %v450 = vsel %vm417, %v447, %v449
        %v451 = vrot.slane %v356, 1
        %v452 = vsel %vm417, %v449, %v451
        %v453 = vrot.slane %v357, 1
        %v454 = vrot.slane %v358, 1
        %v455 = vsel %vm417, %v453, %v454
        %v456 = vrot.slane %v359, 1
        %v457 = vsel %vm417, %v454, %v456
        %v458 = vrot.slane %v360, 1
        %v459 = vsel %vm417, %v456, %v458
        %v460 = vrot.slane %v361, 1
        %v461 = vrot.slane %v362, 1
        %v462 = vsel %vm417, %v460, %v461
        %v463 = vrot.slane %v363, 1
        %v464 = vsel %vm417, %v461, %v463
        %v465 = vrot.slane %v364, 1
        %v466 = vsel %vm417, %v463, %v465
        %v467 = vrot.slane %v365, 1
        %v468 = vrot.slane %v366, 1
        %v469 = vsel %vm417, %v467, %v468
        %v470 = vrot.slane %v367, 1
        %v471 = vsel %vm417, %v468, %v470
        %v472 = vrot.slane %v368, 1
        %v473 = vsel %vm417, %v470, %v472
        %v498 = vpack.c.bf16 %v422, %v420
        %v499 = vpack.c.bf16 %v427, %v424
        %v500 = vpack.c.bf16 %v431, %v429
        %v501 = vpack.c.bf16 %v436, %v434
        %v502 = vpack.c.bf16 %v441, %v438
        %v503 = vpack.c.bf16 %v445, %v443
        %v504 = vpack.c.bf16 %v450, %v448
        %v505 = vpack.c.bf16 %v455, %v452
        %v506 = vpack.c.bf16 %v459, %v457
        %v507 = vpack.c.bf16 %v464, %v462
        %v508 = vpack.c.bf16 %v469, %v466
        %v509 = vpack.c.bf16 %v473, %v471
        %s510 = scalar_lea.vmem %s1, 32
        %v511 = vld [vmem:[%s510] sm:$0xff]
        %v512 = vld [vmem:[%s510 + $0x8] sm:$0xff]
        %v513 = vld [vmem:[%s510 + $0x10] sm:$0xff]
        %v514 = vld [vmem:[%s510 + $0x18] sm:$0x33]
        %v519 = vunpack.c.l.b16 %v511
        %v520 = vunpack.c.h.b16 %v511
        %v521 = vunpack.c.l.b16 %v512
        %v522 = vunpack.c.h.b16 %v512
        %v523 = vunpack.c.l.b16 %v513
        %v524 = vunpack.c.h.b16 %v513
        %v525 = vunpack.c.l.b16 %v514
        %v526 = vunpack.c.h.b16 %v514
        %v527 = vpack.c.b16 %v521, %v519
        %v528 = vpack.c.b16 %v522, %v520
        %v529 = vpack.c.b16 %v525, %v523
        %v530 = vpack.c.b16 %v526, %v524
        %vm533 = vcmask 228352
        %v535 = vsel %vm533, %v498, 0
        %v538 = vsel %vm533, %v499, 0
        %v541 = vsel %vm533, %v500, 0
        %v544 = vsel %vm533, %v501, 0
        %v547 = vsel %vm533, %v502, 0
        %v550 = vsel %vm533, %v503, 0
        %v553 = vsel %vm533, %v504, 0
        %v556 = vsel %vm533, %v505, 0
        %v559 = vsel %vm533, %v506, 0
        %v562 = vsel %vm533, %v507, 0
        %v565 = vsel %vm533, %v508, 0
        %v568 = vsel %vm533, %v509, 0
        %vm570 = vcmask 1045504
        %v572 = vsel %vm570, %v529, 0
        %v575 = vsel %vm570, %v530, 0
        %577 = vmatprep.subr.bf16.mxu0 0
        %578 = vmatpush1.bf16.msra.mxu0 0
        %579 = vmatprep.subr.bf16.mxu0 0
        %580 = vmatpush1.bf16.msra.mxu0 0
        %581 = vmatprep.subr.bf16.mxu0 0
        %582 = vmatpush1.bf16.msra.mxu0 0
        %583 = vmatprep.subr.bf16.mxu0 0
        %584 = vmatpush1.bf16.msra.mxu0 0
        %585 = vmatprep.subr.bf16.mxu0 0
        %586 = vmatpush1.bf16.msra.mxu0 0
        %587 = vmatprep.subr.bf16.mxu0 0
        %588 = vmatpush1.bf16.msra.mxu0 0
        %589 = vmatprep.subr.bf16.mxu0 %v575
        %590 = vmatpush1.bf16.msra.mxu0 %v572
        %591 = vmatprep.subr.bf16.mxu0 %v528
        %592 = vmatpush1.bf16.msra.mxu0 %v527
        %593 = vmatprep.subr.bf16.mxu0 0
        %594 = vmatpush2.bf16.msra.mxu0 0
        %595 = vmatprep.subr.bf16.mxu0 0
        %596 = vmatpush2.bf16.msra.mxu0 0
        %597 = vmatprep.subr.bf16.mxu0 0
        %598 = vmatpush2.bf16.msra.mxu0 0
        %599 = vmatprep.subr.bf16.mxu0 0
        %600 = vmatpush2.bf16.msra.mxu0 0
        %601 = vmatprep.subr.bf16.mxu0 0
        %602 = vmatpush2.bf16.msra.mxu0 0
        %603 = vmatprep.subr.bf16.mxu0 0
        %604 = vmatpush2.bf16.msra.mxu0 0
        %605 = vmatprep.subr.bf16.mxu0 0
        %606 = vmatpush2.bf16.msra.mxu0 0
        %607 = vmatprep.subr.bf16.mxu0 0
        %608 = vmatpush2.bf16.msra.mxu0 0
        %609 = vmatprep.mubr.bf16.mxu0 0
        %610 = vmatmul.mubr.bf16.gmra.mxu0 %v535
        %v611 = vpop.f32.mrf.mxu0
        %v612 = vadd.f32 0.0, %v611
        %v613 = vpop.f32.mrf.mxu0
        %v614 = vadd.f32 0.0, %v613
        %v615 = vpop.f32.mrf.mxu0
        %v616 = vadd.f32 0.0, %v615
        %v617 = vpop.f32.mrf.mxu0
        %v618 = vadd.f32 0.0, %v617
        %619 = vmatprep.mubr.bf16.mxu0 0
        %620 = vmatmul.mubr.bf16.gmra.mxu0 %v538
        %v621 = vpop.f32.mrf.mxu0
        %v622 = vadd.f32 0.0, %v621
        %v623 = vpop.f32.mrf.mxu0
        %v624 = vadd.f32 0.0, %v623
        %v625 = vpop.f32.mrf.mxu0
        %v626 = vadd.f32 0.0, %v625
        %v627 = vpop.f32.mrf.mxu0
        %v628 = vadd.f32 0.0, %v627
        %629 = vmatprep.mubr.bf16.mxu0 0
        %630 = vmatmul.mubr.bf16.gmra.mxu0 %v541
        %v631 = vpop.f32.mrf.mxu0
        %v632 = vadd.f32 0.0, %v631
        %v633 = vpop.f32.mrf.mxu0
        %v634 = vadd.f32 0.0, %v633
        %v635 = vpop.f32.mrf.mxu0
        %v636 = vadd.f32 0.0, %v635
        %v637 = vpop.f32.mrf.mxu0
        %v638 = vadd.f32 0.0, %v637
        %639 = vmatprep.mubr.bf16.mxu0 0
        %640 = vmatmul.mubr.bf16.gmra.mxu0 %v544
        %v641 = vpop.f32.mrf.mxu0
        %v642 = vadd.f32 0.0, %v641
        %v643 = vpop.f32.mrf.mxu0
        %v644 = vadd.f32 0.0, %v643
        %v645 = vpop.f32.mrf.mxu0
        %v646 = vadd.f32 0.0, %v645
        %v647 = vpop.f32.mrf.mxu0
        %v648 = vadd.f32 0.0, %v647
        %649 = vmatprep.mubr.bf16.mxu0 0
        %650 = vmatmul.mubr.bf16.gmra.mxu0 %v547
        %v651 = vpop.f32.mrf.mxu0
        %v652 = vadd.f32 0.0, %v651
        %v653 = vpop.f32.mrf.mxu0
        %v654 = vadd.f32 0.0, %v653
        %v655 = vpop.f32.mrf.mxu0
        %v656 = vadd.f32 0.0, %v655
        %v657 = vpop.f32.mrf.mxu0
        %v658 = vadd.f32 0.0, %v657
        %659 = vmatprep.mubr.bf16.mxu0 0
        %660 = vmatmul.mubr.bf16.gmra.mxu0 %v550
        %v661 = vpop.f32.mrf.mxu0
        %v662 = vadd.f32 0.0, %v661
        %v663 = vpop.f32.mrf.mxu0
        %v664 = vadd.f32 0.0, %v663
        %v665 = vpop.f32.mrf.mxu0
        %v666 = vadd.f32 0.0, %v665
        %v667 = vpop.f32.mrf.mxu0
        %v668 = vadd.f32 0.0, %v667
        %669 = vmatprep.mubr.bf16.mxu0 0
        %670 = vmatmul.mubr.bf16.gmra.mxu0 %v553
        %v671 = vpop.f32.mrf.mxu0
        %v672 = vadd.f32 0.0, %v671
        %v673 = vpop.f32.mrf.mxu0
        %v674 = vadd.f32 0.0, %v673
        %v675 = vpop.f32.mrf.mxu0
        %v676 = vadd.f32 0.0, %v675
        %v677 = vpop.f32.mrf.mxu0
        %v678 = vadd.f32 0.0, %v677
        %679 = vmatprep.mubr.bf16.mxu0 0
        %680 = vmatmul.mubr.bf16.gmra.mxu0 %v556
        %v681 = vpop.f32.mrf.mxu0
        %v682 = vadd.f32 0.0, %v681
        %v683 = vpop.f32.mrf.mxu0
        %v684 = vadd.f32 0.0, %v683
        %v685 = vpop.f32.mrf.mxu0
        %v686 = vadd.f32 0.0, %v685
        %v687 = vpop.f32.mrf.mxu0
        %v688 = vadd.f32 0.0, %v687
        %689 = vmatprep.mubr.bf16.mxu0 0
        %690 = vmatmul.mubr.bf16.gmra.mxu0 %v559
        %v691 = vpop.f32.mrf.mxu0
        %v692 = vadd.f32 0.0, %v691
        %v693 = vpop.f32.mrf.mxu0
        %v694 = vadd.f32 0.0, %v693
        %v695 = vpop.f32.mrf.mxu0
        %v696 = vadd.f32 0.0, %v695
        %v697 = vpop.f32.mrf.mxu0
        %v698 = vadd.f32 0.0, %v697
        %699 = vmatprep.mubr.bf16.mxu0 0
        %700 = vmatmul.mubr.bf16.gmra.mxu0 %v562
        %v701 = vpop.f32.mrf.mxu0
        %v702 = vadd.f32 0.0, %v701
        %v703 = vpop.f32.mrf.mxu0
        %v704 = vadd.f32 0.0, %v703
        %v705 = vpop.f32.mrf.mxu0
        %v706 = vadd.f32 0.0, %v705
        %v707 = vpop.f32.mrf.mxu0
        %v708 = vadd.f32 0.0, %v707
        %709 = vmatprep.mubr.bf16.mxu0 0
        %710 = vmatmul.mubr.bf16.gmra.mxu0 %v565
        %v711 = vpop.f32.mrf.mxu0
        %v712 = vadd.f32 0.0, %v711
        %v713 = vpop.f32.mrf.mxu0
        %v714 = vadd.f32 0.0, %v713
        %v715 = vpop.f32.mrf.mxu0
        %v716 = vadd.f32 0.0, %v715
        %v717 = vpop.f32.mrf.mxu0
        %v718 = vadd.f32 0.0, %v717
        %719 = vmatprep.mubr.bf16.mxu0 0
        %720 = vmatmul.mubr.bf16.gmra.mxu0 %v568
        %v721 = vpop.f32.mrf.mxu0
        %v722 = vadd.f32 0.0, %v721
        %v723 = vpop.f32.mrf.mxu0
        %v724 = vadd.f32 0.0, %v723
        %v725 = vpop.f32.mrf.mxu0
        %v726 = vadd.f32 0.0, %v725
        %v727 = vpop.f32.mrf.mxu0
        %v728 = vadd.f32 0.0, %v727
        %729 = vdwg.mxu0
        %v734 = vunpack.c.l.b16 %v381
        %v735 = vunpack.c.h.b16 %v381
        %v736 = vunpack.c.l.b16 %v382
        %v737 = vunpack.c.h.b16 %v382
        %v738 = vunpack.c.l.b16 %v383
        %v739 = vunpack.c.h.b16 %v383
        %v740 = vunpack.c.l.b16 %v384
        %v741 = vunpack.c.h.b16 %v384
        %v742 = vpack.c.b16 %v736, %v734
        %v743 = vpack.c.b16 %v737, %v735
        %v744 = vpack.c.b16 %v740, %v738
        %v745 = vpack.c.b16 %v741, %v739
        %v749 = vsel %vm533, %v369, 0
        %v752 = vsel %vm533, %v370, 0
        %v755 = vsel %vm533, %v371, 0
        %v758 = vsel %vm533, %v372, 0
        %v761 = vsel %vm533, %v373, 0
        %v764 = vsel %vm533, %v374, 0
        %v767 = vsel %vm533, %v375, 0
        %v770 = vsel %vm533, %v376, 0
        %v773 = vsel %vm533, %v377, 0
        %v776 = vsel %vm533, %v378, 0
        %v779 = vsel %vm533, %v379, 0
        %v782 = vsel %vm533, %v380, 0
        %v785 = vsel %vm570, %v744, 0
        %v788 = vsel %vm570, %v745, 0
        %790 = vmatprep.subr.bf16.mxu0 0
        %791 = vmatpush1.bf16.msra.mxu0 0
        %792 = vmatprep.subr.bf16.mxu0 0
        %793 = vmatpush1.bf16.msra.mxu0 0
        %794 = vmatprep.subr.bf16.mxu0 0
        %795 = vmatpush1.bf16.msra.mxu0 0
        %796 = vmatprep.subr.bf16.mxu0 0
        %797 = vmatpush1.bf16.msra.mxu0 0
        %798 = vmatprep.subr.bf16.mxu0 0
        %799 = vmatpush1.bf16.msra.mxu0 0
        %800 = vmatprep.subr.bf16.mxu0 0
        %801 = vmatpush1.bf16.msra.mxu0 0
        %802 = vmatprep.subr.bf16.mxu0 %v788
        %803 = vmatpush1.bf16.msra.mxu0 %v785
        %804 = vmatprep.subr.bf16.mxu0 %v743
        %805 = vmatpush1.bf16.msra.mxu0 %v742
        %806 = vmatprep.subr.bf16.mxu0 0
        %807 = vmatpush2.bf16.msra.mxu0 0
        %808 = vmatprep.subr.bf16.mxu0 0
        %809 = vmatpush2.bf16.msra.mxu0 0
        %810 = vmatprep.subr.bf16.mxu0 0
        %811 = vmatpush2.bf16.msra.mxu0 0
        %812 = vmatprep.subr.bf16.mxu0 0
        %813 = vmatpush2.bf16.msra.mxu0 0
        %814 = vmatprep.subr.bf16.mxu0 0
        %815 = vmatpush2.bf16.msra.mxu0 0
        %816 = vmatprep.subr.bf16.mxu0 0
        %817 = vmatpush2.bf16.msra.mxu0 0
        %818 = vmatprep.subr.bf16.mxu0 0
        %819 = vmatpush2.bf16.msra.mxu0 0
        %820 = vmatprep.subr.bf16.mxu0 0
        %821 = vmatpush2.bf16.msra.mxu0 0
        %822 = vmatprep.mubr.bf16.mxu0 0
        %823 = vmatmul.mubr.bf16.gmra.mxu0 %v749
        %v824 = vpop.f32.mrf.mxu0
        %v825 = vadd.f32 %v612, %v824
        %v826 = vpop.f32.mrf.mxu0
        %v827 = vadd.f32 %v614, %v826
        %v828 = vpop.f32.mrf.mxu0
        %v829 = vadd.f32 %v616, %v828
        %v830 = vpop.f32.mrf.mxu0
        %v831 = vadd.f32 %v618, %v830
        %832 = vmatprep.mubr.bf16.mxu0 0
        %833 = vmatmul.mubr.bf16.gmra.mxu0 %v752
        %v834 = vpop.f32.mrf.mxu0
        %v835 = vadd.f32 %v622, %v834
        %v836 = vpop.f32.mrf.mxu0
        %v837 = vadd.f32 %v624, %v836
        %v838 = vpop.f32.mrf.mxu0
        %v839 = vadd.f32 %v626, %v838
        %v840 = vpop.f32.mrf.mxu0
        %v841 = vadd.f32 %v628, %v840
        %842 = vmatprep.mubr.bf16.mxu0 0
        %843 = vmatmul.mubr.bf16.gmra.mxu0 %v755
        %v844 = vpop.f32.mrf.mxu0
        %v845 = vadd.f32 %v632, %v844
        %v846 = vpop.f32.mrf.mxu0
        %v847 = vadd.f32 %v634, %v846
        %v848 = vpop.f32.mrf.mxu0
        %v849 = vadd.f32 %v636, %v848
        %v850 = vpop.f32.mrf.mxu0
        %v851 = vadd.f32 %v638, %v850
        %852 = vmatprep.mubr.bf16.mxu0 0
        %853 = vmatmul.mubr.bf16.gmra.mxu0 %v758
        %v854 = vpop.f32.mrf.mxu0
        %v855 = vadd.f32 %v642, %v854
        %v856 = vpop.f32.mrf.mxu0
        %v857 = vadd.f32 %v644, %v856
        %v858 = vpop.f32.mrf.mxu0
        %v859 = vadd.f32 %v646, %v858
        %v860 = vpop.f32.mrf.mxu0
        %v861 = vadd.f32 %v648, %v860
        %862 = vmatprep.mubr.bf16.mxu0 0
        %863 = vmatmul.mubr.bf16.gmra.mxu0 %v761
        %v864 = vpop.f32.mrf.mxu0
        %v865 = vadd.f32 %v652, %v864
        %v866 = vpop.f32.mrf.mxu0
        %v867 = vadd.f32 %v654, %v866
        %v868 = vpop.f32.mrf.mxu0
        %v869 = vadd.f32 %v656, %v868
        %v870 = vpop.f32.mrf.mxu0
        %v871 = vadd.f32 %v658, %v870
        %872 = vmatprep.mubr.bf16.mxu0 0
        %873 = vmatmul.mubr.bf16.gmra.mxu0 %v764
        %v874 = vpop.f32.mrf.mxu0
        %v875 = vadd.f32 %v662, %v874
        %v876 = vpop.f32.mrf.mxu0
        %v877 = vadd.f32 %v664, %v876
        %v878 = vpop.f32.mrf.mxu0
        %v879 = vadd.f32 %v666, %v878
        %v880 = vpop.f32.mrf.mxu0
        %v881 = vadd.f32 %v668, %v880
        %882 = vmatprep.mubr.bf16.mxu0 0
        %883 = vmatmul.mubr.bf16.gmra.mxu0 %v767
        %v884 = vpop.f32.mrf.mxu0
        %v885 = vadd.f32 %v672, %v884
        %v886 = vpop.f32.mrf.mxu0
        %v887 = vadd.f32 %v674, %v886
        %v888 = vpop.f32.mrf.mxu0
        %v889 = vadd.f32 %v676, %v888
        %v890 = vpop.f32.mrf.mxu0
        %v891 = vadd.f32 %v678, %v890
        %892 = vmatprep.mubr.bf16.mxu0 0
        %893 = vmatmul.mubr.bf16.gmra.mxu0 %v770
        %v894 = vpop.f32.mrf.mxu0
        %v895 = vadd.f32 %v682, %v894
        %v896 = vpop.f32.mrf.mxu0
        %v897 = vadd.f32 %v684, %v896
        %v898 = vpop.f32.mrf.mxu0
        %v899 = vadd.f32 %v686, %v898
        %v900 = vpop.f32.mrf.mxu0
        %v901 = vadd.f32 %v688, %v900
        %902 = vmatprep.mubr.bf16.mxu0 0
        %903 = vmatmul.mubr.bf16.gmra.mxu0 %v773
        %v904 = vpop.f32.mrf.mxu0
        %v905 = vadd.f32 %v692, %v904
        %v906 = vpop.f32.mrf.mxu0
        %v907 = vadd.f32 %v694, %v906
        %v908 = vpop.f32.mrf.mxu0
        %v909 = vadd.f32 %v696, %v908
        %v910 = vpop.f32.mrf.mxu0
        %v911 = vadd.f32 %v698, %v910
        %912 = vmatprep.mubr.bf16.mxu0 0
        %913 = vmatmul.mubr.bf16.gmra.mxu0 %v776
        %v914 = vpop.f32.mrf.mxu0
        %v915 = vadd.f32 %v702, %v914
        %v916 = vpop.f32.mrf.mxu0
        %v917 = vadd.f32 %v704, %v916
        %v918 = vpop.f32.mrf.mxu0
        %v919 = vadd.f32 %v706, %v918
        %v920 = vpop.f32.mrf.mxu0
        %v921 = vadd.f32 %v708, %v920
        %922 = vmatprep.mubr.bf16.mxu0 0
        %923 = vmatmul.mubr.bf16.gmra.mxu0 %v779
        %v924 = vpop.f32.mrf.mxu0
        %v925 = vadd.f32 %v712, %v924
        %v926 = vpop.f32.mrf.mxu0
        %v927 = vadd.f32 %v714, %v926
        %v928 = vpop.f32.mrf.mxu0
        %v929 = vadd.f32 %v716, %v928
        %v930 = vpop.f32.mrf.mxu0
        %v931 = vadd.f32 %v718, %v930
        %932 = vmatprep.mubr.bf16.mxu0 0
        %933 = vmatmul.mubr.bf16.gmra.mxu0 %v782
        %v934 = vpop.f32.mrf.mxu0
        %v935 = vadd.f32 %v722, %v934
        %v936 = vpop.f32.mrf.mxu0
        %v937 = vadd.f32 %v724, %v936
        %v938 = vpop.f32.mrf.mxu0
        %v939 = vadd.f32 %v726, %v938
        %v940 = vpop.f32.mrf.mxu0
        %v941 = vadd.f32 %v728, %v940
        %942 = vdwg.mxu0
        %v943 = vrot.slane %v337, 2
        %v944 = vrot.slane %v338, 2
        %v945 = vsel %vm570, %v943, %v944
        %v946 = vrot.slane %v339, 2
        %v947 = vsel %vm570, %v944, %v946
        %v948 = vrot.slane %v340, 2
        %v949 = vsel %vm570, %v946, %v948
        %v950 = vrot.slane %v341, 2
        %v951 = vrot.slane %v342, 2
        %v952 = vsel %vm570, %v950, %v951
        %v953 = vrot.slane %v343, 2
        %v954 = vsel %vm570, %v951, %v953
        %v955 = vrot.slane %v344, 2
        %v956 = vsel %vm570, %v953, %v955
        %v957 = vrot.slane %v345, 2
        %v958 = vrot.slane %v346, 2
        %v959 = vsel %vm570, %v957, %v958
        %v960 = vrot.slane %v347, 2
        %v961 = vsel %vm570, %v958, %v960
        %v962 = vrot.slane %v348, 2
        %v963 = vsel %vm570, %v960, %v962
        %v964 = vrot.slane %v349, 2
        %v965 = vrot.slane %v350, 2
        %v966 = vsel %vm570, %v964, %v965
        %v967 = vrot.slane %v351, 2
        %v968 = vsel %vm570, %v965, %v967
        %v969 = vrot.slane %v352, 2
        %v970 = vsel %vm570, %v967, %v969
        %v971 = vrot.slane %v353, 2
        %v972 = vrot.slane %v354, 2
        %v973 = vsel %vm570, %v971, %v972
        %v974 = vrot.slane %v355, 2
        %v975 = vsel %vm570, %v972, %v974
        %v976 = vrot.slane %v356, 2
        %v977 = vsel %vm570, %v974, %v976
        %v978 = vrot.slane %v357, 2
        %v979 = vrot.slane %v358, 2
        %v980 = vsel %vm570, %v978, %v979
        %v981 = vrot.slane %v359, 2
        %v982 = vsel %vm570, %v979, %v981
        %v983 = vrot.slane %v360, 2
        %v984 = vsel %vm570, %v981, %v983
        %v985 = vrot.slane %v361, 2
        %v986 = vrot.slane %v362, 2
        %v987 = vsel %vm570, %v985, %v986
        %v988 = vrot.slane %v363, 2
        %v989 = vsel %vm570, %v986, %v988
        %v990 = vrot.slane %v364, 2
        %v991 = vsel %vm570, %v988, %v990
        %v992 = vrot.slane %v365, 2
        %v993 = vrot.slane %v366, 2
        %v994 = vsel %vm570, %v992, %v993
        %v995 = vrot.slane %v367, 2
        %v996 = vsel %vm570, %v993, %v995
        %v997 = vrot.slane %v368, 2
        %v998 = vsel %vm570, %v995, %v997
        %v1023 = vpack.c.bf16 %v947, %v945
        %v1024 = vpack.c.bf16 %v952, %v949
        %v1025 = vpack.c.bf16 %v956, %v954
        %v1026 = vpack.c.bf16 %v961, %v959
        %v1027 = vpack.c.bf16 %v966, %v963
        %v1028 = vpack.c.bf16 %v970, %v968
        %v1029 = vpack.c.bf16 %v975, %v973
        %v1030 = vpack.c.bf16 %v980, %v977
        %v1031 = vpack.c.bf16 %v984, %v982
        %v1032 = vpack.c.bf16 %v989, %v987
        %v1033 = vpack.c.bf16 %v994, %v991
        %v1034 = vpack.c.bf16 %v998, %v996
        %s1035 = scalar_lea.vmem %s1, 64
        %v1036 = vld [vmem:[%s1035] sm:$0xff]
        %v1037 = vld [vmem:[%s1035 + $0x8] sm:$0xff]
        %v1038 = vld [vmem:[%s1035 + $0x10] sm:$0xff]
        %v1039 = vld [vmem:[%s1035 + $0x18] sm:$0x33]
        %v1044 = vunpack.c.l.b16 %v1036
        %v1045 = vunpack.c.h.b16 %v1036
        %v1046 = vunpack.c.l.b16 %v1037
        %v1047 = vunpack.c.h.b16 %v1037
        %v1048 = vunpack.c.l.b16 %v1038
        %v1049 = vunpack.c.h.b16 %v1038
        %v1050 = vunpack.c.l.b16 %v1039
        %v1051 = vunpack.c.h.b16 %v1039
        %v1052 = vpack.c.b16 %v1046, %v1044
        %v1053 = vpack.c.b16 %v1047, %v1045
        %v1054 = vpack.c.b16 %v1050, %v1048
        %v1055 = vpack.c.b16 %v1051, %v1049
        %v1059 = vsel %vm533, %v1023, 0
        %v1062 = vsel %vm533, %v1024, 0
        %v1065 = vsel %vm533, %v1025, 0
        %v1068 = vsel %vm533, %v1026, 0
        %v1071 = vsel %vm533, %v1027, 0
        %v1074 = vsel %vm533, %v1028, 0
        %v1077 = vsel %vm533, %v1029, 0
        %v1080 = vsel %vm533, %v1030, 0
        %v1083 = vsel %vm533, %v1031, 0
        %v1086 = vsel %vm533, %v1032, 0
        %v1089 = vsel %vm533, %v1033, 0
        %v1092 = vsel %vm533, %v1034, 0
        %v1095 = vsel %vm570, %v1054, 0
        %v1098 = vsel %vm570, %v1055, 0
        %1100 = vmatprep.subr.bf16.mxu0 0
        %1101 = vmatpush1.bf16.msra.mxu0 0
        %1102 = vmatprep.subr.bf16.mxu0 0
        %1103 = vmatpush1.bf16.msra.mxu0 0
        %1104 = vmatprep.subr.bf16.mxu0 0
        %1105 = vmatpush1.bf16.msra.mxu0 0
        %1106 = vmatprep.subr.bf16.mxu0 0
        %1107 = vmatpush1.bf16.msra.mxu0 0
        %1108 = vmatprep.subr.bf16.mxu0 0
        %1109 = vmatpush1.bf16.msra.mxu0 0
        %1110 = vmatprep.subr.bf16.mxu0 0
        %1111 = vmatpush1.bf16.msra.mxu0 0
        %1112 = vmatprep.subr.bf16.mxu0 %v1098
        %1113 = vmatpush1.bf16.msra.mxu0 %v1095
        %1114 = vmatprep.subr.bf16.mxu0 %v1053
        %1115 = vmatpush1.bf16.msra.mxu0 %v1052
        %1116 = vmatprep.subr.bf16.mxu0 0
        %1117 = vmatpush2.bf16.msra.mxu0 0
        %1118 = vmatprep.subr.bf16.mxu0 0
        %1119 = vmatpush2.bf16.msra.mxu0 0
        %1120 = vmatprep.subr.bf16.mxu0 0
        %1121 = vmatpush2.bf16.msra.mxu0 0
        %1122 = vmatprep.subr.bf16.mxu0 0
        %1123 = vmatpush2.bf16.msra.mxu0 0
        %1124 = vmatprep.subr.bf16.mxu0 0
        %1125 = vmatpush2.bf16.msra.mxu0 0
        %1126 = vmatprep.subr.bf16.mxu0 0
        %1127 = vmatpush2.bf16.msra.mxu0 0
        %1128 = vmatprep.subr.bf16.mxu0 0
        %1129 = vmatpush2.bf16.msra.mxu0 0
        %1130 = vmatprep.subr.bf16.mxu0 0
        %1131 = vmatpush2.bf16.msra.mxu0 0
        %1132 = vmatprep.mubr.bf16.mxu0 0
        %1133 = vmatmul.mubr.bf16.gmra.mxu0 %v1059
        %v1134 = vpop.f32.mrf.mxu0
        %v1135 = vadd.f32 0.0, %v1134
        %v1136 = vpop.f32.mrf.mxu0
        %v1137 = vadd.f32 0.0, %v1136
        %v1138 = vpop.f32.mrf.mxu0
        %v1139 = vadd.f32 0.0, %v1138
        %v1140 = vpop.f32.mrf.mxu0
        %v1141 = vadd.f32 0.0, %v1140
        %1142 = vmatprep.mubr.bf16.mxu0 0
        %1143 = vmatmul.mubr.bf16.gmra.mxu0 %v1062
        %v1144 = vpop.f32.mrf.mxu0
        %v1145 = vadd.f32 0.0, %v1144
        %v1146 = vpop.f32.mrf.mxu0
        %v1147 = vadd.f32 0.0, %v1146
        %v1148 = vpop.f32.mrf.mxu0
        %v1149 = vadd.f32 0.0, %v1148
        %v1150 = vpop.f32.mrf.mxu0
        %v1151 = vadd.f32 0.0, %v1150
        %1152 = vmatprep.mubr.bf16.mxu0 0
        %1153 = vmatmul.mubr.bf16.gmra.mxu0 %v1065
        %v1154 = vpop.f32.mrf.mxu0
        %v1155 = vadd.f32 0.0, %v1154
        %v1156 = vpop.f32.mrf.mxu0
        %v1157 = vadd.f32 0.0, %v1156
        %v1158 = vpop.f32.mrf.mxu0
        %v1159 = vadd.f32 0.0, %v1158
        %v1160 = vpop.f32.mrf.mxu0
        %v1161 = vadd.f32 0.0, %v1160
        %1162 = vmatprep.mubr.bf16.mxu0 0
        %1163 = vmatmul.mubr.bf16.gmra.mxu0 %v1068
        %v1164 = vpop.f32.mrf.mxu0
        %v1165 = vadd.f32 0.0, %v1164
        %v1166 = vpop.f32.mrf.mxu0
        %v1167 = vadd.f32 0.0, %v1166
        %v1168 = vpop.f32.mrf.mxu0
        %v1169 = vadd.f32 0.0, %v1168
        %v1170 = vpop.f32.mrf.mxu0
        %v1171 = vadd.f32 0.0, %v1170
        %1172 = vmatprep.mubr.bf16.mxu0 0
        %1173 = vmatmul.mubr.bf16.gmra.mxu0 %v1071
        %v1174 = vpop.f32.mrf.mxu0
        %v1175 = vadd.f32 0.0, %v1174
        %v1176 = vpop.f32.mrf.mxu0
        %v1177 = vadd.f32 0.0, %v1176
        %v1178 = vpop.f32.mrf.mxu0
        %v1179 = vadd.f32 0.0, %v1178
        %v1180 = vpop.f32.mrf.mxu0
        %v1181 = vadd.f32 0.0, %v1180
        %1182 = vmatprep.mubr.bf16.mxu0 0
        %1183 = vmatmul.mubr.bf16.gmra.mxu0 %v1074
        %v1184 = vpop.f32.mrf.mxu0
        %v1185 = vadd.f32 0.0, %v1184
        %v1186 = vpop.f32.mrf.mxu0
        %v1187 = vadd.f32 0.0, %v1186
        %v1188 = vpop.f32.mrf.mxu0
        %v1189 = vadd.f32 0.0, %v1188
        %v1190 = vpop.f32.mrf.mxu0
        %v1191 = vadd.f32 0.0, %v1190
        %1192 = vmatprep.mubr.bf16.mxu0 0
        %1193 = vmatmul.mubr.bf16.gmra.mxu0 %v1077
        %v1194 = vpop.f32.mrf.mxu0
        %v1195 = vadd.f32 0.0, %v1194
        %v1196 = vpop.f32.mrf.mxu0
        %v1197 = vadd.f32 0.0, %v1196
        %v1198 = vpop.f32.mrf.mxu0
        %v1199 = vadd.f32 0.0, %v1198
        %v1200 = vpop.f32.mrf.mxu0
        %v1201 = vadd.f32 0.0, %v1200
        %1202 = vmatprep.mubr.bf16.mxu0 0
        %1203 = vmatmul.mubr.bf16.gmra.mxu0 %v1080
        %v1204 = vpop.f32.mrf.mxu0
        %v1205 = vadd.f32 0.0, %v1204
        %v1206 = vpop.f32.mrf.mxu0
        %v1207 = vadd.f32 0.0, %v1206
        %v1208 = vpop.f32.mrf.mxu0
        %v1209 = vadd.f32 0.0, %v1208
        %v1210 = vpop.f32.mrf.mxu0
        %v1211 = vadd.f32 0.0, %v1210
        %1212 = vmatprep.mubr.bf16.mxu0 0
        %1213 = vmatmul.mubr.bf16.gmra.mxu0 %v1083
        %v1214 = vpop.f32.mrf.mxu0
        %v1215 = vadd.f32 0.0, %v1214
        %v1216 = vpop.f32.mrf.mxu0
        %v1217 = vadd.f32 0.0, %v1216
        %v1218 = vpop.f32.mrf.mxu0
        %v1219 = vadd.f32 0.0, %v1218
        %v1220 = vpop.f32.mrf.mxu0
        %v1221 = vadd.f32 0.0, %v1220
        %1222 = vmatprep.mubr.bf16.mxu0 0
        %1223 = vmatmul.mubr.bf16.gmra.mxu0 %v1086
        %v1224 = vpop.f32.mrf.mxu0
        %v1225 = vadd.f32 0.0, %v1224
        %v1226 = vpop.f32.mrf.mxu0
        %v1227 = vadd.f32 0.0, %v1226
        %v1228 = vpop.f32.mrf.mxu0
        %v1229 = vadd.f32 0.0, %v1228
        %v1230 = vpop.f32.mrf.mxu0
        %v1231 = vadd.f32 0.0, %v1230
        %1232 = vmatprep.mubr.bf16.mxu0 0
        %1233 = vmatmul.mubr.bf16.gmra.mxu0 %v1089
        %v1234 = vpop.f32.mrf.mxu0
        %v1235 = vadd.f32 0.0, %v1234
        %v1236 = vpop.f32.mrf.mxu0
        %v1237 = vadd.f32 0.0, %v1236
        %v1238 = vpop.f32.mrf.mxu0
        %v1239 = vadd.f32 0.0, %v1238
        %v1240 = vpop.f32.mrf.mxu0
        %v1241 = vadd.f32 0.0, %v1240
        %1242 = vmatprep.mubr.bf16.mxu0 0
        %1243 = vmatmul.mubr.bf16.gmra.mxu0 %v1092
        %v1244 = vpop.f32.mrf.mxu0
        %v1245 = vadd.f32 0.0, %v1244
        %v1246 = vpop.f32.mrf.mxu0
        %v1247 = vadd.f32 0.0, %v1246
        %v1248 = vpop.f32.mrf.mxu0
        %v1249 = vadd.f32 0.0, %v1248
        %v1250 = vpop.f32.mrf.mxu0
        %v1251 = vadd.f32 0.0, %v1250
        %1252 = vdwg.mxu0
        %v1253 = vadd.f32 %v825, %v1135
        %v1254 = vadd.f32 %v827, %v1137
        %v1255 = vadd.f32 %v829, %v1139
        %v1256 = vadd.f32 %v831, %v1141
        %v1257 = vadd.f32 %v835, %v1145
        %v1258 = vadd.f32 %v837, %v1147
        %v1259 = vadd.f32 %v839, %v1149
        %v1260 = vadd.f32 %v841, %v1151
        %v1261 = vadd.f32 %v845, %v1155
        %v1262 = vadd.f32 %v847, %v1157
        %v1263 = vadd.f32 %v849, %v1159
        %v1264 = vadd.f32 %v851, %v1161
        %v1265 = vadd.f32 %v855, %v1165
        %v1266 = vadd.f32 %v857, %v1167
        %v1267 = vadd.f32 %v859, %v1169
        %v1268 = vadd.f32 %v861, %v1171
        %v1269 = vadd.f32 %v865, %v1175
        %v1270 = vadd.f32 %v867, %v1177
        %v1271 = vadd.f32 %v869, %v1179
        %v1272 = vadd.f32 %v871, %v1181
        %v1273 = vadd.f32 %v875, %v1185
        %v1274 = vadd.f32 %v877, %v1187
        %v1275 = vadd.f32 %v879, %v1189
        %v1276 = vadd.f32 %v881, %v1191
        %v1277 = vadd.f32 %v885, %v1195
        %v1278 = vadd.f32 %v887, %v1197
        %v1279 = vadd.f32 %v889, %v1199
        %v1280 = vadd.f32 %v891, %v1201
        %v1281 = vadd.f32 %v895, %v1205
        %v1282 = vadd.f32 %v897, %v1207
        %v1283 = vadd.f32 %v899, %v1209
        %v1284 = vadd.f32 %v901, %v1211
        %v1285 = vadd.f32 %v905, %v1215
        %v1286 = vadd.f32 %v907, %v1217
        %v1287 = vadd.f32 %v909, %v1219
        %v1288 = vadd.f32 %v911, %v1221
        %v1289 = vadd.f32 %v915, %v1225
        %v1290 = vadd.f32 %v917, %v1227
        %v1291 = vadd.f32 %v919, %v1229
        %v1292 = vadd.f32 %v921, %v1231
        %v1293 = vadd.f32 %v925, %v1235
        %v1294 = vadd.f32 %v927, %v1237
        %v1295 = vadd.f32 %v929, %v1239
        %v1296 = vadd.f32 %v931, %v1241
        %v1297 = vadd.f32 %v935, %v1245
        %v1298 = vadd.f32 %v937, %v1247
        %v1299 = vadd.f32 %v939, %v1249
        %v1300 = vadd.f32 %v941, %v1251
        %vm1301 = vcmask 1044480
        %v1302 = vrot.slane %v337, 3
        %v1303 = vrot.slane %v338, 3
        %v1304 = vsel %vm1301, %v1302, %v1303
        %v1305 = vrot.slane %v339, 3
        %v1306 = vsel %vm1301, %v1303, %v1305
        %v1307 = vrot.slane %v340, 3
        %v1308 = vsel %vm1301, %v1305, %v1307
        %v1309 = vrot.slane %v341, 3
        %v1310 = vrot.slane %v342, 3
        %v1311 = vsel %vm1301, %v1309, %v1310
        %v1312 = vrot.slane %v343, 3
        %v1313 = vsel %vm1301, %v1310, %v1312
        %v1314 = vrot.slane %v344, 3
        %v1315 = vsel %vm1301, %v1312, %v1314
        %v1316 = vrot.slane %v345, 3
        %v1317 = vrot.slane %v346, 3
        %v1318 = vsel %vm1301, %v1316, %v1317
        %v1319 = vrot.slane %v347, 3
        %v1320 = vsel %vm1301, %v1317, %v1319
        %v1321 = vrot.slane %v348, 3
        %v1322 = vsel %vm1301, %v1319, %v1321
        %v1323 = vrot.slane %v349, 3
        %v1324 = vrot.slane %v350, 3
        %v1325 = vsel %vm1301, %v1323, %v1324
        %v1326 = vrot.slane %v351, 3
        %v1327 = vsel %vm1301, %v1324, %v1326
        %v1328 = vrot.slane %v352, 3
        %v1329 = vsel %vm1301, %v1326, %v1328
        %v1330 = vrot.slane %v353, 3
        %v1331 = vrot.slane %v354, 3
        %v1332 = vsel %vm1301, %v1330, %v1331
        %v1333 = vrot.slane %v355, 3
        %v1334 = vsel %vm1301, %v1331, %v1333
        %v1335 = vrot.slane %v356, 3
        %v1336 = vsel %vm1301, %v1333, %v1335
        %v1337 = vrot.slane %v357, 3
        %v1338 = vrot.slane %v358, 3
        %v1339 = vsel %vm1301, %v1337, %v1338
        %v1340 = vrot.slane %v359, 3
        %v1341 = vsel %vm1301, %v1338, %v1340
        %v1342 = vrot.slane %v360, 3
        %v1343 = vsel %vm1301, %v1340, %v1342
        %v1344 = vrot.slane %v361, 3
        %v1345 = vrot.slane %v362, 3
        %v1346 = vsel %vm1301, %v1344, %v1345
        %v1347 = vrot.slane %v363, 3
        %v1348 = vsel %vm1301, %v1345, %v1347
        %v1349 = vrot.slane %v364, 3
        %v1350 = vsel %vm1301, %v1347, %v1349
        %v1351 = vrot.slane %v365, 3
        %v1352 = vrot.slane %v366, 3
        %v1353 = vsel %vm1301, %v1351, %v1352
        %v1354 = vrot.slane %v367, 3
        %v1355 = vsel %vm1301, %v1352, %v1354
        %v1356 = vrot.slane %v368, 3
        %v1357 = vsel %vm1301, %v1354, %v1356
        %v1382 = vpack.c.bf16 %v1306, %v1304
        %v1383 = vpack.c.bf16 %v1311, %v1308
        %v1384 = vpack.c.bf16 %v1315, %v1313
        %v1385 = vpack.c.bf16 %v1320, %v1318
        %v1386 = vpack.c.bf16 %v1325, %v1322
        %v1387 = vpack.c.bf16 %v1329, %v1327
        %v1388 = vpack.c.bf16 %v1334, %v1332
        %v1389 = vpack.c.bf16 %v1339, %v1336
        %v1390 = vpack.c.bf16 %v1343, %v1341
        %v1391 = vpack.c.bf16 %v1348, %v1346
        %v1392 = vpack.c.bf16 %v1353, %v1350
        %v1393 = vpack.c.bf16 %v1357, %v1355
        %s1394 = scalar_lea.vmem %s1, 96
        %v1395 = vld [vmem:[%s1394] sm:$0xff]
        %v1396 = vld [vmem:[%s1394 + $0x8] sm:$0xff]
        %v1397 = vld [vmem:[%s1394 + $0x10] sm:$0xff]
        %v1398 = vld [vmem:[%s1394 + $0x18] sm:$0x33]
        %v1403 = vunpack.c.l.b16 %v1395
        %v1404 = vunpack.c.h.b16 %v1395
        %v1405 = vunpack.c.l.b16 %v1396
        %v1406 = vunpack.c.h.b16 %v1396
        %v1407 = vunpack.c.l.b16 %v1397
        %v1408 = vunpack.c.h.b16 %v1397
        %v1409 = vunpack.c.l.b16 %v1398
        %v1410 = vunpack.c.h.b16 %v1398
        %v1411 = vpack.c.b16 %v1405, %v1403
        %v1412 = vpack.c.b16 %v1406, %v1404
        %v1413 = vpack.c.b16 %v1409, %v1407
        %v1414 = vpack.c.b16 %v1410, %v1408
        %v1418 = vsel %vm533, %v1382, 0
        %v1421 = vsel %vm533, %v1383, 0
        %v1424 = vsel %vm533, %v1384, 0
        %v1427 = vsel %vm533, %v1385, 0
        %v1430 = vsel %vm533, %v1386, 0
        %v1433 = vsel %vm533, %v1387, 0
        %v1436 = vsel %vm533, %v1388, 0
        %v1439 = vsel %vm533, %v1389, 0
        %v1442 = vsel %vm533, %v1390, 0
        %v1445 = vsel %vm533, %v1391, 0
        %v1448 = vsel %vm533, %v1392, 0
        %v1451 = vsel %vm533, %v1393, 0
        %v1454 = vsel %vm570, %v1413, 0
        %v1457 = vsel %vm570, %v1414, 0
        %1459 = vmatprep.subr.bf16.mxu0 0
        %1460 = vmatpush1.bf16.msra.mxu0 0
        %1461 = vmatprep.subr.bf16.mxu0 0
        %1462 = vmatpush1.bf16.msra.mxu0 0
        %1463 = vmatprep.subr.bf16.mxu0 0
        %1464 = vmatpush1.bf16.msra.mxu0 0
        %1465 = vmatprep.subr.bf16.mxu0 0
        %1466 = vmatpush1.bf16.msra.mxu0 0
        %1467 = vmatprep.subr.bf16.mxu0 0
        %1468 = vmatpush1.bf16.msra.mxu0 0
        %1469 = vmatprep.subr.bf16.mxu0 0
        %1470 = vmatpush1.bf16.msra.mxu0 0
        %1471 = vmatprep.subr.bf16.mxu0 %v1457
        %1472 = vmatpush1.bf16.msra.mxu0 %v1454
        %1473 = vmatprep.subr.bf16.mxu0 %v1412
        %1474 = vmatpush1.bf16.msra.mxu0 %v1411
        %1475 = vmatprep.subr.bf16.mxu0 0
        %1476 = vmatpush2.bf16.msra.mxu0 0
        %1477 = vmatprep.subr.bf16.mxu0 0
        %1478 = vmatpush2.bf16.msra.mxu0 0
        %1479 = vmatprep.subr.bf16.mxu0 0
        %1480 = vmatpush2.bf16.msra.mxu0 0
        %1481 = vmatprep.subr.bf16.mxu0 0
        %1482 = vmatpush2.bf16.msra.mxu0 0
        %1483 = vmatprep.subr.bf16.mxu0 0
        %1484 = vmatpush2.bf16.msra.mxu0 0
        %1485 = vmatprep.subr.bf16.mxu0 0
        %1486 = vmatpush2.bf16.msra.mxu0 0
        %1487 = vmatprep.subr.bf16.mxu0 0
        %1488 = vmatpush2.bf16.msra.mxu0 0
        %1489 = vmatprep.subr.bf16.mxu0 0
        %1490 = vmatpush2.bf16.msra.mxu0 0
        %1491 = vmatprep.mubr.bf16.mxu0 0
        %1492 = vmatmul.mubr.bf16.gmra.mxu0 %v1418
        %v1493 = vpop.f32.mrf.mxu0
        %v1494 = vadd.f32 0.0, %v1493
        %v1495 = vpop.f32.mrf.mxu0
        %v1496 = vadd.f32 0.0, %v1495
        %v1497 = vpop.f32.mrf.mxu0
        %v1498 = vadd.f32 0.0, %v1497
        %v1499 = vpop.f32.mrf.mxu0
        %v1500 = vadd.f32 0.0, %v1499
        %1501 = vmatprep.mubr.bf16.mxu0 0
        %1502 = vmatmul.mubr.bf16.gmra.mxu0 %v1421
        %v1503 = vpop.f32.mrf.mxu0
        %v1504 = vadd.f32 0.0, %v1503
        %v1505 = vpop.f32.mrf.mxu0
        %v1506 = vadd.f32 0.0, %v1505
        %v1507 = vpop.f32.mrf.mxu0
        %v1508 = vadd.f32 0.0, %v1507
        %v1509 = vpop.f32.mrf.mxu0
        %v1510 = vadd.f32 0.0, %v1509
        %1511 = vmatprep.mubr.bf16.mxu0 0
        %1512 = vmatmul.mubr.bf16.gmra.mxu0 %v1424
        %v1513 = vpop.f32.mrf.mxu0
        %v1514 = vadd.f32 0.0, %v1513
        %v1515 = vpop.f32.mrf.mxu0
        %v1516 = vadd.f32 0.0, %v1515
        %v1517 = vpop.f32.mrf.mxu0
        %v1518 = vadd.f32 0.0, %v1517
        %v1519 = vpop.f32.mrf.mxu0
        %v1520 = vadd.f32 0.0, %v1519
        %1521 = vmatprep.mubr.bf16.mxu0 0
        %1522 = vmatmul.mubr.bf16.gmra.mxu0 %v1427
        %v1523 = vpop.f32.mrf.mxu0
        %v1524 = vadd.f32 0.0, %v1523
        %v1525 = vpop.f32.mrf.mxu0
        %v1526 = vadd.f32 0.0, %v1525
        %v1527 = vpop.f32.mrf.mxu0
        %v1528 = vadd.f32 0.0, %v1527
        %v1529 = vpop.f32.mrf.mxu0
        %v1530 = vadd.f32 0.0, %v1529
        %1531 = vmatprep.mubr.bf16.mxu0 0
        %1532 = vmatmul.mubr.bf16.gmra.mxu0 %v1430
        %v1533 = vpop.f32.mrf.mxu0
        %v1534 = vadd.f32 0.0, %v1533
        %v1535 = vpop.f32.mrf.mxu0
        %v1536 = vadd.f32 0.0, %v1535
        %v1537 = vpop.f32.mrf.mxu0
        %v1538 = vadd.f32 0.0, %v1537
        %v1539 = vpop.f32.mrf.mxu0
        %v1540 = vadd.f32 0.0, %v1539
        %1541 = vmatprep.mubr.bf16.mxu0 0
        %1542 = vmatmul.mubr.bf16.gmra.mxu0 %v1433
        %v1543 = vpop.f32.mrf.mxu0
        %v1544 = vadd.f32 0.0, %v1543
        %v1545 = vpop.f32.mrf.mxu0
        %v1546 = vadd.f32 0.0, %v1545
        %v1547 = vpop.f32.mrf.mxu0
        %v1548 = vadd.f32 0.0, %v1547
        %v1549 = vpop.f32.mrf.mxu0
        %v1550 = vadd.f32 0.0, %v1549
        %1551 = vmatprep.mubr.bf16.mxu0 0
        %1552 = vmatmul.mubr.bf16.gmra.mxu0 %v1436
        %v1553 = vpop.f32.mrf.mxu0
        %v1554 = vadd.f32 0.0, %v1553
        %v1555 = vpop.f32.mrf.mxu0
        %v1556 = vadd.f32 0.0, %v1555
        %v1557 = vpop.f32.mrf.mxu0
        %v1558 = vadd.f32 0.0, %v1557
        %v1559 = vpop.f32.mrf.mxu0
        %v1560 = vadd.f32 0.0, %v1559
        %1561 = vmatprep.mubr.bf16.mxu0 0
        %1562 = vmatmul.mubr.bf16.gmra.mxu0 %v1439
        %v1563 = vpop.f32.mrf.mxu0
        %v1564 = vadd.f32 0.0, %v1563
        %v1565 = vpop.f32.mrf.mxu0
        %v1566 = vadd.f32 0.0, %v1565
        %v1567 = vpop.f32.mrf.mxu0
        %v1568 = vadd.f32 0.0, %v1567
        %v1569 = vpop.f32.mrf.mxu0
        %v1570 = vadd.f32 0.0, %v1569
        %1571 = vmatprep.mubr.bf16.mxu0 0
        %1572 = vmatmul.mubr.bf16.gmra.mxu0 %v1442
        %v1573 = vpop.f32.mrf.mxu0
        %v1574 = vadd.f32 0.0, %v1573
        %v1575 = vpop.f32.mrf.mxu0
        %v1576 = vadd.f32 0.0, %v1575
        %v1577 = vpop.f32.mrf.mxu0
        %v1578 = vadd.f32 0.0, %v1577
        %v1579 = vpop.f32.mrf.mxu0
        %v1580 = vadd.f32 0.0, %v1579
        %1581 = vmatprep.mubr.bf16.mxu0 0
        %1582 = vmatmul.mubr.bf16.gmra.mxu0 %v1445
        %v1583 = vpop.f32.mrf.mxu0
        %v1584 = vadd.f32 0.0, %v1583
        %v1585 = vpop.f32.mrf.mxu0
        %v1586 = vadd.f32 0.0, %v1585
        %v1587 = vpop.f32.mrf.mxu0
        %v1588 = vadd.f32 0.0, %v1587
        %v1589 = vpop.f32.mrf.mxu0
        %v1590 = vadd.f32 0.0, %v1589
        %1591 = vmatprep.mubr.bf16.mxu0 0
        %1592 = vmatmul.mubr.bf16.gmra.mxu0 %v1448
        %v1593 = vpop.f32.mrf.mxu0
        %v1594 = vadd.f32 0.0, %v1593
        %v1595 = vpop.f32.mrf.mxu0
        %v1596 = vadd.f32 0.0, %v1595
        %v1597 = vpop.f32.mrf.mxu0
        %v1598 = vadd.f32 0.0, %v1597
        %v1599 = vpop.f32.mrf.mxu0
        %v1600 = vadd.f32 0.0, %v1599
        %1601 = vmatprep.mubr.bf16.mxu0 0
        %1602 = vmatmul.mubr.bf16.gmra.mxu0 %v1451
        %v1603 = vpop.f32.mrf.mxu0
        %v1604 = vadd.f32 0.0, %v1603
        %v1605 = vpop.f32.mrf.mxu0
        %v1606 = vadd.f32 0.0, %v1605
        %v1607 = vpop.f32.mrf.mxu0
        %v1608 = vadd.f32 0.0, %v1607
        %v1609 = vpop.f32.mrf.mxu0
        %v1610 = vadd.f32 0.0, %v1609
        %1611 = vdwg.mxu0
        %v1612 = vadd.f32 %v1253, %v1494
        %v1613 = vadd.f32 %v1254, %v1496
        %v1614 = vadd.f32 %v1255, %v1498
        %v1615 = vadd.f32 %v1256, %v1500
        %v1616 = vadd.f32 %v1257, %v1504
        %v1617 = vadd.f32 %v1258, %v1506
        %v1618 = vadd.f32 %v1259, %v1508
        %v1619 = vadd.f32 %v1260, %v1510
        %v1620 = vadd.f32 %v1261, %v1514
        %v1621 = vadd.f32 %v1262, %v1516
        %v1622 = vadd.f32 %v1263, %v1518
        %v1623 = vadd.f32 %v1264, %v1520
        %v1624 = vadd.f32 %v1265, %v1524
        %v1625 = vadd.f32 %v1266, %v1526
        %v1626 = vadd.f32 %v1267, %v1528
        %v1627 = vadd.f32 %v1268, %v1530
        %v1628 = vadd.f32 %v1269, %v1534
        %v1629 = vadd.f32 %v1270, %v1536
        %v1630 = vadd.f32 %v1271, %v1538
        %v1631 = vadd.f32 %v1272, %v1540
        %v1632 = vadd.f32 %v1273, %v1544
        %v1633 = vadd.f32 %v1274, %v1546
        %v1634 = vadd.f32 %v1275, %v1548
        %v1635 = vadd.f32 %v1276, %v1550
        %v1636 = vadd.f32 %v1277, %v1554
        %v1637 = vadd.f32 %v1278, %v1556
        %v1638 = vadd.f32 %v1279, %v1558
        %v1639 = vadd.f32 %v1280, %v1560
        %v1640 = vadd.f32 %v1281, %v1564
        %v1641 = vadd.f32 %v1282, %v1566
        %v1642 = vadd.f32 %v1283, %v1568
        %v1643 = vadd.f32 %v1284, %v1570
        %v1644 = vadd.f32 %v1285, %v1574
        %v1645 = vadd.f32 %v1286, %v1576
        %v1646 = vadd.f32 %v1287, %v1578
        %v1647 = vadd.f32 %v1288, %v1580
        %v1648 = vadd.f32 %v1289, %v1584
        %v1649 = vadd.f32 %v1290, %v1586
        %v1650 = vadd.f32 %v1291, %v1588
        %v1651 = vadd.f32 %v1292, %v1590
        %v1652 = vadd.f32 %v1293, %v1594
        %v1653 = vadd.f32 %v1294, %v1596
        %v1654 = vadd.f32 %v1295, %v1598
        %v1655 = vadd.f32 %v1296, %v1600
        %v1656 = vadd.f32 %v1297, %v1604
        %v1657 = vadd.f32 %v1298, %v1606
        %v1658 = vadd.f32 %v1299, %v1608
        %v1659 = vadd.f32 %v1300, %v1610
        %vm1660 = vcmask 1043456
        %v1661 = vrot.slane %v337, 4
        %v1662 = vrot.slane %v338, 4
        %v1663 = vsel %vm1660, %v1661, %v1662
        %v1664 = vrot.slane %v339, 4
        %v1665 = vsel %vm1660, %v1662, %v1664
        %v1666 = vrot.slane %v340, 4
        %v1667 = vsel %vm1660, %v1664, %v1666
        %v1668 = vrot.slane %v341, 4
        %v1669 = vrot.slane %v342, 4
        %v1670 = vsel %vm1660, %v1668, %v1669
        %v1671 = vrot.slane %v343, 4
        %v1672 = vsel %vm1660, %v1669, %v1671
        %v1673 = vrot.slane %v344, 4
        %v1674 = vsel %vm1660, %v1671, %v1673
        %v1675 = vrot.slane %v345, 4
        %v1676 = vrot.slane %v346, 4
        %v1677 = vsel %vm1660, %v1675, %v1676
        %v1678 = vrot.slane %v347, 4
        %v1679 = vsel %vm1660, %v1676, %v1678
        %v1680 = vrot.slane %v348, 4
        %v1681 = vsel %vm1660, %v1678, %v1680
        %v1682 = vrot.slane %v349, 4
        %v1683 = vrot.slane %v350, 4
        %v1684 = vsel %vm1660, %v1682, %v1683
        %v1685 = vrot.slane %v351, 4
        %v1686 = vsel %vm1660, %v1683, %v1685
        %v1687 = vrot.slane %v352, 4
        %v1688 = vsel %vm1660, %v1685, %v1687
        %v1689 = vrot.slane %v353, 4
        %v1690 = vrot.slane %v354, 4
        %v1691 = vsel %vm1660, %v1689, %v1690
        %v1692 = vrot.slane %v355, 4
        %v1693 = vsel %vm1660, %v1690, %v1692
        %v1694 = vrot.slane %v356, 4
        %v1695 = vsel %vm1660, %v1692, %v1694
        %v1696 = vrot.slane %v357, 4
        %v1697 = vrot.slane %v358, 4
        %v1698 = vsel %vm1660, %v1696, %v1697
        %v1699 = vrot.slane %v359, 4
        %v1700 = vsel %vm1660, %v1697, %v1699
        %v1701 = vrot.slane %v360, 4
        %v1702 = vsel %vm1660, %v1699, %v1701
        %v1703 = vrot.slane %v361, 4
        %v1704 = vrot.slane %v362, 4
        %v1705 = vsel %vm1660, %v1703, %v1704
        %v1706 = vrot.slane %v363, 4
        %v1707 = vsel %vm1660, %v1704, %v1706
        %v1708 = vrot.slane %v364, 4
        %v1709 = vsel %vm1660, %v1706, %v1708
        %v1710 = vrot.slane %v365, 4
        %v1711 = vrot.slane %v366, 4
        %v1712 = vsel %vm1660, %v1710, %v1711
        %v1713 = vrot.slane %v367, 4
        %v1714 = vsel %vm1660, %v1711, %v1713
        %v1715 = vrot.slane %v368, 4
        %v1716 = vsel %vm1660, %v1713, %v1715
        %v1741 = vpack.c.bf16 %v1665, %v1663
        %v1742 = vpack.c.bf16 %v1670, %v1667
        %v1743 = vpack.c.bf16 %v1674, %v1672
        %v1744 = vpack.c.bf16 %v1679, %v1677
        %v1745 = vpack.c.bf16 %v1684, %v1681
        %v1746 = vpack.c.bf16 %v1688, %v1686
        %v1747 = vpack.c.bf16 %v1693, %v1691
        %v1748 = vpack.c.bf16 %v1698, %v1695
        %v1749 = vpack.c.bf16 %v1702, %v1700
        %v1750 = vpack.c.bf16 %v1707, %v1705
        %v1751 = vpack.c.bf16 %v1712, %v1709
        %v1752 = vpack.c.bf16 %v1716, %v1714
        %s1753 = scalar_lea.vmem %s1, 128
        %v1754 = vld [vmem:[%s1753] sm:$0xff]
        %v1755 = vld [vmem:[%s1753 + $0x8] sm:$0xff]
        %v1756 = vld [vmem:[%s1753 + $0x10] sm:$0xff]
        %v1757 = vld [vmem:[%s1753 + $0x18] sm:$0x33]
        %v1762 = vunpack.c.l.b16 %v1754
        %v1763 = vunpack.c.h.b16 %v1754
        %v1764 = vunpack.c.l.b16 %v1755
        %v1765 = vunpack.c.h.b16 %v1755
        %v1766 = vunpack.c.l.b16 %v1756
        %v1767 = vunpack.c.h.b16 %v1756
        %v1768 = vunpack.c.l.b16 %v1757
        %v1769 = vunpack.c.h.b16 %v1757
        %v1770 = vpack.c.b16 %v1764, %v1762
        %v1771 = vpack.c.b16 %v1765, %v1763
        %v1772 = vpack.c.b16 %v1768, %v1766
        %v1773 = vpack.c.b16 %v1769, %v1767
        %v1777 = vsel %vm533, %v1741, 0
        %v1780 = vsel %vm533, %v1742, 0
        %v1783 = vsel %vm533, %v1743, 0
        %v1786 = vsel %vm533, %v1744, 0
        %v1789 = vsel %vm533, %v1745, 0
        %v1792 = vsel %vm533, %v1746, 0
        %v1795 = vsel %vm533, %v1747, 0
        %v1798 = vsel %vm533, %v1748, 0
        %v1801 = vsel %vm533, %v1749, 0
        %v1804 = vsel %vm533, %v1750, 0
        %v1807 = vsel %vm533, %v1751, 0
        %v1810 = vsel %vm533, %v1752, 0
        %v1813 = vsel %vm570, %v1772, 0
        %v1816 = vsel %vm570, %v1773, 0
        %1818 = vmatprep.subr.bf16.mxu0 0
        %1819 = vmatpush1.bf16.msra.mxu0 0
        %1820 = vmatprep.subr.bf16.mxu0 0
        %1821 = vmatpush1.bf16.msra.mxu0 0
        %1822 = vmatprep.subr.bf16.mxu0 0
        %1823 = vmatpush1.bf16.msra.mxu0 0
        %1824 = vmatprep.subr.bf16.mxu0 0
        %1825 = vmatpush1.bf16.msra.mxu0 0
        %1826 = vmatprep.subr.bf16.mxu0 0
        %1827 = vmatpush1.bf16.msra.mxu0 0
        %1828 = vmatprep.subr.bf16.mxu0 0
        %1829 = vmatpush1.bf16.msra.mxu0 0
        %1830 = vmatprep.subr.bf16.mxu0 %v1816
        %1831 = vmatpush1.bf16.msra.mxu0 %v1813
        %1832 = vmatprep.subr.bf16.mxu0 %v1771
        %1833 = vmatpush1.bf16.msra.mxu0 %v1770
        %1834 = vmatprep.subr.bf16.mxu0 0
        %1835 = vmatpush2.bf16.msra.mxu0 0
        %1836 = vmatprep.subr.bf16.mxu0 0
        %1837 = vmatpush2.bf16.msra.mxu0 0
        %1838 = vmatprep.subr.bf16.mxu0 0
        %1839 = vmatpush2.bf16.msra.mxu0 0
        %1840 = vmatprep.subr.bf16.mxu0 0
        %1841 = vmatpush2.bf16.msra.mxu0 0
        %1842 = vmatprep.subr.bf16.mxu0 0
        %1843 = vmatpush2.bf16.msra.mxu0 0
        %1844 = vmatprep.subr.bf16.mxu0 0
        %1845 = vmatpush2.bf16.msra.mxu0 0
        %1846 = vmatprep.subr.bf16.mxu0 0
        %1847 = vmatpush2.bf16.msra.mxu0 0
        %1848 = vmatprep.subr.bf16.mxu0 0
        %1849 = vmatpush2.bf16.msra.mxu0 0
        %1850 = vmatprep.mubr.bf16.mxu0 0
        %1851 = vmatmul.mubr.bf16.gmra.mxu0 %v1777
        %v1852 = vpop.f32.mrf.mxu0
        %v1853 = vadd.f32 0.0, %v1852
        %v1854 = vpop.f32.mrf.mxu0
        %v1855 = vadd.f32 0.0, %v1854
        %v1856 = vpop.f32.mrf.mxu0
        %v1857 = vadd.f32 0.0, %v1856
        %v1858 = vpop.f32.mrf.mxu0
        %v1859 = vadd.f32 0.0, %v1858
        %1860 = vmatprep.mubr.bf16.mxu0 0
        %1861 = vmatmul.mubr.bf16.gmra.mxu0 %v1780
        %v1862 = vpop.f32.mrf.mxu0
        %v1863 = vadd.f32 0.0, %v1862
        %v1864 = vpop.f32.mrf.mxu0
        %v1865 = vadd.f32 0.0, %v1864
        %v1866 = vpop.f32.mrf.mxu0
        %v1867 = vadd.f32 0.0, %v1866
        %v1868 = vpop.f32.mrf.mxu0
        %v1869 = vadd.f32 0.0, %v1868
        %1870 = vmatprep.mubr.bf16.mxu0 0
        %1871 = vmatmul.mubr.bf16.gmra.mxu0 %v1783
        %v1872 = vpop.f32.mrf.mxu0
        %v1873 = vadd.f32 0.0, %v1872
        %v1874 = vpop.f32.mrf.mxu0
        %v1875 = vadd.f32 0.0, %v1874
        %v1876 = vpop.f32.mrf.mxu0
        %v1877 = vadd.f32 0.0, %v1876
        %v1878 = vpop.f32.mrf.mxu0
        %v1879 = vadd.f32 0.0, %v1878
        %1880 = vmatprep.mubr.bf16.mxu0 0
        %1881 = vmatmul.mubr.bf16.gmra.mxu0 %v1786
        %v1882 = vpop.f32.mrf.mxu0
        %v1883 = vadd.f32 0.0, %v1882
        %v1884 = vpop.f32.mrf.mxu0
        %v1885 = vadd.f32 0.0, %v1884
        %v1886 = vpop.f32.mrf.mxu0
        %v1887 = vadd.f32 0.0, %v1886
        %v1888 = vpop.f32.mrf.mxu0
        %v1889 = vadd.f32 0.0, %v1888
        %1890 = vmatprep.mubr.bf16.mxu0 0
        %1891 = vmatmul.mubr.bf16.gmra.mxu0 %v1789
        %v1892 = vpop.f32.mrf.mxu0
        %v1893 = vadd.f32 0.0, %v1892
        %v1894 = vpop.f32.mrf.mxu0
        %v1895 = vadd.f32 0.0, %v1894
        %v1896 = vpop.f32.mrf.mxu0
        %v1897 = vadd.f32 0.0, %v1896
        %v1898 = vpop.f32.mrf.mxu0
        %v1899 = vadd.f32 0.0, %v1898
        %1900 = vmatprep.mubr.bf16.mxu0 0
        %1901 = vmatmul.mubr.bf16.gmra.mxu0 %v1792
        %v1902 = vpop.f32.mrf.mxu0
        %v1903 = vadd.f32 0.0, %v1902
        %v1904 = vpop.f32.mrf.mxu0
        %v1905 = vadd.f32 0.0, %v1904
        %v1906 = vpop.f32.mrf.mxu0
        %v1907 = vadd.f32 0.0, %v1906
        %v1908 = vpop.f32.mrf.mxu0
        %v1909 = vadd.f32 0.0, %v1908
        %1910 = vmatprep.mubr.bf16.mxu0 0
        %1911 = vmatmul.mubr.bf16.gmra.mxu0 %v1795
        %v1912 = vpop.f32.mrf.mxu0
        %v1913 = vadd.f32 0.0, %v1912
        %v1914 = vpop.f32.mrf.mxu0
        %v1915 = vadd.f32 0.0, %v1914
        %v1916 = vpop.f32.mrf.mxu0
        %v1917 = vadd.f32 0.0, %v1916
        %v1918 = vpop.f32.mrf.mxu0
        %v1919 = vadd.f32 0.0, %v1918
        %1920 = vmatprep.mubr.bf16.mxu0 0
        %1921 = vmatmul.mubr.bf16.gmra.mxu0 %v1798
        %v1922 = vpop.f32.mrf.mxu0
        %v1923 = vadd.f32 0.0, %v1922
        %v1924 = vpop.f32.mrf.mxu0
        %v1925 = vadd.f32 0.0, %v1924
        %v1926 = vpop.f32.mrf.mxu0
        %v1927 = vadd.f32 0.0, %v1926
        %v1928 = vpop.f32.mrf.mxu0
        %v1929 = vadd.f32 0.0, %v1928
        %1930 = vmatprep.mubr.bf16.mxu0 0
        %1931 = vmatmul.mubr.bf16.gmra.mxu0 %v1801
        %v1932 = vpop.f32.mrf.mxu0
        %v1933 = vadd.f32 0.0, %v1932
        %v1934 = vpop.f32.mrf.mxu0
        %v1935 = vadd.f32 0.0, %v1934
        %v1936 = vpop.f32.mrf.mxu0
        %v1937 = vadd.f32 0.0, %v1936
        %v1938 = vpop.f32.mrf.mxu0
        %v1939 = vadd.f32 0.0, %v1938
        %1940 = vmatprep.mubr.bf16.mxu0 0
        %1941 = vmatmul.mubr.bf16.gmra.mxu0 %v1804
        %v1942 = vpop.f32.mrf.mxu0
        %v1943 = vadd.f32 0.0, %v1942
        %v1944 = vpop.f32.mrf.mxu0
        %v1945 = vadd.f32 0.0, %v1944
        %v1946 = vpop.f32.mrf.mxu0
        %v1947 = vadd.f32 0.0, %v1946
        %v1948 = vpop.f32.mrf.mxu0
        %v1949 = vadd.f32 0.0, %v1948
        %1950 = vmatprep.mubr.bf16.mxu0 0
        %1951 = vmatmul.mubr.bf16.gmra.mxu0 %v1807
        %v1952 = vpop.f32.mrf.mxu0
        %v1953 = vadd.f32 0.0, %v1952
        %v1954 = vpop.f32.mrf.mxu0
        %v1955 = vadd.f32 0.0, %v1954
        %v1956 = vpop.f32.mrf.mxu0
        %v1957 = vadd.f32 0.0, %v1956
        %v1958 = vpop.f32.mrf.mxu0
        %v1959 = vadd.f32 0.0, %v1958
        %1960 = vmatprep.mubr.bf16.mxu0 0
        %1961 = vmatmul.mubr.bf16.gmra.mxu0 %v1810
        %v1962 = vpop.f32.mrf.mxu0
        %v1963 = vadd.f32 0.0, %v1962
        %v1964 = vpop.f32.mrf.mxu0
        %v1965 = vadd.f32 0.0, %v1964
        %v1966 = vpop.f32.mrf.mxu0
        %v1967 = vadd.f32 0.0, %v1966
        %v1968 = vpop.f32.mrf.mxu0
        %v1969 = vadd.f32 0.0, %v1968
        %1970 = vdwg.mxu0
        %v1971 = vadd.f32 %v1612, %v1853
        %v1972 = vadd.f32 %v1613, %v1855
        %v1973 = vadd.f32 %v1614, %v1857
        %v1974 = vadd.f32 %v1615, %v1859
        %v1975 = vadd.f32 %v1616, %v1863
        %v1976 = vadd.f32 %v1617, %v1865
        %v1977 = vadd.f32 %v1618, %v1867
        %v1978 = vadd.f32 %v1619, %v1869
        %v1979 = vadd.f32 %v1620, %v1873
        %v1980 = vadd.f32 %v1621, %v1875
        %v1981 = vadd.f32 %v1622, %v1877
        %v1982 = vadd.f32 %v1623, %v1879
        %v1983 = vadd.f32 %v1624, %v1883
        %v1984 = vadd.f32 %v1625, %v1885
        %v1985 = vadd.f32 %v1626, %v1887
        %v1986 = vadd.f32 %v1627, %v1889
        %v1987 = vadd.f32 %v1628, %v1893
        %v1988 = vadd.f32 %v1629, %v1895
        %v1989 = vadd.f32 %v1630, %v1897
        %v1990 = vadd.f32 %v1631, %v1899
        %v1991 = vadd.f32 %v1632, %v1903
        %v1992 = vadd.f32 %v1633, %v1905
        %v1993 = vadd.f32 %v1634, %v1907
        %v1994 = vadd.f32 %v1635, %v1909
        %v1995 = vadd.f32 %v1636, %v1913
        %v1996 = vadd.f32 %v1637, %v1915
        %v1997 = vadd.f32 %v1638, %v1917
        %v1998 = vadd.f32 %v1639, %v1919
        %v1999 = vadd.f32 %v1640, %v1923
        %v2000 = vadd.f32 %v1641, %v1925
        %v2001 = vadd.f32 %v1642, %v1927
        %v2002 = vadd.f32 %v1643, %v1929
        %v2003 = vadd.f32 %v1644, %v1933
        %v2004 = vadd.f32 %v1645, %v1935
        %v2005 = vadd.f32 %v1646, %v1937
        %v2006 = vadd.f32 %v1647, %v1939
        %v2007 = vadd.f32 %v1648, %v1943
        %v2008 = vadd.f32 %v1649, %v1945
        %v2009 = vadd.f32 %v1650, %v1947
        %v2010 = vadd.f32 %v1651, %v1949
        %v2011 = vadd.f32 %v1652, %v1953
        %v2012 = vadd.f32 %v1653, %v1955
        %v2013 = vadd.f32 %v1654, %v1957
        %v2014 = vadd.f32 %v1655, %v1959
        %v2015 = vadd.f32 %v1656, %v1963
        %v2016 = vadd.f32 %v1657, %v1965
        %v2017 = vadd.f32 %v1658, %v1967
        %v2018 = vadd.f32 %v1659, %v1969
        %v2019 = vmax.f32 %v1971, %v1972
        %v2020 = vmax.f32 %v1973, %v1974
        %v2021 = vmax.f32 %v1975, %v1976
        %v2022 = vmax.f32 %v1977, %v1978
        %v2023 = vmax.f32 %v1979, %v1980
        %v2024 = vmax.f32 %v1981, %v1982
        %v2025 = vmax.f32 %v1983, %v1984
        %v2026 = vmax.f32 %v1985, %v1986
        %v2027 = vmax.f32 %v1987, %v1988
        %v2028 = vmax.f32 %v1989, %v1990
        %v2029 = vmax.f32 %v1991, %v1992
        %v2030 = vmax.f32 %v1993, %v1994
        %v2031 = vmax.f32 %v1995, %v1996
        %v2032 = vmax.f32 %v1997, %v1998
        %v2033 = vmax.f32 %v1999, %v2000
        %v2034 = vmax.f32 %v2001, %v2002
        %v2035 = vmax.f32 %v2003, %v2004
        %v2036 = vmax.f32 %v2005, %v2006
        %v2037 = vmax.f32 %v2007, %v2008
        %v2038 = vmax.f32 %v2009, %v2010
        %v2039 = vmax.f32 %v2011, %v2012
        %v2040 = vmax.f32 %v2013, %v2014
        %v2041 = vmax.f32 %v2015, %v2016
        %v2042 = vmax.f32 %v2017, %v2018
        %v2067 = vcombine.high %v2019, %v2019
        %v2069 = vunpack.c.l.s4 1983009808
        %v2070 = vunpack.c.0.s8 %v2069
        %v2071 = vlaneseq
        %v2072 = vshrl.u32 %v2071, 7
        %v2073 = vsub.s32 %v2070, %v2072
        %v2074 = vrot.slane %v2019, %v2073
        %v2076 = vunpack.c.l.s4 1983009808
        %v2077 = vunpack.c.0.s8 %v2076
        %v2078 = vlaneseq
        %v2079 = vshrl.u32 %v2078, 7
        %v2080 = vsub.s32 %v2077, %v2079
        %v2081 = vrot.slane %v2067, %v2080
        %v2082 = vcombine.high %v2074, %v2074
        %v2083 = vcombine.high %v2081, %v2081
        %v2084 = vcombine.high %v2020, %v2020
        %v2086 = vunpack.c.l.s4 1983009808
        %v2087 = vunpack.c.0.s8 %v2086
        %v2088 = vlaneseq
        %v2089 = vshrl.u32 %v2088, 7
        %v2090 = vsub.s32 %v2087, %v2089
        %v2091 = vrot.slane %v2020, %v2090
        %v2093 = vunpack.c.l.s4 1983009808
        %v2094 = vunpack.c.0.s8 %v2093
        %v2095 = vlaneseq
        %v2096 = vshrl.u32 %v2095, 7
        %v2097 = vsub.s32 %v2094, %v2096
        %v2098 = vrot.slane %v2084, %v2097
        %v2099 = vcombine.high %v2091, %v2091
        %v2100 = vcombine.high %v2098, %v2098
        %v2101 = vcombine.high %v2021, %v2021
        %v2103 = vunpack.c.l.s4 1983009808
        %v2104 = vunpack.c.0.s8 %v2103
        %v2105 = vlaneseq
        %v2106 = vshrl.u32 %v2105, 7
        %v2107 = vsub.s32 %v2104, %v2106
        %v2108 = vrot.slane %v2021, %v2107
        %v2110 = vunpack.c.l.s4 1983009808
        %v2111 = vunpack.c.0.s8 %v2110
        %v2112 = vlaneseq
        %v2113 = vshrl.u32 %v2112, 7
        %v2114 = vsub.s32 %v2111, %v2113
        %v2115 = vrot.slane %v2101, %v2114
        %v2116 = vcombine.high %v2108, %v2108
        %v2117 = vcombine.high %v2115, %v2115
        %v2118 = vcombine.high %v2022, %v2022
        %v2120 = vunpack.c.l.s4 1983009808
        %v2121 = vunpack.c.0.s8 %v2120
        %v2122 = vlaneseq
        %v2123 = vshrl.u32 %v2122, 7
        %v2124 = vsub.s32 %v2121, %v2123
        %v2125 = vrot.slane %v2022, %v2124
        %v2127 = vunpack.c.l.s4 1983009808
        %v2128 = vunpack.c.0.s8 %v2127
        %v2129 = vlaneseq
        %v2130 = vshrl.u32 %v2129, 7
        %v2131 = vsub.s32 %v2128, %v2130
        %v2132 = vrot.slane %v2118, %v2131
        %v2133 = vcombine.high %v2125, %v2125
        %v2134 = vcombine.high %v2132, %v2132
        %v2135 = vcombine.high %v2023, %v2023
        %v2137 = vunpack.c.l.s4 1983009808
        %v2138 = vunpack.c.0.s8 %v2137
        %v2139 = vlaneseq
        %v2140 = vshrl.u32 %v2139, 7
        %v2141 = vsub.s32 %v2138, %v2140
        %v2142 = vrot.slane %v2023, %v2141
        %v2144 = vunpack.c.l.s4 1983009808
        %v2145 = vunpack.c.0.s8 %v2144
        %v2146 = vlaneseq
        %v2147 = vshrl.u32 %v2146, 7
        %v2148 = vsub.s32 %v2145, %v2147
        %v2149 = vrot.slane %v2135, %v2148
        %v2150 = vcombine.high %v2142, %v2142
        %v2151 = vcombine.high %v2149, %v2149
        %v2152 = vcombine.high %v2024, %v2024
        %v2154 = vunpack.c.l.s4 1983009808
        %v2155 = vunpack.c.0.s8 %v2154
        %v2156 = vlaneseq
        %v2157 = vshrl.u32 %v2156, 7
        %v2158 = vsub.s32 %v2155, %v2157
        %v2159 = vrot.slane %v2024, %v2158
        %v2161 = vunpack.c.l.s4 1983009808
        %v2162 = vunpack.c.0.s8 %v2161
        %v2163 = vlaneseq
        %v2164 = vshrl.u32 %v2163, 7
        %v2165 = vsub.s32 %v2162, %v2164
        %v2166 = vrot.slane %v2152, %v2165
        %v2167 = vcombine.high %v2159, %v2159
        %v2168 = vcombine.high %v2166, %v2166
        %v2169 = vcombine.high %v2025, %v2025
        %v2171 = vunpack.c.l.s4 1983009808
        %v2172 = vunpack.c.0.s8 %v2171
        %v2173 = vlaneseq
        %v2174 = vshrl.u32 %v2173, 7
        %v2175 = vsub.s32 %v2172, %v2174
        %v2176 = vrot.slane %v2025, %v2175
        %v2178 = vunpack.c.l.s4 1983009808
        %v2179 = vunpack.c.0.s8 %v2178
        %v2180 = vlaneseq
        %v2181 = vshrl.u32 %v2180, 7
        %v2182 = vsub.s32 %v2179, %v2181
        %v2183 = vrot.slane %v2169, %v2182
        %v2184 = vcombine.high %v2176, %v2176
        %v2185 = vcombine.high %v2183, %v2183
        %v2186 = vcombine.high %v2026, %v2026
        %v2188 = vunpack.c.l.s4 1983009808
        %v2189 = vunpack.c.0.s8 %v2188
        %v2190 = vlaneseq
        %v2191 = vshrl.u32 %v2190, 7
        %v2192 = vsub.s32 %v2189, %v2191
        %v2193 = vrot.slane %v2026, %v2192
        %v2195 = vunpack.c.l.s4 1983009808
        %v2196 = vunpack.c.0.s8 %v2195
        %v2197 = vlaneseq
        %v2198 = vshrl.u32 %v2197, 7
        %v2199 = vsub.s32 %v2196, %v2198
        %v2200 = vrot.slane %v2186, %v2199
        %v2201 = vcombine.high %v2193, %v2193
        %v2202 = vcombine.high %v2200, %v2200
        %v2203 = vcombine.high %v2027, %v2027
        %v2205 = vunpack.c.l.s4 1983009808
        %v2206 = vunpack.c.0.s8 %v2205
        %v2207 = vlaneseq
        %v2208 = vshrl.u32 %v2207, 7
        %v2209 = vsub.s32 %v2206, %v2208
        %v2210 = vrot.slane %v2027, %v2209
        %v2212 = vunpack.c.l.s4 1983009808
        %v2213 = vunpack.c.0.s8 %v2212
        %v2214 = vlaneseq
        %v2215 = vshrl.u32 %v2214, 7
        %v2216 = vsub.s32 %v2213, %v2215
        %v2217 = vrot.slane %v2203, %v2216
        %v2218 = vcombine.high %v2210, %v2210
        %v2219 = vcombine.high %v2217, %v2217
        %v2220 = vcombine.high %v2028, %v2028
        %v2222 = vunpack.c.l.s4 1983009808
        %v2223 = vunpack.c.0.s8 %v2222
        %v2224 = vlaneseq
        %v2225 = vshrl.u32 %v2224, 7
        %v2226 = vsub.s32 %v2223, %v2225
        %v2227 = vrot.slane %v2028, %v2226
        %v2229 = vunpack.c.l.s4 1983009808
        %v2230 = vunpack.c.0.s8 %v2229
        %v2231 = vlaneseq
        %v2232 = vshrl.u32 %v2231, 7
        %v2233 = vsub.s32 %v2230, %v2232
        %v2234 = vrot.slane %v2220, %v2233
        %v2235 = vcombine.high %v2227, %v2227
        %v2236 = vcombine.high %v2234, %v2234
        %v2237 = vcombine.high %v2029, %v2029
        %v2239 = vunpack.c.l.s4 1983009808
        %v2240 = vunpack.c.0.s8 %v2239
        %v2241 = vlaneseq
        %v2242 = vshrl.u32 %v2241, 7
        %v2243 = vsub.s32 %v2240, %v2242
        %v2244 = vrot.slane %v2029, %v2243
        %v2246 = vunpack.c.l.s4 1983009808
        %v2247 = vunpack.c.0.s8 %v2246
        %v2248 = vlaneseq
        %v2249 = vshrl.u32 %v2248, 7
        %v2250 = vsub.s32 %v2247, %v2249
        %v2251 = vrot.slane %v2237, %v2250
        %v2252 = vcombine.high %v2244, %v2244
        %v2253 = vcombine.high %v2251, %v2251
        %v2254 = vcombine.high %v2030, %v2030
        %v2256 = vunpack.c.l.s4 1983009808
        %v2257 = vunpack.c.0.s8 %v2256
        %v2258 = vlaneseq
        %v2259 = vshrl.u32 %v2258, 7
        %v2260 = vsub.s32 %v2257, %v2259
        %v2261 = vrot.slane %v2030, %v2260
        %v2263 = vunpack.c.l.s4 1983009808
        %v2264 = vunpack.c.0.s8 %v2263
        %v2265 = vlaneseq
        %v2266 = vshrl.u32 %v2265, 7
        %v2267 = vsub.s32 %v2264, %v2266
        %v2268 = vrot.slane %v2254, %v2267
        %v2269 = vcombine.high %v2261, %v2261
        %v2270 = vcombine.high %v2268, %v2268
        %v2271 = vcombine.high %v2031, %v2031
        %v2273 = vunpack.c.l.s4 1983009808
        %v2274 = vunpack.c.0.s8 %v2273
        %v2275 = vlaneseq
        %v2276 = vshrl.u32 %v2275, 7
        %v2277 = vsub.s32 %v2274, %v2276
        %v2278 = vrot.slane %v2031, %v2277
        %v2280 = vunpack.c.l.s4 1983009808
        %v2281 = vunpack.c.0.s8 %v2280
        %v2282 = vlaneseq
        %v2283 = vshrl.u32 %v2282, 7
        %v2284 = vsub.s32 %v2281, %v2283
        %v2285 = vrot.slane %v2271, %v2284
        %v2286 = vcombine.high %v2278, %v2278
        %v2287 = vcombine.high %v2285, %v2285
        %v2288 = vcombine.high %v2032, %v2032
        %v2290 = vunpack.c.l.s4 1983009808
        %v2291 = vunpack.c.0.s8 %v2290
        %v2292 = vlaneseq
        %v2293 = vshrl.u32 %v2292, 7
        %v2294 = vsub.s32 %v2291, %v2293
        %v2295 = vrot.slane %v2032, %v2294
        %v2297 = vunpack.c.l.s4 1983009808
        %v2298 = vunpack.c.0.s8 %v2297
        %v2299 = vlaneseq
        %v2300 = vshrl.u32 %v2299, 7
        %v2301 = vsub.s32 %v2298, %v2300
        %v2302 = vrot.slane %v2288, %v2301
        %v2303 = vcombine.high %v2295, %v2295
        %v2304 = vcombine.high %v2302, %v2302
        %v2305 = vcombine.high %v2033, %v2033
        %v2307 = vunpack.c.l.s4 1983009808
        %v2308 = vunpack.c.0.s8 %v2307
        %v2309 = vlaneseq
        %v2310 = vshrl.u32 %v2309, 7
        %v2311 = vsub.s32 %v2308, %v2310
        %v2312 = vrot.slane %v2033, %v2311
        %v2314 = vunpack.c.l.s4 1983009808
        %v2315 = vunpack.c.0.s8 %v2314
        %v2316 = vlaneseq
        %v2317 = vshrl.u32 %v2316, 7
        %v2318 = vsub.s32 %v2315, %v2317
        %v2319 = vrot.slane %v2305, %v2318
        %v2320 = vcombine.high %v2312, %v2312
        %v2321 = vcombine.high %v2319, %v2319
        %v2322 = vcombine.high %v2034, %v2034
        %v2324 = vunpack.c.l.s4 1983009808
        %v2325 = vunpack.c.0.s8 %v2324
        %v2326 = vlaneseq
        %v2327 = vshrl.u32 %v2326, 7
        %v2328 = vsub.s32 %v2325, %v2327
        %v2329 = vrot.slane %v2034, %v2328
        %v2331 = vunpack.c.l.s4 1983009808
        %v2332 = vunpack.c.0.s8 %v2331
        %v2333 = vlaneseq
        %v2334 = vshrl.u32 %v2333, 7
        %v2335 = vsub.s32 %v2332, %v2334
        %v2336 = vrot.slane %v2322, %v2335
        %v2337 = vcombine.high %v2329, %v2329
        %v2338 = vcombine.high %v2336, %v2336
        %v2339 = vcombine.high %v2035, %v2035
        %v2341 = vunpack.c.l.s4 1983009808
        %v2342 = vunpack.c.0.s8 %v2341
        %v2343 = vlaneseq
        %v2344 = vshrl.u32 %v2343, 7
        %v2345 = vsub.s32 %v2342, %v2344
        %v2346 = vrot.slane %v2035, %v2345
        %v2348 = vunpack.c.l.s4 1983009808
        %v2349 = vunpack.c.0.s8 %v2348
        %v2350 = vlaneseq
        %v2351 = vshrl.u32 %v2350, 7
        %v2352 = vsub.s32 %v2349, %v2351
        %v2353 = vrot.slane %v2339, %v2352
        %v2354 = vcombine.high %v2346, %v2346
        %v2355 = vcombine.high %v2353, %v2353
        %v2356 = vcombine.high %v2036, %v2036
        %v2358 = vunpack.c.l.s4 1983009808
        %v2359 = vunpack.c.0.s8 %v2358
        %v2360 = vlaneseq
        %v2361 = vshrl.u32 %v2360, 7
        %v2362 = vsub.s32 %v2359, %v2361
        %v2363 = vrot.slane %v2036, %v2362
        %v2365 = vunpack.c.l.s4 1983009808
        %v2366 = vunpack.c.0.s8 %v2365
        %v2367 = vlaneseq
        %v2368 = vshrl.u32 %v2367, 7
        %v2369 = vsub.s32 %v2366, %v2368
        %v2370 = vrot.slane %v2356, %v2369
        %v2371 = vcombine.high %v2363, %v2363
        %v2372 = vcombine.high %v2370, %v2370
        %v2373 = vcombine.high %v2037, %v2037
        %v2375 = vunpack.c.l.s4 1983009808
        %v2376 = vunpack.c.0.s8 %v2375
        %v2377 = vlaneseq
        %v2378 = vshrl.u32 %v2377, 7
        %v2379 = vsub.s32 %v2376, %v2378
        %v2380 = vrot.slane %v2037, %v2379
        %v2382 = vunpack.c.l.s4 1983009808
        %v2383 = vunpack.c.0.s8 %v2382
        %v2384 = vlaneseq
        %v2385 = vshrl.u32 %v2384, 7
        %v2386 = vsub.s32 %v2383, %v2385
        %v2387 = vrot.slane %v2373, %v2386
        %v2388 = vcombine.high %v2380, %v2380
        %v2389 = vcombine.high %v2387, %v2387
        %v2390 = vcombine.high %v2038, %v2038
        %v2392 = vunpack.c.l.s4 1983009808
        %v2393 = vunpack.c.0.s8 %v2392
        %v2394 = vlaneseq
        %v2395 = vshrl.u32 %v2394, 7
        %v2396 = vsub.s32 %v2393, %v2395
        %v2397 = vrot.slane %v2038, %v2396
        %v2399 = vunpack.c.l.s4 1983009808
        %v2400 = vunpack.c.0.s8 %v2399
        %v2401 = vlaneseq
        %v2402 = vshrl.u32 %v2401, 7
        %v2403 = vsub.s32 %v2400, %v2402
        %v2404 = vrot.slane %v2390, %v2403
        %v2405 = vcombine.high %v2397, %v2397
        %v2406 = vcombine.high %v2404, %v2404
        %v2407 = vcombine.high %v2039, %v2039
        %v2409 = vunpack.c.l.s4 1983009808
        %v2410 = vunpack.c.0.s8 %v2409
        %v2411 = vlaneseq
        %v2412 = vshrl.u32 %v2411, 7
        %v2413 = vsub.s32 %v2410, %v2412
        %v2414 = vrot.slane %v2039, %v2413
        %v2416 = vunpack.c.l.s4 1983009808
        %v2417 = vunpack.c.0.s8 %v2416
        %v2418 = vlaneseq
        %v2419 = vshrl.u32 %v2418, 7
        %v2420 = vsub.s32 %v2417, %v2419
        %v2421 = vrot.slane %v2407, %v2420
        %v2422 = vcombine.high %v2414, %v2414
        %v2423 = vcombine.high %v2421, %v2421
        %v2424 = vcombine.high %v2040, %v2040
        %v2426 = vunpack.c.l.s4 1983009808
        %v2427 = vunpack.c.0.s8 %v2426
        %v2428 = vlaneseq
        %v2429 = vshrl.u32 %v2428, 7
        %v2430 = vsub.s32 %v2427, %v2429
        %v2431 = vrot.slane %v2040, %v2430
        %v2433 = vunpack.c.l.s4 1983009808
        %v2434 = vunpack.c.0.s8 %v2433
        %v2435 = vlaneseq
        %v2436 = vshrl.u32 %v2435, 7
        %v2437 = vsub.s32 %v2434, %v2436
        %v2438 = vrot.slane %v2424, %v2437
        %v2439 = vcombine.high %v2431, %v2431
        %v2440 = vcombine.high %v2438, %v2438
        %v2441 = vcombine.high %v2041, %v2041
        %v2443 = vunpack.c.l.s4 1983009808
        %v2444 = vunpack.c.0.s8 %v2443
        %v2445 = vlaneseq
        %v2446 = vshrl.u32 %v2445, 7
        %v2447 = vsub.s32 %v2444, %v2446
        %v2448 = vrot.slane %v2041, %v2447
        %v2450 = vunpack.c.l.s4 1983009808
        %v2451 = vunpack.c.0.s8 %v2450
        %v2452 = vlaneseq
        %v2453 = vshrl.u32 %v2452, 7
        %v2454 = vsub.s32 %v2451, %v2453
        %v2455 = vrot.slane %v2441, %v2454
        %v2456 = vcombine.high %v2448, %v2448
        %v2457 = vcombine.high %v2455, %v2455
        %v2458 = vcombine.high %v2042, %v2042
        %v2460 = vunpack.c.l.s4 1983009808
        %v2461 = vunpack.c.0.s8 %v2460
        %v2462 = vlaneseq
        %v2463 = vshrl.u32 %v2462, 7
        %v2464 = vsub.s32 %v2461, %v2463
        %v2465 = vrot.slane %v2042, %v2464
        %v2467 = vunpack.c.l.s4 1983009808
        %v2468 = vunpack.c.0.s8 %v2467
        %v2469 = vlaneseq
        %v2470 = vshrl.u32 %v2469, 7
        %v2471 = vsub.s32 %v2468, %v2470
        %v2472 = vrot.slane %v2458, %v2471
        %v2473 = vcombine.high %v2465, %v2465
        %v2474 = vcombine.high %v2472, %v2472
        %vm2571 = vcmask 975872
        %v2572 = vsel %vm2571, %v2074, -inf
        %v2573 = vrot.slane %v2572, 4
        %v2574 = vmax.f32 %v2572, %v2573
        %v2575 = vrot.slane %v2574, 2
        %v2576 = vmax.f32 %v2574, %v2575
        %v2577 = vrot.slane %v2576, 1
        %v2578 = vmax.f32 %v2576, %v2577
        %v2579 = vsel %vm2571, %v2082, -inf
        %v2580 = vrot.slane %v2579, 4
        %v2581 = vmax.f32 %v2579, %v2580
        %v2582 = vrot.slane %v2581, 2
        %v2583 = vmax.f32 %v2581, %v2582
        %v2584 = vrot.slane %v2583, 1
        %v2585 = vmax.f32 %v2583, %v2584
        %v2586 = vsel %vm2571, %v2081, -inf
        %v2587 = vrot.slane %v2586, 4
        %v2588 = vmax.f32 %v2586, %v2587
        %v2589 = vrot.slane %v2588, 2
        %v2590 = vmax.f32 %v2588, %v2589
        %v2591 = vrot.slane %v2590, 1
        %v2592 = vmax.f32 %v2590, %v2591
        %v2593 = vsel %vm2571, %v2083, -inf
        %v2594 = vrot.slane %v2593, 4
        %v2595 = vmax.f32 %v2593, %v2594
        %v2596 = vrot.slane %v2595, 2
        %v2597 = vmax.f32 %v2595, %v2596
        %v2598 = vrot.slane %v2597, 1
        %v2599 = vmax.f32 %v2597, %v2598
        %v2600 = vsel %vm2571, %v2091, -inf
        %v2601 = vrot.slane %v2600, 4
        %v2602 = vmax.f32 %v2600, %v2601
        %v2603 = vrot.slane %v2602, 2
        %v2604 = vmax.f32 %v2602, %v2603
        %v2605 = vrot.slane %v2604, 1
        %v2606 = vmax.f32 %v2604, %v2605
        %v2607 = vsel %vm2571, %v2099, -inf
        %v2608 = vrot.slane %v2607, 4
        %v2609 = vmax.f32 %v2607, %v2608
        %v2610 = vrot.slane %v2609, 2
        %v2611 = vmax.f32 %v2609, %v2610
        %v2612 = vrot.slane %v2611, 1
        %v2613 = vmax.f32 %v2611, %v2612
        %v2614 = vsel %vm2571, %v2098, -inf
        %v2615 = vrot.slane %v2614, 4
        %v2616 = vmax.f32 %v2614, %v2615
        %v2617 = vrot.slane %v2616, 2
        %v2618 = vmax.f32 %v2616, %v2617
        %v2619 = vrot.slane %v2618, 1
        %v2620 = vmax.f32 %v2618, %v2619
        %v2621 = vsel %vm2571, %v2100, -inf
        %v2622 = vrot.slane %v2621, 4
        %v2623 = vmax.f32 %v2621, %v2622
        %v2624 = vrot.slane %v2623, 2
        %v2625 = vmax.f32 %v2623, %v2624
        %v2626 = vrot.slane %v2625, 1
        %v2627 = vmax.f32 %v2625, %v2626
        %v2628 = vsel %vm2571, %v2108, -inf
        %v2629 = vrot.slane %v2628, 4
        %v2630 = vmax.f32 %v2628, %v2629
        %v2631 = vrot.slane %v2630, 2
        %v2632 = vmax.f32 %v2630, %v2631
        %v2633 = vrot.slane %v2632, 1
        %v2634 = vmax.f32 %v2632, %v2633
        %v2635 = vsel %vm2571, %v2116, -inf
        %v2636 = vrot.slane %v2635, 4
        %v2637 = vmax.f32 %v2635, %v2636
        %v2638 = vrot.slane %v2637, 2
        %v2639 = vmax.f32 %v2637, %v2638
        %v2640 = vrot.slane %v2639, 1
        %v2641 = vmax.f32 %v2639, %v2640
        %v2642 = vsel %vm2571, %v2115, -inf
        %v2643 = vrot.slane %v2642, 4
        %v2644 = vmax.f32 %v2642, %v2643
        %v2645 = vrot.slane %v2644, 2
        %v2646 = vmax.f32 %v2644, %v2645
        %v2647 = vrot.slane %v2646, 1
        %v2648 = vmax.f32 %v2646, %v2647
        %v2649 = vsel %vm2571, %v2117, -inf
        %v2650 = vrot.slane %v2649, 4
        %v2651 = vmax.f32 %v2649, %v2650
        %v2652 = vrot.slane %v2651, 2
        %v2653 = vmax.f32 %v2651, %v2652
        %v2654 = vrot.slane %v2653, 1
        %v2655 = vmax.f32 %v2653, %v2654
        %v2656 = vsel %vm2571, %v2125, -inf
        %v2657 = vrot.slane %v2656, 4
        %v2658 = vmax.f32 %v2656, %v2657
        %v2659 = vrot.slane %v2658, 2
        %v2660 = vmax.f32 %v2658, %v2659
        %v2661 = vrot.slane %v2660, 1
        %v2662 = vmax.f32 %v2660, %v2661
        %v2663 = vsel %vm2571, %v2133, -inf
        %v2664 = vrot.slane %v2663, 4
        %v2665 = vmax.f32 %v2663, %v2664
        %v2666 = vrot.slane %v2665, 2
        %v2667 = vmax.f32 %v2665, %v2666
        %v2668 = vrot.slane %v2667, 1
        %v2669 = vmax.f32 %v2667, %v2668
        %v2670 = vsel %vm2571, %v2132, -inf
        %v2671 = vrot.slane %v2670, 4
        %v2672 = vmax.f32 %v2670, %v2671
        %v2673 = vrot.slane %v2672, 2
        %v2674 = vmax.f32 %v2672, %v2673
        %v2675 = vrot.slane %v2674, 1
        %v2676 = vmax.f32 %v2674, %v2675
        %v2677 = vsel %vm2571, %v2134, -inf
        %v2678 = vrot.slane %v2677, 4
        %v2679 = vmax.f32 %v2677, %v2678
        %v2680 = vrot.slane %v2679, 2
        %v2681 = vmax.f32 %v2679, %v2680
        %v2682 = vrot.slane %v2681, 1
        %v2683 = vmax.f32 %v2681, %v2682
        %v2684 = vsel %vm2571, %v2142, -inf
        %v2685 = vrot.slane %v2684, 4
        %v2686 = vmax.f32 %v2684, %v2685
        %v2687 = vrot.slane %v2686, 2
        %v2688 = vmax.f32 %v2686, %v2687
        %v2689 = vrot.slane %v2688, 1
        %v2690 = vmax.f32 %v2688, %v2689
        %v2691 = vsel %vm2571, %v2150, -inf
        %v2692 = vrot.slane %v2691, 4
        %v2693 = vmax.f32 %v2691, %v2692
        %v2694 = vrot.slane %v2693, 2
        %v2695 = vmax.f32 %v2693, %v2694
        %v2696 = vrot.slane %v2695, 1
        %v2697 = vmax.f32 %v2695, %v2696
        %v2698 = vsel %vm2571, %v2149, -inf
        %v2699 = vrot.slane %v2698, 4
        %v2700 = vmax.f32 %v2698, %v2699
        %v2701 = vrot.slane %v2700, 2
        %v2702 = vmax.f32 %v2700, %v2701
        %v2703 = vrot.slane %v2702, 1
        %v2704 = vmax.f32 %v2702, %v2703
        %v2705 = vsel %vm2571, %v2151, -inf
        %v2706 = vrot.slane %v2705, 4
        %v2707 = vmax.f32 %v2705, %v2706
        %v2708 = vrot.slane %v2707, 2
        %v2709 = vmax.f32 %v2707, %v2708
        %v2710 = vrot.slane %v2709, 1
        %v2711 = vmax.f32 %v2709, %v2710
        %v2712 = vsel %vm2571, %v2159, -inf
        %v2713 = vrot.slane %v2712, 4
        %v2714 = vmax.f32 %v2712, %v2713
        %v2715 = vrot.slane %v2714, 2
        %v2716 = vmax.f32 %v2714, %v2715
        %v2717 = vrot.slane %v2716, 1
        %v2718 = vmax.f32 %v2716, %v2717
        %v2719 = vsel %vm2571, %v2167, -inf
        %v2720 = vrot.slane %v2719, 4
        %v2721 = vmax.f32 %v2719, %v2720
        %v2722 = vrot.slane %v2721, 2
        %v2723 = vmax.f32 %v2721, %v2722
        %v2724 = vrot.slane %v2723, 1
        %v2725 = vmax.f32 %v2723, %v2724
        %v2726 = vsel %vm2571, %v2166, -inf
        %v2727 = vrot.slane %v2726, 4
        %v2728 = vmax.f32 %v2726, %v2727
        %v2729 = vrot.slane %v2728, 2
        %v2730 = vmax.f32 %v2728, %v2729
        %v2731 = vrot.slane %v2730, 1
        %v2732 = vmax.f32 %v2730, %v2731
        %v2733 = vsel %vm2571, %v2168, -inf
        %v2734 = vrot.slane %v2733, 4
        %v2735 = vmax.f32 %v2733, %v2734
        %v2736 = vrot.slane %v2735, 2
        %v2737 = vmax.f32 %v2735, %v2736
        %v2738 = vrot.slane %v2737, 1
        %v2739 = vmax.f32 %v2737, %v2738
        %v2740 = vsel %vm2571, %v2176, -inf
        %v2741 = vrot.slane %v2740, 4
        %v2742 = vmax.f32 %v2740, %v2741
        %v2743 = vrot.slane %v2742, 2
        %v2744 = vmax.f32 %v2742, %v2743
        %v2745 = vrot.slane %v2744, 1
        %v2746 = vmax.f32 %v2744, %v2745
        %v2747 = vsel %vm2571, %v2184, -inf
        %v2748 = vrot.slane %v2747, 4
        %v2749 = vmax.f32 %v2747, %v2748
        %v2750 = vrot.slane %v2749, 2
        %v2751 = vmax.f32 %v2749, %v2750
        %v2752 = vrot.slane %v2751, 1
        %v2753 = vmax.f32 %v2751, %v2752
        %v2754 = vsel %vm2571, %v2183, -inf
        %v2755 = vrot.slane %v2754, 4
        %v2756 = vmax.f32 %v2754, %v2755
        %v2757 = vrot.slane %v2756, 2
        %v2758 = vmax.f32 %v2756, %v2757
        %v2759 = vrot.slane %v2758, 1
        %v2760 = vmax.f32 %v2758, %v2759
        %v2761 = vsel %vm2571, %v2185, -inf
        %v2762 = vrot.slane %v2761, 4
        %v2763 = vmax.f32 %v2761, %v2762
        %v2764 = vrot.slane %v2763, 2
        %v2765 = vmax.f32 %v2763, %v2764
        %v2766 = vrot.slane %v2765, 1
        %v2767 = vmax.f32 %v2765, %v2766
        %v2768 = vsel %vm2571, %v2193, -inf
        %v2769 = vrot.slane %v2768, 4
        %v2770 = vmax.f32 %v2768, %v2769
        %v2771 = vrot.slane %v2770, 2
        %v2772 = vmax.f32 %v2770, %v2771
        %v2773 = vrot.slane %v2772, 1
        %v2774 = vmax.f32 %v2772, %v2773
        %v2775 = vsel %vm2571, %v2201, -inf
        %v2776 = vrot.slane %v2775, 4
        %v2777 = vmax.f32 %v2775, %v2776
        %v2778 = vrot.slane %v2777, 2
        %v2779 = vmax.f32 %v2777, %v2778
        %v2780 = vrot.slane %v2779, 1
        %v2781 = vmax.f32 %v2779, %v2780
        %v2782 = vsel %vm2571, %v2200, -inf
        %v2783 = vrot.slane %v2782, 4
        %v2784 = vmax.f32 %v2782, %v2783
        %v2785 = vrot.slane %v2784, 2
        %v2786 = vmax.f32 %v2784, %v2785
        %v2787 = vrot.slane %v2786, 1
        %v2788 = vmax.f32 %v2786, %v2787
        %v2789 = vsel %vm2571, %v2202, -inf
        %v2790 = vrot.slane %v2789, 4
        %v2791 = vmax.f32 %v2789, %v2790
        %v2792 = vrot.slane %v2791, 2
        %v2793 = vmax.f32 %v2791, %v2792
        %v2794 = vrot.slane %v2793, 1
        %v2795 = vmax.f32 %v2793, %v2794
        %v2796 = vsel %vm2571, %v2210, -inf
        %v2797 = vrot.slane %v2796, 4
        %v2798 = vmax.f32 %v2796, %v2797
        %v2799 = vrot.slane %v2798, 2
        %v2800 = vmax.f32 %v2798, %v2799
        %v2801 = vrot.slane %v2800, 1
        %v2802 = vmax.f32 %v2800, %v2801
        %v2803 = vsel %vm2571, %v2218, -inf
        %v2804 = vrot.slane %v2803, 4
        %v2805 = vmax.f32 %v2803, %v2804
        %v2806 = vrot.slane %v2805, 2
        %v2807 = vmax.f32 %v2805, %v2806
        %v2808 = vrot.slane %v2807, 1
        %v2809 = vmax.f32 %v2807, %v2808
        %v2810 = vsel %vm2571, %v2217, -inf
        %v2811 = vrot.slane %v2810, 4
        %v2812 = vmax.f32 %v2810, %v2811
        %v2813 = vrot.slane %v2812, 2
        %v2814 = vmax.f32 %v2812, %v2813
        %v2815 = vrot.slane %v2814, 1
        %v2816 = vmax.f32 %v2814, %v2815
        %v2817 = vsel %vm2571, %v2219, -inf
        %v2818 = vrot.slane %v2817, 4
        %v2819 = vmax.f32 %v2817, %v2818
        %v2820 = vrot.slane %v2819, 2
        %v2821 = vmax.f32 %v2819, %v2820
        %v2822 = vrot.slane %v2821, 1
        %v2823 = vmax.f32 %v2821, %v2822
        %v2824 = vsel %vm2571, %v2227, -inf
        %v2825 = vrot.slane %v2824, 4
        %v2826 = vmax.f32 %v2824, %v2825
        %v2827 = vrot.slane %v2826, 2
        %v2828 = vmax.f32 %v2826, %v2827
        %v2829 = vrot.slane %v2828, 1
        %v2830 = vmax.f32 %v2828, %v2829
        %v2831 = vsel %vm2571, %v2235, -inf
        %v2832 = vrot.slane %v2831, 4
        %v2833 = vmax.f32 %v2831, %v2832
        %v2834 = vrot.slane %v2833, 2
        %v2835 = vmax.f32 %v2833, %v2834
        %v2836 = vrot.slane %v2835, 1
        %v2837 = vmax.f32 %v2835, %v2836
        %v2838 = vsel %vm2571, %v2234, -inf
        %v2839 = vrot.slane %v2838, 4
        %v2840 = vmax.f32 %v2838, %v2839
        %v2841 = vrot.slane %v2840, 2
        %v2842 = vmax.f32 %v2840, %v2841
        %v2843 = vrot.slane %v2842, 1
        %v2844 = vmax.f32 %v2842, %v2843
        %v2845 = vsel %vm2571, %v2236, -inf
        %v2846 = vrot.slane %v2845, 4
        %v2847 = vmax.f32 %v2845, %v2846
        %v2848 = vrot.slane %v2847, 2
        %v2849 = vmax.f32 %v2847, %v2848
        %v2850 = vrot.slane %v2849, 1
        %v2851 = vmax.f32 %v2849, %v2850
        %v2852 = vsel %vm2571, %v2244, -inf
        %v2853 = vrot.slane %v2852, 4
        %v2854 = vmax.f32 %v2852, %v2853
        %v2855 = vrot.slane %v2854, 2
        %v2856 = vmax.f32 %v2854, %v2855
        %v2857 = vrot.slane %v2856, 1
        %v2858 = vmax.f32 %v2856, %v2857
        %v2859 = vsel %vm2571, %v2252, -inf
        %v2860 = vrot.slane %v2859, 4
        %v2861 = vmax.f32 %v2859, %v2860
        %v2862 = vrot.slane %v2861, 2
        %v2863 = vmax.f32 %v2861, %v2862
        %v2864 = vrot.slane %v2863, 1
        %v2865 = vmax.f32 %v2863, %v2864
        %v2866 = vsel %vm2571, %v2251, -inf
        %v2867 = vrot.slane %v2866, 4
        %v2868 = vmax.f32 %v2866, %v2867
        %v2869 = vrot.slane %v2868, 2
        %v2870 = vmax.f32 %v2868, %v2869
        %v2871 = vrot.slane %v2870, 1
        %v2872 = vmax.f32 %v2870, %v2871
        %v2873 = vsel %vm2571, %v2253, -inf
        %v2874 = vrot.slane %v2873, 4
        %v2875 = vmax.f32 %v2873, %v2874
        %v2876 = vrot.slane %v2875, 2
        %v2877 = vmax.f32 %v2875, %v2876
        %v2878 = vrot.slane %v2877, 1
        %v2879 = vmax.f32 %v2877, %v2878
        %v2880 = vsel %vm2571, %v2261, -inf
        %v2881 = vrot.slane %v2880, 4
        %v2882 = vmax.f32 %v2880, %v2881
        %v2883 = vrot.slane %v2882, 2
        %v2884 = vmax.f32 %v2882, %v2883
        %v2885 = vrot.slane %v2884, 1
        %v2886 = vmax.f32 %v2884, %v2885
        %v2887 = vsel %vm2571, %v2269, -inf
        %v2888 = vrot.slane %v2887, 4
        %v2889 = vmax.f32 %v2887, %v2888
        %v2890 = vrot.slane %v2889, 2
        %v2891 = vmax.f32 %v2889, %v2890
        %v2892 = vrot.slane %v2891, 1
        %v2893 = vmax.f32 %v2891, %v2892
        %v2894 = vsel %vm2571, %v2268, -inf
        %v2895 = vrot.slane %v2894, 4
        %v2896 = vmax.f32 %v2894, %v2895
        %v2897 = vrot.slane %v2896, 2
        %v2898 = vmax.f32 %v2896, %v2897
        %v2899 = vrot.slane %v2898, 1
        %v2900 = vmax.f32 %v2898, %v2899
        %v2901 = vsel %vm2571, %v2270, -inf
        %v2902 = vrot.slane %v2901, 4
        %v2903 = vmax.f32 %v2901, %v2902
        %v2904 = vrot.slane %v2903, 2
        %v2905 = vmax.f32 %v2903, %v2904
        %v2906 = vrot.slane %v2905, 1
        %v2907 = vmax.f32 %v2905, %v2906
        %v2908 = vsel %vm2571, %v2278, -inf
        %v2909 = vrot.slane %v2908, 4
        %v2910 = vmax.f32 %v2908, %v2909
        %v2911 = vrot.slane %v2910, 2
        %v2912 = vmax.f32 %v2910, %v2911
        %v2913 = vrot.slane %v2912, 1
        %v2914 = vmax.f32 %v2912, %v2913
        %v2915 = vsel %vm2571, %v2286, -inf
        %v2916 = vrot.slane %v2915, 4
        %v2917 = vmax.f32 %v2915, %v2916
        %v2918 = vrot.slane %v2917, 2
        %v2919 = vmax.f32 %v2917, %v2918
        %v2920 = vrot.slane %v2919, 1
        %v2921 = vmax.f32 %v2919, %v2920
        %v2922 = vsel %vm2571, %v2285, -inf
        %v2923 = vrot.slane %v2922, 4
        %v2924 = vmax.f32 %v2922, %v2923
        %v2925 = vrot.slane %v2924, 2
        %v2926 = vmax.f32 %v2924, %v2925
        %v2927 = vrot.slane %v2926, 1
        %v2928 = vmax.f32 %v2926, %v2927
        %v2929 = vsel %vm2571, %v2287, -inf
        %v2930 = vrot.slane %v2929, 4
        %v2931 = vmax.f32 %v2929, %v2930
        %v2932 = vrot.slane %v2931, 2
        %v2933 = vmax.f32 %v2931, %v2932
        %v2934 = vrot.slane %v2933, 1
        %v2935 = vmax.f32 %v2933, %v2934
        %v2936 = vsel %vm2571, %v2295, -inf
        %v2937 = vrot.slane %v2936, 4
        %v2938 = vmax.f32 %v2936, %v2937
        %v2939 = vrot.slane %v2938, 2
        %v2940 = vmax.f32 %v2938, %v2939
        %v2941 = vrot.slane %v2940, 1
        %v2942 = vmax.f32 %v2940, %v2941
        %v2943 = vsel %vm2571, %v2303, -inf
        %v2944 = vrot.slane %v2943, 4
        %v2945 = vmax.f32 %v2943, %v2944
        %v2946 = vrot.slane %v2945, 2
        %v2947 = vmax.f32 %v2945, %v2946
        %v2948 = vrot.slane %v2947, 1
        %v2949 = vmax.f32 %v2947, %v2948
        %v2950 = vsel %vm2571, %v2302, -inf
        %v2951 = vrot.slane %v2950, 4
        %v2952 = vmax.f32 %v2950, %v2951
        %v2953 = vrot.slane %v2952, 2
        %v2954 = vmax.f32 %v2952, %v2953
        %v2955 = vrot.slane %v2954, 1
        %v2956 = vmax.f32 %v2954, %v2955
        %v2957 = vsel %vm2571, %v2304, -inf
        %v2958 = vrot.slane %v2957, 4
        %v2959 = vmax.f32 %v2957, %v2958
        %v2960 = vrot.slane %v2959, 2
        %v2961 = vmax.f32 %v2959, %v2960
        %v2962 = vrot.slane %v2961, 1
        %v2963 = vmax.f32 %v2961, %v2962
        %v2964 = vsel %vm2571, %v2312, -inf
        %v2965 = vrot.slane %v2964, 4
        %v2966 = vmax.f32 %v2964, %v2965
        %v2967 = vrot.slane %v2966, 2
        %v2968 = vmax.f32 %v2966, %v2967
        %v2969 = vrot.slane %v2968, 1
        %v2970 = vmax.f32 %v2968, %v2969
        %v2971 = vsel %vm2571, %v2320, -inf
        %v2972 = vrot.slane %v2971, 4
        %v2973 = vmax.f32 %v2971, %v2972
        %v2974 = vrot.slane %v2973, 2
        %v2975 = vmax.f32 %v2973, %v2974
        %v2976 = vrot.slane %v2975, 1
        %v2977 = vmax.f32 %v2975, %v2976
        %v2978 = vsel %vm2571, %v2319, -inf
        %v2979 = vrot.slane %v2978, 4
        %v2980 = vmax.f32 %v2978, %v2979
        %v2981 = vrot.slane %v2980, 2
        %v2982 = vmax.f32 %v2980, %v2981
        %v2983 = vrot.slane %v2982, 1
        %v2984 = vmax.f32 %v2982, %v2983
        %v2985 = vsel %vm2571, %v2321, -inf
        %v2986 = vrot.slane %v2985, 4
        %v2987 = vmax.f32 %v2985, %v2986
        %v2988 = vrot.slane %v2987, 2
        %v2989 = vmax.f32 %v2987, %v2988
        %v2990 = vrot.slane %v2989, 1
        %v2991 = vmax.f32 %v2989, %v2990
        %v2992 = vsel %vm2571, %v2329, -inf
        %v2993 = vrot.slane %v2992, 4
        %v2994 = vmax.f32 %v2992, %v2993
        %v2995 = vrot.slane %v2994, 2
        %v2996 = vmax.f32 %v2994, %v2995
        %v2997 = vrot.slane %v2996, 1
        %v2998 = vmax.f32 %v2996, %v2997
        %v2999 = vsel %vm2571, %v2337, -inf
        %v3000 = vrot.slane %v2999, 4
        %v3001 = vmax.f32 %v2999, %v3000
        %v3002 = vrot.slane %v3001, 2
        %v3003 = vmax.f32 %v3001, %v3002
        %v3004 = vrot.slane %v3003, 1
        %v3005 = vmax.f32 %v3003, %v3004
        %v3006 = vsel %vm2571, %v2336, -inf
        %v3007 = vrot.slane %v3006, 4
        %v3008 = vmax.f32 %v3006, %v3007
        %v3009 = vrot.slane %v3008, 2
        %v3010 = vmax.f32 %v3008, %v3009
        %v3011 = vrot.slane %v3010, 1
        %v3012 = vmax.f32 %v3010, %v3011
        %v3013 = vsel %vm2571, %v2338, -inf
        %v3014 = vrot.slane %v3013, 4
        %v3015 = vmax.f32 %v3013, %v3014
        %v3016 = vrot.slane %v3015, 2
        %v3017 = vmax.f32 %v3015, %v3016
        %v3018 = vrot.slane %v3017, 1
        %v3019 = vmax.f32 %v3017, %v3018
        %v3020 = vsel %vm2571, %v2346, -inf
        %v3021 = vrot.slane %v3020, 4
        %v3022 = vmax.f32 %v3020, %v3021
        %v3023 = vrot.slane %v3022, 2
        %v3024 = vmax.f32 %v3022, %v3023
        %v3025 = vrot.slane %v3024, 1
        %v3026 = vmax.f32 %v3024, %v3025
        %v3027 = vsel %vm2571, %v2354, -inf
        %v3028 = vrot.slane %v3027, 4
        %v3029 = vmax.f32 %v3027, %v3028
        %v3030 = vrot.slane %v3029, 2
        %v3031 = vmax.f32 %v3029, %v3030
        %v3032 = vrot.slane %v3031, 1
        %v3033 = vmax.f32 %v3031, %v3032
        %v3034 = vsel %vm2571, %v2353, -inf
        %v3035 = vrot.slane %v3034, 4
        %v3036 = vmax.f32 %v3034, %v3035
        %v3037 = vrot.slane %v3036, 2
        %v3038 = vmax.f32 %v3036, %v3037
        %v3039 = vrot.slane %v3038, 1
        %v3040 = vmax.f32 %v3038, %v3039
        %v3041 = vsel %vm2571, %v2355, -inf
        %v3042 = vrot.slane %v3041, 4
        %v3043 = vmax.f32 %v3041, %v3042
        %v3044 = vrot.slane %v3043, 2
        %v3045 = vmax.f32 %v3043, %v3044
        %v3046 = vrot.slane %v3045, 1
        %v3047 = vmax.f32 %v3045, %v3046
        %v3048 = vsel %vm2571, %v2363, -inf
        %v3049 = vrot.slane %v3048, 4
        %v3050 = vmax.f32 %v3048, %v3049
        %v3051 = vrot.slane %v3050, 2
        %v3052 = vmax.f32 %v3050, %v3051
        %v3053 = vrot.slane %v3052, 1
        %v3054 = vmax.f32 %v3052, %v3053
        %v3055 = vsel %vm2571, %v2371, -inf
        %v3056 = vrot.slane %v3055, 4
        %v3057 = vmax.f32 %v3055, %v3056
        %v3058 = vrot.slane %v3057, 2
        %v3059 = vmax.f32 %v3057, %v3058
        %v3060 = vrot.slane %v3059, 1
        %v3061 = vmax.f32 %v3059, %v3060
        %v3062 = vsel %vm2571, %v2370, -inf
        %v3063 = vrot.slane %v3062, 4
        %v3064 = vmax.f32 %v3062, %v3063
        %v3065 = vrot.slane %v3064, 2
        %v3066 = vmax.f32 %v3064, %v3065
        %v3067 = vrot.slane %v3066, 1
        %v3068 = vmax.f32 %v3066, %v3067
        %v3069 = vsel %vm2571, %v2372, -inf
        %v3070 = vrot.slane %v3069, 4
        %v3071 = vmax.f32 %v3069, %v3070
        %v3072 = vrot.slane %v3071, 2
        %v3073 = vmax.f32 %v3071, %v3072
        %v3074 = vrot.slane %v3073, 1
        %v3075 = vmax.f32 %v3073, %v3074
        %v3076 = vsel %vm2571, %v2380, -inf
        %v3077 = vrot.slane %v3076, 4
        %v3078 = vmax.f32 %v3076, %v3077
        %v3079 = vrot.slane %v3078, 2
        %v3080 = vmax.f32 %v3078, %v3079
        %v3081 = vrot.slane %v3080, 1
        %v3082 = vmax.f32 %v3080, %v3081
        %v3083 = vsel %vm2571, %v2388, -inf
        %v3084 = vrot.slane %v3083, 4
        %v3085 = vmax.f32 %v3083, %v3084
        %v3086 = vrot.slane %v3085, 2
        %v3087 = vmax.f32 %v3085, %v3086
        %v3088 = vrot.slane %v3087, 1
        %v3089 = vmax.f32 %v3087, %v3088
        %v3090 = vsel %vm2571, %v2387, -inf
        %v3091 = vrot.slane %v3090, 4
        %v3092 = vmax.f32 %v3090, %v3091
        %v3093 = vrot.slane %v3092, 2
        %v3094 = vmax.f32 %v3092, %v3093
        %v3095 = vrot.slane %v3094, 1
        %v3096 = vmax.f32 %v3094, %v3095
        %v3097 = vsel %vm2571, %v2389, -inf
        %v3098 = vrot.slane %v3097, 4
        %v3099 = vmax.f32 %v3097, %v3098
        %v3100 = vrot.slane %v3099, 2
        %v3101 = vmax.f32 %v3099, %v3100
        %v3102 = vrot.slane %v3101, 1
        %v3103 = vmax.f32 %v3101, %v3102
        %v3104 = vsel %vm2571, %v2397, -inf
        %v3105 = vrot.slane %v3104, 4
        %v3106 = vmax.f32 %v3104, %v3105
        %v3107 = vrot.slane %v3106, 2
        %v3108 = vmax.f32 %v3106, %v3107
        %v3109 = vrot.slane %v3108, 1
        %v3110 = vmax.f32 %v3108, %v3109
        %v3111 = vsel %vm2571, %v2405, -inf
        %v3112 = vrot.slane %v3111, 4
        %v3113 = vmax.f32 %v3111, %v3112
        %v3114 = vrot.slane %v3113, 2
        %v3115 = vmax.f32 %v3113, %v3114
        %v3116 = vrot.slane %v3115, 1
        %v3117 = vmax.f32 %v3115, %v3116
        %v3118 = vsel %vm2571, %v2404, -inf
        %v3119 = vrot.slane %v3118, 4
        %v3120 = vmax.f32 %v3118, %v3119
        %v3121 = vrot.slane %v3120, 2
        %v3122 = vmax.f32 %v3120, %v3121
        %v3123 = vrot.slane %v3122, 1
        %v3124 = vmax.f32 %v3122, %v3123
        %v3125 = vsel %vm2571, %v2406, -inf
        %v3126 = vrot.slane %v3125, 4
        %v3127 = vmax.f32 %v3125, %v3126
        %v3128 = vrot.slane %v3127, 2
        %v3129 = vmax.f32 %v3127, %v3128
        %v3130 = vrot.slane %v3129, 1
        %v3131 = vmax.f32 %v3129, %v3130
        %v3132 = vsel %vm2571, %v2414, -inf
        %v3133 = vrot.slane %v3132, 4
        %v3134 = vmax.f32 %v3132, %v3133
        %v3135 = vrot.slane %v3134, 2
        %v3136 = vmax.f32 %v3134, %v3135
        %v3137 = vrot.slane %v3136, 1
        %v3138 = vmax.f32 %v3136, %v3137
        %v3139 = vsel %vm2571, %v2422, -inf
        %v3140 = vrot.slane %v3139, 4
        %v3141 = vmax.f32 %v3139, %v3140
        %v3142 = vrot.slane %v3141, 2
        %v3143 = vmax.f32 %v3141, %v3142
        %v3144 = vrot.slane %v3143, 1
        %v3145 = vmax.f32 %v3143, %v3144
        %v3146 = vsel %vm2571, %v2421, -inf
        %v3147 = vrot.slane %v3146, 4
        %v3148 = vmax.f32 %v3146, %v3147
        %v3149 = vrot.slane %v3148, 2
        %v3150 = vmax.f32 %v3148, %v3149
        %v3151 = vrot.slane %v3150, 1
        %v3152 = vmax.f32 %v3150, %v3151
        %v3153 = vsel %vm2571, %v2423, -inf
        %v3154 = vrot.slane %v3153, 4
        %v3155 = vmax.f32 %v3153, %v3154
        %v3156 = vrot.slane %v3155, 2
        %v3157 = vmax.f32 %v3155, %v3156
        %v3158 = vrot.slane %v3157, 1
        %v3159 = vmax.f32 %v3157, %v3158
        %v3160 = vsel %vm2571, %v2431, -inf
        %v3161 = vrot.slane %v3160, 4
        %v3162 = vmax.f32 %v3160, %v3161
        %v3163 = vrot.slane %v3162, 2
        %v3164 = vmax.f32 %v3162, %v3163
        %v3165 = vrot.slane %v3164, 1
        %v3166 = vmax.f32 %v3164, %v3165
        %v3167 = vsel %vm2571, %v2439, -inf
        %v3168 = vrot.slane %v3167, 4
        %v3169 = vmax.f32 %v3167, %v3168
        %v3170 = vrot.slane %v3169, 2
        %v3171 = vmax.f32 %v3169, %v3170
        %v3172 = vrot.slane %v3171, 1
        %v3173 = vmax.f32 %v3171, %v3172
        %v3174 = vsel %vm2571, %v2438, -inf
        %v3175 = vrot.slane %v3174, 4
        %v3176 = vmax.f32 %v3174, %v3175
        %v3177 = vrot.slane %v3176, 2
        %v3178 = vmax.f32 %v3176, %v3177
        %v3179 = vrot.slane %v3178, 1
        %v3180 = vmax.f32 %v3178, %v3179
        %v3181 = vsel %vm2571, %v2440, -inf
        %v3182 = vrot.slane %v3181, 4
        %v3183 = vmax.f32 %v3181, %v3182
        %v3184 = vrot.slane %v3183, 2
        %v3185 = vmax.f32 %v3183, %v3184
        %v3186 = vrot.slane %v3185, 1
        %v3187 = vmax.f32 %v3185, %v3186
        %v3188 = vsel %vm2571, %v2448, -inf
        %v3189 = vrot.slane %v3188, 4
        %v3190 = vmax.f32 %v3188, %v3189
        %v3191 = vrot.slane %v3190, 2
        %v3192 = vmax.f32 %v3190, %v3191
        %v3193 = vrot.slane %v3192, 1
        %v3194 = vmax.f32 %v3192, %v3193
        %v3195 = vsel %vm2571, %v2456, -inf
        %v3196 = vrot.slane %v3195, 4
        %v3197 = vmax.f32 %v3195, %v3196
        %v3198 = vrot.slane %v3197, 2
        %v3199 = vmax.f32 %v3197, %v3198
        %v3200 = vrot.slane %v3199, 1
        %v3201 = vmax.f32 %v3199, %v3200
        %v3202 = vsel %vm2571, %v2455, -inf
        %v3203 = vrot.slane %v3202, 4
        %v3204 = vmax.f32 %v3202, %v3203
        %v3205 = vrot.slane %v3204, 2
        %v3206 = vmax.f32 %v3204, %v3205
        %v3207 = vrot.slane %v3206, 1
        %v3208 = vmax.f32 %v3206, %v3207
        %v3209 = vsel %vm2571, %v2457, -inf
        %v3210 = vrot.slane %v3209, 4
        %v3211 = vmax.f32 %v3209, %v3210
        %v3212 = vrot.slane %v3211, 2
        %v3213 = vmax.f32 %v3211, %v3212
        %v3214 = vrot.slane %v3213, 1
        %v3215 = vmax.f32 %v3213, %v3214
        %v3216 = vsel %vm2571, %v2465, -inf
        %v3217 = vrot.slane %v3216, 4
        %v3218 = vmax.f32 %v3216, %v3217
        %v3219 = vrot.slane %v3218, 2
        %v3220 = vmax.f32 %v3218, %v3219
        %v3221 = vrot.slane %v3220, 1
        %v3222 = vmax.f32 %v3220, %v3221
        %v3223 = vsel %vm2571, %v2473, -inf
        %v3224 = vrot.slane %v3223, 4
        %v3225 = vmax.f32 %v3223, %v3224
        %v3226 = vrot.slane %v3225, 2
        %v3227 = vmax.f32 %v3225, %v3226
        %v3228 = vrot.slane %v3227, 1
        %v3229 = vmax.f32 %v3227, %v3228
        %v3230 = vsel %vm2571, %v2472, -inf
        %v3231 = vrot.slane %v3230, 4
        %v3232 = vmax.f32 %v3230, %v3231
        %v3233 = vrot.slane %v3232, 2
        %v3234 = vmax.f32 %v3232, %v3233
        %v3235 = vrot.slane %v3234, 1
        %v3236 = vmax.f32 %v3234, %v3235
        %v3237 = vsel %vm2571, %v2474, -inf
        %v3238 = vrot.slane %v3237, 4
        %v3239 = vmax.f32 %v3237, %v3238
        %v3240 = vrot.slane %v3239, 2
        %v3241 = vmax.f32 %v3239, %v3240
        %v3242 = vrot.slane %v3241, 1
        %v3243 = vmax.f32 %v3241, %v3242
        %v3244 = vld [vmem:[%s2] sm:$0x1]
        %v3246 = vlaneseq
        %v3247 = vshrl.u32 %v3246, 7
        %v3248 = vsub.s32 0, %v3247
        %v3249 = vrot.slane %v3244, %v3248
        %v3251 = vadd.f32 %v2578, %v3249
        %v3252 = vadd.f32 %v2585, %v3249
        %v3253 = vadd.f32 %v2592, %v3249
        %v3254 = vadd.f32 %v2599, %v3249
        %v3255 = vadd.f32 %v2606, %v3249
        %v3256 = vadd.f32 %v2613, %v3249
        %v3257 = vadd.f32 %v2620, %v3249
        %v3258 = vadd.f32 %v2627, %v3249
        %v3259 = vadd.f32 %v2634, %v3249
        %v3260 = vadd.f32 %v2641, %v3249
        %v3261 = vadd.f32 %v2648, %v3249
        %v3262 = vadd.f32 %v2655, %v3249
        %v3263 = vadd.f32 %v2662, %v3249
        %v3264 = vadd.f32 %v2669, %v3249
        %v3265 = vadd.f32 %v2676, %v3249
        %v3266 = vadd.f32 %v2683, %v3249
        %v3267 = vadd.f32 %v2690, %v3249
        %v3268 = vadd.f32 %v2697, %v3249
        %v3269 = vadd.f32 %v2704, %v3249
        %v3270 = vadd.f32 %v2711, %v3249
        %v3271 = vadd.f32 %v2718, %v3249
        %v3272 = vadd.f32 %v2725, %v3249
        %v3273 = vadd.f32 %v2732, %v3249
        %v3274 = vadd.f32 %v2739, %v3249
        %v3275 = vadd.f32 %v2746, %v3249
        %v3276 = vadd.f32 %v2753, %v3249
        %v3277 = vadd.f32 %v2760, %v3249
        %v3278 = vadd.f32 %v2767, %v3249
        %v3279 = vadd.f32 %v2774, %v3249
        %v3280 = vadd.f32 %v2781, %v3249
        %v3281 = vadd.f32 %v2788, %v3249
        %v3282 = vadd.f32 %v2795, %v3249
        %v3283 = vadd.f32 %v2802, %v3249
        %v3284 = vadd.f32 %v2809, %v3249
        %v3285 = vadd.f32 %v2816, %v3249
        %v3286 = vadd.f32 %v2823, %v3249
        %v3287 = vadd.f32 %v2830, %v3249
        %v3288 = vadd.f32 %v2837, %v3249
        %v3289 = vadd.f32 %v2844, %v3249
        %v3290 = vadd.f32 %v2851, %v3249
        %v3291 = vadd.f32 %v2858, %v3249
        %v3292 = vadd.f32 %v2865, %v3249
        %v3293 = vadd.f32 %v2872, %v3249
        %v3294 = vadd.f32 %v2879, %v3249
        %v3295 = vadd.f32 %v2886, %v3249
        %v3296 = vadd.f32 %v2893, %v3249
        %v3297 = vadd.f32 %v2900, %v3249
        %v3298 = vadd.f32 %v2907, %v3249
        %v3299 = vadd.f32 %v2914, %v3249
        %v3300 = vadd.f32 %v2921, %v3249
        %v3301 = vadd.f32 %v2928, %v3249
        %v3302 = vadd.f32 %v2935, %v3249
        %v3303 = vadd.f32 %v2942, %v3249
        %v3304 = vadd.f32 %v2949, %v3249
        %v3305 = vadd.f32 %v2956, %v3249
        %v3306 = vadd.f32 %v2963, %v3249
        %v3307 = vadd.f32 %v2970, %v3249
        %v3308 = vadd.f32 %v2977, %v3249
        %v3309 = vadd.f32 %v2984, %v3249
        %v3310 = vadd.f32 %v2991, %v3249
        %v3311 = vadd.f32 %v2998, %v3249
        %v3312 = vadd.f32 %v3005, %v3249
        %v3313 = vadd.f32 %v3012, %v3249
        %v3314 = vadd.f32 %v3019, %v3249
        %v3315 = vadd.f32 %v3026, %v3249
        %v3316 = vadd.f32 %v3033, %v3249
        %v3317 = vadd.f32 %v3040, %v3249
        %v3318 = vadd.f32 %v3047, %v3249
        %v3319 = vadd.f32 %v3054, %v3249
        %v3320 = vadd.f32 %v3061, %v3249
        %v3321 = vadd.f32 %v3068, %v3249
        %v3322 = vadd.f32 %v3075, %v3249
        %v3323 = vadd.f32 %v3082, %v3249
        %v3324 = vadd.f32 %v3089, %v3249
        %v3325 = vadd.f32 %v3096, %v3249
        %v3326 = vadd.f32 %v3103, %v3249
        %v3327 = vadd.f32 %v3110, %v3249
        %v3328 = vadd.f32 %v3117, %v3249
        %v3329 = vadd.f32 %v3124, %v3249
        %v3330 = vadd.f32 %v3131, %v3249
        %v3331 = vadd.f32 %v3138, %v3249
        %v3332 = vadd.f32 %v3145, %v3249
        %v3333 = vadd.f32 %v3152, %v3249
        %v3334 = vadd.f32 %v3159, %v3249
        %v3335 = vadd.f32 %v3166, %v3249
        %v3336 = vadd.f32 %v3173, %v3249
        %v3337 = vadd.f32 %v3180, %v3249
        %v3338 = vadd.f32 %v3187, %v3249
        %v3339 = vadd.f32 %v3194, %v3249
        %v3340 = vadd.f32 %v3201, %v3249
        %v3341 = vadd.f32 %v3208, %v3249
        %v3342 = vadd.f32 %v3215, %v3249
        %v3343 = vadd.f32 %v3222, %v3249
        %v3344 = vadd.f32 %v3229, %v3249
        %v3345 = vadd.f32 %v3236, %v3249
        %v3346 = vadd.f32 %v3243, %v3249
        %v3347 = vmax.f32 %v3251, 0.0
        %v3348 = vmax.f32 %v3252, 0.0
        %v3349 = vmax.f32 %v3253, 0.0
        %v3350 = vmax.f32 %v3254, 0.0
        %v3351 = vmax.f32 %v3255, 0.0
        %v3352 = vmax.f32 %v3256, 0.0
        %v3353 = vmax.f32 %v3257, 0.0
        %v3354 = vmax.f32 %v3258, 0.0
        %v3355 = vmax.f32 %v3259, 0.0
        %v3356 = vmax.f32 %v3260, 0.0
        %v3357 = vmax.f32 %v3261, 0.0
        %v3358 = vmax.f32 %v3262, 0.0
        %v3359 = vmax.f32 %v3263, 0.0
        %v3360 = vmax.f32 %v3264, 0.0
        %v3361 = vmax.f32 %v3265, 0.0
        %v3362 = vmax.f32 %v3266, 0.0
        %v3363 = vmax.f32 %v3267, 0.0
        %v3364 = vmax.f32 %v3268, 0.0
        %v3365 = vmax.f32 %v3269, 0.0
        %v3366 = vmax.f32 %v3270, 0.0
        %v3367 = vmax.f32 %v3271, 0.0
        %v3368 = vmax.f32 %v3272, 0.0
        %v3369 = vmax.f32 %v3273, 0.0
        %v3370 = vmax.f32 %v3274, 0.0
        %v3371 = vmax.f32 %v3275, 0.0
        %v3372 = vmax.f32 %v3276, 0.0
        %v3373 = vmax.f32 %v3277, 0.0
        %v3374 = vmax.f32 %v3278, 0.0
        %v3375 = vmax.f32 %v3279, 0.0
        %v3376 = vmax.f32 %v3280, 0.0
        %v3377 = vmax.f32 %v3281, 0.0
        %v3378 = vmax.f32 %v3282, 0.0
        %v3379 = vmax.f32 %v3283, 0.0
        %v3380 = vmax.f32 %v3284, 0.0
        %v3381 = vmax.f32 %v3285, 0.0
        %v3382 = vmax.f32 %v3286, 0.0
        %v3383 = vmax.f32 %v3287, 0.0
        %v3384 = vmax.f32 %v3288, 0.0
        %v3385 = vmax.f32 %v3289, 0.0
        %v3386 = vmax.f32 %v3290, 0.0
        %v3387 = vmax.f32 %v3291, 0.0
        %v3388 = vmax.f32 %v3292, 0.0
        %v3389 = vmax.f32 %v3293, 0.0
        %v3390 = vmax.f32 %v3294, 0.0
        %v3391 = vmax.f32 %v3295, 0.0
        %v3392 = vmax.f32 %v3296, 0.0
        %v3393 = vmax.f32 %v3297, 0.0
        %v3394 = vmax.f32 %v3298, 0.0
        %v3395 = vmax.f32 %v3299, 0.0
        %v3396 = vmax.f32 %v3300, 0.0
        %v3397 = vmax.f32 %v3301, 0.0
        %v3398 = vmax.f32 %v3302, 0.0
        %v3399 = vmax.f32 %v3303, 0.0
        %v3400 = vmax.f32 %v3304, 0.0
        %v3401 = vmax.f32 %v3305, 0.0
        %v3402 = vmax.f32 %v3306, 0.0
        %v3403 = vmax.f32 %v3307, 0.0
        %v3404 = vmax.f32 %v3308, 0.0
        %v3405 = vmax.f32 %v3309, 0.0
        %v3406 = vmax.f32 %v3310, 0.0
        %v3407 = vmax.f32 %v3311, 0.0
        %v3408 = vmax.f32 %v3312, 0.0
        %v3409 = vmax.f32 %v3313, 0.0
        %v3410 = vmax.f32 %v3314, 0.0
        %v3411 = vmax.f32 %v3315, 0.0
        %v3412 = vmax.f32 %v3316, 0.0
        %v3413 = vmax.f32 %v3317, 0.0
        %v3414 = vmax.f32 %v3318, 0.0
        %v3415 = vmax.f32 %v3319, 0.0
        %v3416 = vmax.f32 %v3320, 0.0
        %v3417 = vmax.f32 %v3321, 0.0
        %v3418 = vmax.f32 %v3322, 0.0
        %v3419 = vmax.f32 %v3323, 0.0
        %v3420 = vmax.f32 %v3324, 0.0
        %v3421 = vmax.f32 %v3325, 0.0
        %v3422 = vmax.f32 %v3326, 0.0
        %v3423 = vmax.f32 %v3327, 0.0
        %v3424 = vmax.f32 %v3328, 0.0
        %v3425 = vmax.f32 %v3329, 0.0
        %v3426 = vmax.f32 %v3330, 0.0
        %v3427 = vmax.f32 %v3331, 0.0
        %v3428 = vmax.f32 %v3332, 0.0
        %v3429 = vmax.f32 %v3333, 0.0
        %v3430 = vmax.f32 %v3334, 0.0
        %v3431 = vmax.f32 %v3335, 0.0
        %v3432 = vmax.f32 %v3336, 0.0
        %v3433 = vmax.f32 %v3337, 0.0
        %v3434 = vmax.f32 %v3338, 0.0
        %v3435 = vmax.f32 %v3339, 0.0
        %v3436 = vmax.f32 %v3340, 0.0
        %v3437 = vmax.f32 %v3341, 0.0
        %v3438 = vmax.f32 %v3342, 0.0
        %v3439 = vmax.f32 %v3343, 0.0
        %v3440 = vmax.f32 %v3344, 0.0
        %v3441 = vmax.f32 %v3345, 0.0
        %v3442 = vmax.f32 %v3346, 0.0
        %v3443 = vpack.c.bf16 %v3347, %v3347
        %v3444 = vpack.c.bf16 %v3348, %v3348
        %v3445 = vpack.c.bf16 %v3349, %v3349
        %v3446 = vpack.c.bf16 %v3350, %v3350
        %v3447 = vpack.c.bf16 %v3351, %v3351
        %v3448 = vpack.c.bf16 %v3352, %v3352
        %v3449 = vpack.c.bf16 %v3353, %v3353
        %v3450 = vpack.c.bf16 %v3354, %v3354
        %v3451 = vpack.c.bf16 %v3359, %v3359
        %v3452 = vpack.c.bf16 %v3360, %v3360
        %v3453 = vpack.c.bf16 %v3361, %v3361
        %v3454 = vpack.c.bf16 %v3362, %v3362
        %v3455 = vpack.c.bf16 %v3363, %v3363
        %v3456 = vpack.c.bf16 %v3364, %v3364
        %v3457 = vpack.c.bf16 %v3365, %v3365
        %v3458 = vpack.c.bf16 %v3366, %v3366
        %v3459 = vpack.c.bf16 %v3371, %v3371
        %v3460 = vpack.c.bf16 %v3372, %v3372
        %v3461 = vpack.c.bf16 %v3373, %v3373
        %v3462 = vpack.c.bf16 %v3374, %v3374
        %v3463 = vpack.c.bf16 %v3375, %v3375
        %v3464 = vpack.c.bf16 %v3376, %v3376
        %v3465 = vpack.c.bf16 %v3377, %v3377
        %v3466 = vpack.c.bf16 %v3378, %v3378
        %v3467 = vpack.c.bf16 %v3383, %v3383
        %v3468 = vpack.c.bf16 %v3384, %v3384
        %v3469 = vpack.c.bf16 %v3385, %v3385
        %v3470 = vpack.c.bf16 %v3386, %v3386
        %v3471 = vpack.c.bf16 %v3387, %v3387
        %v3472 = vpack.c.bf16 %v3388, %v3388
        %v3473 = vpack.c.bf16 %v3389, %v3389
        %v3474 = vpack.c.bf16 %v3390, %v3390
        %v3475 = vpack.c.bf16 %v3395, %v3395
        %v3476 = vpack.c.bf16 %v3396, %v3396
        %v3477 = vpack.c.bf16 %v3397, %v3397
        %v3478 = vpack.c.bf16 %v3398, %v3398
        %v3479 = vpack.c.bf16 %v3399, %v3399
        %v3480 = vpack.c.bf16 %v3400, %v3400
        %v3481 = vpack.c.bf16 %v3401, %v3401
        %v3482 = vpack.c.bf16 %v3402, %v3402
        %v3483 = vpack.c.bf16 %v3407, %v3407
        %v3484 = vpack.c.bf16 %v3408, %v3408
        %v3485 = vpack.c.bf16 %v3409, %v3409
        %v3486 = vpack.c.bf16 %v3410, %v3410
        %v3487 = vpack.c.bf16 %v3411, %v3411
        %v3488 = vpack.c.bf16 %v3412, %v3412
        %v3489 = vpack.c.bf16 %v3413, %v3413
        %v3490 = vpack.c.bf16 %v3414, %v3414
        %v3491 = vpack.c.bf16 %v3419, %v3419
        %v3492 = vpack.c.bf16 %v3420, %v3420
        %v3493 = vpack.c.bf16 %v3421, %v3421
        %v3494 = vpack.c.bf16 %v3422, %v3422
        %v3495 = vpack.c.bf16 %v3423, %v3423
        %v3496 = vpack.c.bf16 %v3424, %v3424
        %v3497 = vpack.c.bf16 %v3425, %v3425
        %v3498 = vpack.c.bf16 %v3426, %v3426
        %v3499 = vpack.c.bf16 %v3431, %v3431
        %v3500 = vpack.c.bf16 %v3432, %v3432
        %v3501 = vpack.c.bf16 %v3433, %v3433
        %v3502 = vpack.c.bf16 %v3434, %v3434
        %v3503 = vpack.c.bf16 %v3435, %v3435
        %v3504 = vpack.c.bf16 %v3436, %v3436
        %v3505 = vpack.c.bf16 %v3437, %v3437
        %v3506 = vpack.c.bf16 %v3438, %v3438
        %v3507 = vld [vmem:[%s3] sm:$0xff]
        %v3508 = vld [vmem:[%s3 + $0x8] sm:$0xff]
        %v3509 = vld [vmem:[%s3 + $0x10] sm:$0xff]
        %v3510 = vld [vmem:[%s3 + $0x18] sm:$0xff]
        %v3511 = vld [vmem:[%s3 + $0x20] sm:$0xff]
        %v3512 = vld [vmem:[%s3 + $0x28] sm:$0xff]
        %v3513 = vld [vmem:[%s3 + $0x30] sm:$0xff]
        %v3514 = vld [vmem:[%s3 + $0x38] sm:$0xff]
        %v3515 = vld [vmem:[%s3 + $0x40] sm:$0xff]
        %v3516 = vld [vmem:[%s3 + $0x48] sm:$0xff]
        %v3517 = vld [vmem:[%s3 + $0x50] sm:$0xff]
        %v3518 = vld [vmem:[%s3 + $0x58] sm:$0xff]
        %v3519 = vld [vmem:[%s3 + $0x60] sm:$0xff]
        %v3520 = vld [vmem:[%s3 + $0x68] sm:$0xff]
        %v3521 = vld [vmem:[%s3 + $0x70] sm:$0xff]
        %v3522 = vpack.c.bf16 %v3355, %v3355
        %v3523 = vpack.c.bf16 %v3367, %v3367
        %v3524 = vpack.c.bf16 %v3379, %v3379
        %v3525 = vpack.c.bf16 %v3391, %v3391
        %v3526 = vpack.c.bf16 %v3403, %v3403
        %v3527 = vpack.c.bf16 %v3415, %v3415
        %v3528 = vpack.c.bf16 %v3427, %v3427
        %v3529 = vpack.c.bf16 %v3439, %v3439
        %s3530 = scalar_lea.vmem %s3, 120
        %v3531 = vld [vmem:[%s3530] sm:$0xff]
        %v3532 = vld [vmem:[%s3530 + $0x8] sm:$0xff]
        %v3533 = vld [vmem:[%s3530 + $0x10] sm:$0xff]
        %v3534 = vld [vmem:[%s3530 + $0x18] sm:$0xff]
        %v3535 = vld [vmem:[%s3530 + $0x20] sm:$0xff]
        %v3536 = vld [vmem:[%s3530 + $0x28] sm:$0xff]
        %v3537 = vld [vmem:[%s3530 + $0x30] sm:$0xff]
        %v3538 = vld [vmem:[%s3530 + $0x38] sm:$0xff]
        %v3539 = vld [vmem:[%s3530 + $0x40] sm:$0xff]
        %v3540 = vld [vmem:[%s3530 + $0x48] sm:$0xff]
        %v3541 = vld [vmem:[%s3530 + $0x50] sm:$0xff]
        %v3542 = vld [vmem:[%s3530 + $0x58] sm:$0xff]
        %v3543 = vld [vmem:[%s3530 + $0x60] sm:$0xff]
        %v3544 = vld [vmem:[%s3530 + $0x68] sm:$0xff]
        %v3545 = vld [vmem:[%s3530 + $0x70] sm:$0xff]
        %v3610 = vunpack.c.l.b16 %v3444
        %v3611 = vunpack.c.l.b16 %v3445
        %v3612 = vunpack.c.l.b16 %v3446
        %v3613 = vunpack.c.l.b16 %v3447
        %v3614 = vunpack.c.l.b16 %v3448
        %v3615 = vunpack.c.l.b16 %v3449
        %v3616 = vunpack.c.l.b16 %v3450
        %v3617 = vunpack.c.l.b16 %v3522
        %v3618 = vunpack.c.l.b16 %v3452
        %v3619 = vunpack.c.l.b16 %v3453
        %v3620 = vunpack.c.l.b16 %v3454
        %v3621 = vunpack.c.l.b16 %v3455
        %v3622 = vunpack.c.l.b16 %v3456
        %v3623 = vunpack.c.l.b16 %v3457
        %v3624 = vunpack.c.l.b16 %v3458
        %v3625 = vunpack.c.l.b16 %v3523
        %v3626 = vunpack.c.l.b16 %v3460
        %v3627 = vunpack.c.l.b16 %v3461
        %v3628 = vunpack.c.l.b16 %v3462
        %v3629 = vunpack.c.l.b16 %v3463
        %v3630 = vunpack.c.l.b16 %v3464
        %v3631 = vunpack.c.l.b16 %v3465
        %v3632 = vunpack.c.l.b16 %v3466
        %v3633 = vunpack.c.l.b16 %v3524
        %v3634 = vunpack.c.l.b16 %v3468
        %v3635 = vunpack.c.l.b16 %v3469
        %v3636 = vunpack.c.l.b16 %v3470
        %v3637 = vunpack.c.l.b16 %v3471
        %v3638 = vunpack.c.l.b16 %v3472
        %v3639 = vunpack.c.l.b16 %v3473
        %v3640 = vunpack.c.l.b16 %v3474
        %v3641 = vunpack.c.l.b16 %v3525
        %v3642 = vunpack.c.l.b16 %v3476
        %v3643 = vunpack.c.l.b16 %v3477
        %v3644 = vunpack.c.l.b16 %v3478
        %v3645 = vunpack.c.l.b16 %v3479
        %v3646 = vunpack.c.l.b16 %v3480
        %v3647 = vunpack.c.l.b16 %v3481
        %v3648 = vunpack.c.l.b16 %v3482
        %v3649 = vunpack.c.l.b16 %v3526
        %v3650 = vunpack.c.l.b16 %v3484
        %v3651 = vunpack.c.l.b16 %v3485
        %v3652 = vunpack.c.l.b16 %v3486
        %v3653 = vunpack.c.l.b16 %v3487
        %v3654 = vunpack.c.l.b16 %v3488
        %v3655 = vunpack.c.l.b16 %v3489
        %v3656 = vunpack.c.l.b16 %v3490
        %v3657 = vunpack.c.l.b16 %v3527
        %v3658 = vunpack.c.l.b16 %v3492
        %v3659 = vunpack.c.l.b16 %v3493
        %v3660 = vunpack.c.l.b16 %v3494
        %v3661 = vunpack.c.l.b16 %v3495
        %v3662 = vunpack.c.l.b16 %v3496
        %v3663 = vunpack.c.l.b16 %v3497
        %v3664 = vunpack.c.l.b16 %v3498
        %v3665 = vunpack.c.l.b16 %v3528
        %v3666 = vunpack.c.l.b16 %v3500
        %v3667 = vunpack.c.l.b16 %v3501
        %v3668 = vunpack.c.l.b16 %v3502
        %v3669 = vunpack.c.l.b16 %v3503
        %v3670 = vunpack.c.l.b16 %v3504
        %v3671 = vunpack.c.l.b16 %v3505
        %v3672 = vunpack.c.l.b16 %v3506
        %v3673 = vunpack.c.l.b16 %v3529
        %v3674 = vrot.slane %v3611, 7
        %vm3675 = vcmask 1041409
        %v3676 = vsel %vm3675, %v3674, %v3610
        %v3677 = vrot.slane %v3612, 6
        %vm3678 = vcmask 1042434
        %v3679 = vsel %vm3678, %v3677, %v3676
        %v3680 = vrot.slane %v3613, 5
        %vm3681 = vcmask 1043459
        %v3682 = vsel %vm3681, %v3680, %v3679
        %v3683 = vrot.slane %v3614, 4
        %vm3684 = vcmask 1044484
        %v3685 = vsel %vm3684, %v3683, %v3682
        %v3686 = vrot.slane %v3615, 3
        %vm3687 = vcmask 1045509
        %v3688 = vsel %vm3687, %v3686, %v3685
        %v3689 = vrot.slane %v3616, 2
        %vm3690 = vcmask 1046534
        %v3691 = vsel %vm3690, %v3689, %v3688
        %v3692 = vrot.slane %v3617, 1
        %vm3693 = vcmask 1047559
        %v3694 = vsel %vm3693, %v3692, %v3691
        %v3695 = vrot.slane %v3619, 7
        %v3696 = vsel %vm3675, %v3695, %v3618
        %v3697 = vrot.slane %v3620, 6
        %v3698 = vsel %vm3678, %v3697, %v3696
        %v3699 = vrot.slane %v3621, 5
        %v3700 = vsel %vm3681, %v3699, %v3698
        %v3701 = vrot.slane %v3622, 4
        %v3702 = vsel %vm3684, %v3701, %v3700
        %v3703 = vrot.slane %v3623, 3
        %v3704 = vsel %vm3687, %v3703, %v3702
        %v3705 = vrot.slane %v3624, 2
        %v3706 = vsel %vm3690, %v3705, %v3704
        %v3707 = vrot.slane %v3625, 1
        %v3708 = vsel %vm3693, %v3707, %v3706
        %v3709 = vrot.slane %v3627, 7
        %v3710 = vsel %vm3675, %v3709, %v3626
        %v3711 = vrot.slane %v3628, 6
        %v3712 = vsel %vm3678, %v3711, %v3710
        %v3713 = vrot.slane %v3629, 5
        %v3714 = vsel %vm3681, %v3713, %v3712
        %v3715 = vrot.slane %v3630, 4
        %v3716 = vsel %vm3684, %v3715, %v3714
        %v3717 = vrot.slane %v3631, 3
        %v3718 = vsel %vm3687, %v3717, %v3716
        %v3719 = vrot.slane %v3632, 2
        %v3720 = vsel %vm3690, %v3719, %v3718
        %v3721 = vrot.slane %v3633, 1
        %v3722 = vsel %vm3693, %v3721, %v3720
        %v3723 = vrot.slane %v3635, 7
        %v3724 = vsel %vm3675, %v3723, %v3634
        %v3725 = vrot.slane %v3636, 6
        %v3726 = vsel %vm3678, %v3725, %v3724
        %v3727 = vrot.slane %v3637, 5
        %v3728 = vsel %vm3681, %v3727, %v3726
        %v3729 = vrot.slane %v3638, 4
        %v3730 = vsel %vm3684, %v3729, %v3728
        %v3731 = vrot.slane %v3639, 3
        %v3732 = vsel %vm3687, %v3731, %v3730
        %v3733 = vrot.slane %v3640, 2
        %v3734 = vsel %vm3690, %v3733, %v3732
        %v3735 = vrot.slane %v3641, 1
        %v3736 = vsel %vm3693, %v3735, %v3734
        %v3737 = vrot.slane %v3643, 7
        %v3738 = vsel %vm3675, %v3737, %v3642
        %v3739 = vrot.slane %v3644, 6
        %v3740 = vsel %vm3678, %v3739, %v3738
        %v3741 = vrot.slane %v3645, 5
        %v3742 = vsel %vm3681, %v3741, %v3740
        %v3743 = vrot.slane %v3646, 4
        %v3744 = vsel %vm3684, %v3743, %v3742
        %v3745 = vrot.slane %v3647, 3
        %v3746 = vsel %vm3687, %v3745, %v3744
        %v3747 = vrot.slane %v3648, 2
        %v3748 = vsel %vm3690, %v3747, %v3746
        %v3749 = vrot.slane %v3649, 1
        %v3750 = vsel %vm3693, %v3749, %v3748
        %v3751 = vrot.slane %v3651, 7
        %v3752 = vsel %vm3675, %v3751, %v3650
        %v3753 = vrot.slane %v3652, 6
        %v3754 = vsel %vm3678, %v3753, %v3752
        %v3755 = vrot.slane %v3653, 5
        %v3756 = vsel %vm3681, %v3755, %v3754
        %v3757 = vrot.slane %v3654, 4
        %v3758 = vsel %vm3684, %v3757, %v3756
        %v3759 = vrot.slane %v3655, 3
        %v3760 = vsel %vm3687, %v3759, %v3758
        %v3761 = vrot.slane %v3656, 2
        %v3762 = vsel %vm3690, %v3761, %v3760
        %v3763 = vrot.slane %v3657, 1
        %v3764 = vsel %vm3693, %v3763, %v3762
        %v3765 = vrot.slane %v3659, 7
        %v3766 = vsel %vm3675, %v3765, %v3658
        %v3767 = vrot.slane %v3660, 6
        %v3768 = vsel %vm3678, %v3767, %v3766
        %v3769 = vrot.slane %v3661, 5
        %v3770 = vsel %vm3681, %v3769, %v3768
        %v3771 = vrot.slane %v3662, 4
        %v3772 = vsel %vm3684, %v3771, %v3770
        %v3773 = vrot.slane %v3663, 3
        %v3774 = vsel %vm3687, %v3773, %v3772
        %v3775 = vrot.slane %v3664, 2
        %v3776 = vsel %vm3690, %v3775, %v3774
        %v3777 = vrot.slane %v3665, 1
        %v3778 = vsel %vm3693, %v3777, %v3776
        %v3779 = vrot.slane %v3667, 7
        %v3780 = vsel %vm3675, %v3779, %v3666
        %v3781 = vrot.slane %v3668, 6
        %v3782 = vsel %vm3678, %v3781, %v3780
        %v3783 = vrot.slane %v3669, 5
        %v3784 = vsel %vm3681, %v3783, %v3782
        %v3785 = vrot.slane %v3670, 4
        %v3786 = vsel %vm3684, %v3785, %v3784
        %v3787 = vrot.slane %v3671, 3
        %v3788 = vsel %vm3687, %v3787, %v3786
        %v3789 = vrot.slane %v3672, 2
        %v3790 = vsel %vm3690, %v3789, %v3788
        %v3791 = vrot.slane %v3673, 1
        %v3792 = vsel %vm3693, %v3791, %v3790
        %v3793 = vpack.c.b16 %v3708, %v3694
        %v3794 = vpack.c.b16 %v3736, %v3722
        %v3795 = vpack.c.b16 %v3764, %v3750
        %v3796 = vpack.c.b16 %v3792, %v3778
        %v3812 = vunpack.c.l.b16 %v3531
        %v3813 = vunpack.c.h.b16 %v3531
        %v3814 = vunpack.c.l.b16 %v3532
        %v3815 = vunpack.c.h.b16 %v3532
        %v3816 = vunpack.c.l.b16 %v3533
        %v3817 = vunpack.c.h.b16 %v3533
        %v3818 = vunpack.c.l.b16 %v3534
        %v3819 = vunpack.c.h.b16 %v3534
        %v3820 = vunpack.c.l.b16 %v3535
        %v3821 = vunpack.c.h.b16 %v3535
        %v3822 = vunpack.c.l.b16 %v3536
        %v3823 = vunpack.c.h.b16 %v3536
        %v3824 = vunpack.c.l.b16 %v3537
        %v3825 = vunpack.c.h.b16 %v3537
        %v3826 = vunpack.c.l.b16 %v3538
        %v3827 = vunpack.c.h.b16 %v3538
        %v3828 = vunpack.c.l.b16 %v3539
        %v3829 = vunpack.c.h.b16 %v3539
        %v3830 = vunpack.c.l.b16 %v3540
        %v3831 = vunpack.c.h.b16 %v3540
        %v3832 = vunpack.c.l.b16 %v3541
        %v3833 = vunpack.c.h.b16 %v3541
        %v3834 = vunpack.c.l.b16 %v3542
        %v3835 = vunpack.c.h.b16 %v3542
        %v3836 = vunpack.c.l.b16 %v3543
        %v3837 = vunpack.c.h.b16 %v3543
        %v3838 = vunpack.c.l.b16 %v3544
        %v3839 = vunpack.c.h.b16 %v3544
        %v3840 = vunpack.c.l.b16 %v3545
        %v3841 = vunpack.c.h.b16 %v3545
        %v3842 = vpack.c.b16 %v3814, %v3812
        %v3843 = vpack.c.b16 %v3815, %v3813
        %v3844 = vpack.c.b16 %v3818, %v3816
        %v3845 = vpack.c.b16 %v3819, %v3817
        %v3846 = vpack.c.b16 %v3822, %v3820
        %v3847 = vpack.c.b16 %v3823, %v3821
        %v3848 = vpack.c.b16 %v3826, %v3824
        %v3849 = vpack.c.b16 %v3827, %v3825
        %v3850 = vpack.c.b16 %v3830, %v3828
        %v3851 = vpack.c.b16 %v3831, %v3829
        %v3852 = vpack.c.b16 %v3834, %v3832
        %v3853 = vpack.c.b16 %v3835, %v3833
        %v3854 = vpack.c.b16 %v3838, %v3836
        %v3855 = vpack.c.b16 %v3839, %v3837
        %v3856 = vpack.c.b16 %v3840, %v3840
        %v3857 = vpack.c.b16 %v3841, %v3841
        %vm3872 = vcmask 982016
        %v3874 = vsel %vm3872, %v3793, 0
        %v3877 = vsel %vm3872, %v3794, 0
        %v3880 = vsel %vm3872, %v3795, 0
        %v3883 = vsel %vm3872, %v3796, 0
        %v3886 = vsel %vm1660, %v3856, 0
        %v3889 = vsel %vm1660, %v3857, 0
        %3891 = vmatprep.subr.bf16.mxu0 %v3889
        %3892 = vmatpush1.bf16.msra.mxu0 %v3886
        %3893 = vmatprep.subr.bf16.mxu0 %v3855
        %3894 = vmatpush1.bf16.msra.mxu0 %v3854
        %3895 = vmatprep.subr.bf16.mxu0 %v3853
        %3896 = vmatpush1.bf16.msra.mxu0 %v3852
        %3897 = vmatprep.subr.bf16.mxu0 %v3851
        %3898 = vmatpush1.bf16.msra.mxu0 %v3850
        %3899 = vmatprep.subr.bf16.mxu0 %v3849
        %3900 = vmatpush1.bf16.msra.mxu0 %v3848
        %3901 = vmatprep.subr.bf16.mxu0 %v3847
        %3902 = vmatpush1.bf16.msra.mxu0 %v3846
        %3903 = vmatprep.subr.bf16.mxu0 %v3845
        %3904 = vmatpush1.bf16.msra.mxu0 %v3844
        %3905 = vmatprep.subr.bf16.mxu0 %v3843
        %3906 = vmatpush1.bf16.msra.mxu0 %v3842
        %3907 = vmatprep.subr.bf16.mxu0 0
        %3908 = vmatpush2.bf16.msra.mxu0 0
        %3909 = vmatprep.subr.bf16.mxu0 0
        %3910 = vmatpush2.bf16.msra.mxu0 0
        %3911 = vmatprep.subr.bf16.mxu0 0
        %3912 = vmatpush2.bf16.msra.mxu0 0
        %3913 = vmatprep.subr.bf16.mxu0 0
        %3914 = vmatpush2.bf16.msra.mxu0 0
        %3915 = vmatprep.subr.bf16.mxu0 0
        %3916 = vmatpush2.bf16.msra.mxu0 0
        %3917 = vmatprep.subr.bf16.mxu0 0
        %3918 = vmatpush2.bf16.msra.mxu0 0
        %3919 = vmatprep.subr.bf16.mxu0 0
        %3920 = vmatpush2.bf16.msra.mxu0 0
        %3921 = vmatprep.subr.bf16.mxu0 0
        %3922 = vmatpush2.bf16.msra.mxu0 0
        %3923 = vmatprep.mubr.bf16.mxu0 0
        %3924 = vmatmul.mubr.bf16.gmra.mxu0 %v3874
        %v3925 = vpop.f32.mrf.mxu0
        %v3926 = vadd.f32 0.0, %v3925
        %v3927 = vpop.f32.mrf.mxu0
        %v3928 = vadd.f32 0.0, %v3927
        %v3929 = vpop.f32.mrf.mxu0
        %v3930 = vadd.f32 0.0, %v3929
        %v3931 = vpop.f32.mrf.mxu0
        %v3932 = vadd.f32 0.0, %v3931
        %3933 = vmatprep.mubr.bf16.mxu0 0
        %3934 = vmatmul.mubr.bf16.gmra.mxu0 %v3877
        %v3935 = vpop.f32.mrf.mxu0
        %v3936 = vadd.f32 0.0, %v3935
        %v3937 = vpop.f32.mrf.mxu0
        %v3938 = vadd.f32 0.0, %v3937
        %v3939 = vpop.f32.mrf.mxu0
        %v3940 = vadd.f32 0.0, %v3939
        %v3941 = vpop.f32.mrf.mxu0
        %v3942 = vadd.f32 0.0, %v3941
        %3943 = vmatprep.mubr.bf16.mxu0 0
        %3944 = vmatmul.mubr.bf16.gmra.mxu0 %v3880
        %v3945 = vpop.f32.mrf.mxu0
        %v3946 = vadd.f32 0.0, %v3945
        %v3947 = vpop.f32.mrf.mxu0
        %v3948 = vadd.f32 0.0, %v3947
        %v3949 = vpop.f32.mrf.mxu0
        %v3950 = vadd.f32 0.0, %v3949
        %v3951 = vpop.f32.mrf.mxu0
        %v3952 = vadd.f32 0.0, %v3951
        %3953 = vmatprep.mubr.bf16.mxu0 0
        %3954 = vmatmul.mubr.bf16.gmra.mxu0 %v3883
        %v3955 = vpop.f32.mrf.mxu0
        %v3956 = vadd.f32 0.0, %v3955
        %v3957 = vpop.f32.mrf.mxu0
        %v3958 = vadd.f32 0.0, %v3957
        %v3959 = vpop.f32.mrf.mxu0
        %v3960 = vadd.f32 0.0, %v3959
        %v3961 = vpop.f32.mrf.mxu0
        %v3962 = vadd.f32 0.0, %v3961
        %3963 = vdwg.mxu0
        %v3972 = vunpack.c.l.b16 %v3443
        %v3973 = vunpack.c.l.b16 %v3451
        %v3974 = vunpack.c.l.b16 %v3459
        %v3975 = vunpack.c.l.b16 %v3467
        %v3976 = vunpack.c.l.b16 %v3475
        %v3977 = vunpack.c.l.b16 %v3483
        %v3978 = vunpack.c.l.b16 %v3491
        %v3979 = vunpack.c.l.b16 %v3499
        %v3980 = vrot.slane %v3610, 7
        %v3981 = vsel %vm3675, %v3980, %v3972
        %v3982 = vrot.slane %v3611, 6
        %v3983 = vsel %vm3678, %v3982, %v3981
        %v3984 = vrot.slane %v3612, 5
        %v3985 = vsel %vm3681, %v3984, %v3983
        %v3986 = vrot.slane %v3613, 4
        %v3987 = vsel %vm3684, %v3986, %v3985
        %v3988 = vrot.slane %v3614, 3
        %v3989 = vsel %vm3687, %v3988, %v3987
        %v3990 = vrot.slane %v3615, 2
        %v3991 = vsel %vm3690, %v3990, %v3989
        %v3992 = vrot.slane %v3616, 1
        %v3993 = vsel %vm3693, %v3992, %v3991
        %v3994 = vrot.slane %v3618, 7
        %v3995 = vsel %vm3675, %v3994, %v3973
        %v3996 = vrot.slane %v3619, 6
        %v3997 = vsel %vm3678, %v3996, %v3995
        %v3998 = vrot.slane %v3620, 5
        %v3999 = vsel %vm3681, %v3998, %v3997
        %v4000 = vrot.slane %v3621, 4
        %v4001 = vsel %vm3684, %v4000, %v3999
        %v4002 = vrot.slane %v3622, 3
        %v4003 = vsel %vm3687, %v4002, %v4001
        %v4004 = vrot.slane %v3623, 2
        %v4005 = vsel %vm3690, %v4004, %v4003
        %v4006 = vrot.slane %v3624, 1
        %v4007 = vsel %vm3693, %v4006, %v4005
        %v4008 = vrot.slane %v3626, 7
        %v4009 = vsel %vm3675, %v4008, %v3974
        %v4010 = vrot.slane %v3627, 6
        %v4011 = vsel %vm3678, %v4010, %v4009
        %v4012 = vrot.slane %v3628, 5
        %v4013 = vsel %vm3681, %v4012, %v4011
        %v4014 = vrot.slane %v3629, 4
        %v4015 = vsel %vm3684, %v4014, %v4013
        %v4016 = vrot.slane %v3630, 3
        %v4017 = vsel %vm3687, %v4016, %v4015
        %v4018 = vrot.slane %v3631, 2
        %v4019 = vsel %vm3690, %v4018, %v4017
        %v4020 = vrot.slane %v3632, 1
        %v4021 = vsel %vm3693, %v4020, %v4019
        %v4022 = vrot.slane %v3634, 7
        %v4023 = vsel %vm3675, %v4022, %v3975
        %v4024 = vrot.slane %v3635, 6
        %v4025 = vsel %vm3678, %v4024, %v4023
        %v4026 = vrot.slane %v3636, 5
        %v4027 = vsel %vm3681, %v4026, %v4025
        %v4028 = vrot.slane %v3637, 4
        %v4029 = vsel %vm3684, %v4028, %v4027
        %v4030 = vrot.slane %v3638, 3
        %v4031 = vsel %vm3687, %v4030, %v4029
        %v4032 = vrot.slane %v3639, 2
        %v4033 = vsel %vm3690, %v4032, %v4031
        %v4034 = vrot.slane %v3640, 1
        %v4035 = vsel %vm3693, %v4034, %v4033
        %v4036 = vrot.slane %v3642, 7
        %v4037 = vsel %vm3675, %v4036, %v3976
        %v4038 = vrot.slane %v3643, 6
        %v4039 = vsel %vm3678, %v4038, %v4037
        %v4040 = vrot.slane %v3644, 5
        %v4041 = vsel %vm3681, %v4040, %v4039
        %v4042 = vrot.slane %v3645, 4
        %v4043 = vsel %vm3684, %v4042, %v4041
        %v4044 = vrot.slane %v3646, 3
        %v4045 = vsel %vm3687, %v4044, %v4043
        %v4046 = vrot.slane %v3647, 2
        %v4047 = vsel %vm3690, %v4046, %v4045
        %v4048 = vrot.slane %v3648, 1
        %v4049 = vsel %vm3693, %v4048, %v4047
        %v4050 = vrot.slane %v3650, 7
        %v4051 = vsel %vm3675, %v4050, %v3977
        %v4052 = vrot.slane %v3651, 6
        %v4053 = vsel %vm3678, %v4052, %v4051
        %v4054 = vrot.slane %v3652, 5
        %v4055 = vsel %vm3681, %v4054, %v4053
        %v4056 = vrot.slane %v3653, 4
        %v4057 = vsel %vm3684, %v4056, %v4055
        %v4058 = vrot.slane %v3654, 3
        %v4059 = vsel %vm3687, %v4058, %v4057
        %v4060 = vrot.slane %v3655, 2
        %v4061 = vsel %vm3690, %v4060, %v4059
        %v4062 = vrot.slane %v3656, 1
        %v4063 = vsel %vm3693, %v4062, %v4061
        %v4064 = vrot.slane %v3658, 7
        %v4065 = vsel %vm3675, %v4064, %v3978
        %v4066 = vrot.slane %v3659, 6
        %v4067 = vsel %vm3678, %v4066, %v4065
        %v4068 = vrot.slane %v3660, 5
        %v4069 = vsel %vm3681, %v4068, %v4067
        %v4070 = vrot.slane %v3661, 4
        %v4071 = vsel %vm3684, %v4070, %v4069
        %v4072 = vrot.slane %v3662, 3
        %v4073 = vsel %vm3687, %v4072, %v4071
        %v4074 = vrot.slane %v3663, 2
        %v4075 = vsel %vm3690, %v4074, %v4073
        %v4076 = vrot.slane %v3664, 1
        %v4077 = vsel %vm3693, %v4076, %v4075
        %v4078 = vrot.slane %v3666, 7
        %v4079 = vsel %vm3675, %v4078, %v3979
        %v4080 = vrot.slane %v3667, 6
        %v4081 = vsel %vm3678, %v4080, %v4079
        %v4082 = vrot.slane %v3668, 5
        %v4083 = vsel %vm3681, %v4082, %v4081
        %v4084 = vrot.slane %v3669, 4
        %v4085 = vsel %vm3684, %v4084, %v4083
        %v4086 = vrot.slane %v3670, 3
        %v4087 = vsel %vm3687, %v4086, %v4085
        %v4088 = vrot.slane %v3671, 2
        %v4089 = vsel %vm3690, %v4088, %v4087
        %v4090 = vrot.slane %v3672, 1
        %v4091 = vsel %vm3693, %v4090, %v4089
        %v4092 = vpack.c.b16 %v4007, %v3993
        %v4093 = vpack.c.b16 %v4035, %v4021
        %v4094 = vpack.c.b16 %v4063, %v4049
        %v4095 = vpack.c.b16 %v4091, %v4077
        %v4111 = vunpack.c.l.b16 %v3507
        %v4112 = vunpack.c.h.b16 %v3507
        %v4113 = vunpack.c.l.b16 %v3508
        %v4114 = vunpack.c.h.b16 %v3508
        %v4115 = vunpack.c.l.b16 %v3509
        %v4116 = vunpack.c.h.b16 %v3509
        %v4117 = vunpack.c.l.b16 %v3510
        %v4118 = vunpack.c.h.b16 %v3510
        %v4119 = vunpack.c.l.b16 %v3511
        %v4120 = vunpack.c.h.b16 %v3511
        %v4121 = vunpack.c.l.b16 %v3512
        %v4122 = vunpack.c.h.b16 %v3512
        %v4123 = vunpack.c.l.b16 %v3513
        %v4124 = vunpack.c.h.b16 %v3513
        %v4125 = vunpack.c.l.b16 %v3514
        %v4126 = vunpack.c.h.b16 %v3514
        %v4127 = vunpack.c.l.b16 %v3515
        %v4128 = vunpack.c.h.b16 %v3515
        %v4129 = vunpack.c.l.b16 %v3516
        %v4130 = vunpack.c.h.b16 %v3516
        %v4131 = vunpack.c.l.b16 %v3517
        %v4132 = vunpack.c.h.b16 %v3517
        %v4133 = vunpack.c.l.b16 %v3518
        %v4134 = vunpack.c.h.b16 %v3518
        %v4135 = vunpack.c.l.b16 %v3519
        %v4136 = vunpack.c.h.b16 %v3519
        %v4137 = vunpack.c.l.b16 %v3520
        %v4138 = vunpack.c.h.b16 %v3520
        %v4139 = vunpack.c.l.b16 %v3521
        %v4140 = vunpack.c.h.b16 %v3521
        %v4141 = vpack.c.b16 %v4113, %v4111
        %v4142 = vpack.c.b16 %v4114, %v4112
        %v4143 = vpack.c.b16 %v4117, %v4115
        %v4144 = vpack.c.b16 %v4118, %v4116
        %v4145 = vpack.c.b16 %v4121, %v4119
        %v4146 = vpack.c.b16 %v4122, %v4120
        %v4147 = vpack.c.b16 %v4125, %v4123
        %v4148 = vpack.c.b16 %v4126, %v4124
        %v4149 = vpack.c.b16 %v4129, %v4127
        %v4150 = vpack.c.b16 %v4130, %v4128
        %v4151 = vpack.c.b16 %v4133, %v4131
        %v4152 = vpack.c.b16 %v4134, %v4132
        %v4153 = vpack.c.b16 %v4137, %v4135
        %v4154 = vpack.c.b16 %v4138, %v4136
        %v4155 = vpack.c.b16 %v4139, %v4139
        %v4156 = vpack.c.b16 %v4140, %v4140
        %v4172 = vsel %vm3872, %v4092, 0
        %v4175 = vsel %vm3872, %v4093, 0
        %v4178 = vsel %vm3872, %v4094, 0
        %v4181 = vsel %vm3872, %v4095, 0
        %v4184 = vsel %vm1660, %v4155, 0
        %v4187 = vsel %vm1660, %v4156, 0
        %4189 = vmatprep.subr.bf16.mxu0 %v4187
        %4190 = vmatpush1.bf16.msra.mxu0 %v4184
        %4191 = vmatprep.subr.bf16.mxu0 %v4154
        %4192 = vmatpush1.bf16.msra.mxu0 %v4153
        %4193 = vmatprep.subr.bf16.mxu0 %v4152
        %4194 = vmatpush1.bf16.msra.mxu0 %v4151
        %4195 = vmatprep.subr.bf16.mxu0 %v4150
        %4196 = vmatpush1.bf16.msra.mxu0 %v4149
        %4197 = vmatprep.subr.bf16.mxu0 %v4148
        %4198 = vmatpush1.bf16.msra.mxu0 %v4147
        %4199 = vmatprep.subr.bf16.mxu0 %v4146
        %4200 = vmatpush1.bf16.msra.mxu0 %v4145
        %4201 = vmatprep.subr.bf16.mxu0 %v4144
        %4202 = vmatpush1.bf16.msra.mxu0 %v4143
        %4203 = vmatprep.subr.bf16.mxu0 %v4142
        %4204 = vmatpush1.bf16.msra.mxu0 %v4141
        %4205 = vmatprep.subr.bf16.mxu0 0
        %4206 = vmatpush2.bf16.msra.mxu0 0
        %4207 = vmatprep.subr.bf16.mxu0 0
        %4208 = vmatpush2.bf16.msra.mxu0 0
        %4209 = vmatprep.subr.bf16.mxu0 0
        %4210 = vmatpush2.bf16.msra.mxu0 0
        %4211 = vmatprep.subr.bf16.mxu0 0
        %4212 = vmatpush2.bf16.msra.mxu0 0
        %4213 = vmatprep.subr.bf16.mxu0 0
        %4214 = vmatpush2.bf16.msra.mxu0 0
        %4215 = vmatprep.subr.bf16.mxu0 0
        %4216 = vmatpush2.bf16.msra.mxu0 0
        %4217 = vmatprep.subr.bf16.mxu0 0
        %4218 = vmatpush2.bf16.msra.mxu0 0
        %4219 = vmatprep.subr.bf16.mxu0 0
        %4220 = vmatpush2.bf16.msra.mxu0 0
        %4221 = vmatprep.mubr.bf16.mxu0 0
        %4222 = vmatmul.mubr.bf16.gmra.mxu0 %v4172
        %v4223 = vpop.f32.mrf.mxu0
        %v4224 = vadd.f32 %v3926, %v4223
        %v4225 = vpop.f32.mrf.mxu0
        %v4226 = vadd.f32 %v3928, %v4225
        %v4227 = vpop.f32.mrf.mxu0
        %v4228 = vadd.f32 %v3930, %v4227
        %v4229 = vpop.f32.mrf.mxu0
        %v4230 = vadd.f32 %v3932, %v4229
        %4231 = vmatprep.mubr.bf16.mxu0 0
        %4232 = vmatmul.mubr.bf16.gmra.mxu0 %v4175
        %v4233 = vpop.f32.mrf.mxu0
        %v4234 = vadd.f32 %v3936, %v4233
        %v4235 = vpop.f32.mrf.mxu0
        %v4236 = vadd.f32 %v3938, %v4235
        %v4237 = vpop.f32.mrf.mxu0
        %v4238 = vadd.f32 %v3940, %v4237
        %v4239 = vpop.f32.mrf.mxu0
        %v4240 = vadd.f32 %v3942, %v4239
        %4241 = vmatprep.mubr.bf16.mxu0 0
        %4242 = vmatmul.mubr.bf16.gmra.mxu0 %v4178
        %v4243 = vpop.f32.mrf.mxu0
        %v4244 = vadd.f32 %v3946, %v4243
        %v4245 = vpop.f32.mrf.mxu0
        %v4246 = vadd.f32 %v3948, %v4245
        %v4247 = vpop.f32.mrf.mxu0
        %v4248 = vadd.f32 %v3950, %v4247
        %v4249 = vpop.f32.mrf.mxu0
        %v4250 = vadd.f32 %v3952, %v4249
        %4251 = vmatprep.mubr.bf16.mxu0 0
        %4252 = vmatmul.mubr.bf16.gmra.mxu0 %v4181
        %v4253 = vpop.f32.mrf.mxu0
        %v4254 = vadd.f32 %v3956, %v4253
        %v4255 = vpop.f32.mrf.mxu0
        %v4256 = vadd.f32 %v3958, %v4255
        %v4257 = vpop.f32.mrf.mxu0
        %v4258 = vadd.f32 %v3960, %v4257
        %v4259 = vpop.f32.mrf.mxu0
        %v4260 = vadd.f32 %v3962, %v4259
        %4261 = vdwg.mxu0
        %v4262 = vpack.c.bf16 %v3356, %v3356
        %v4263 = vpack.c.bf16 %v3368, %v3368
        %v4264 = vpack.c.bf16 %v3380, %v3380
        %v4265 = vpack.c.bf16 %v3392, %v3392
        %v4266 = vpack.c.bf16 %v3404, %v3404
        %v4267 = vpack.c.bf16 %v3416, %v3416
        %v4268 = vpack.c.bf16 %v3428, %v3428
        %v4269 = vpack.c.bf16 %v3440, %v3440
        %s4270 = scalar_lea.vmem %s3, 240
        %v4271 = vld [vmem:[%s4270] sm:$0xff]
        %v4272 = vld [vmem:[%s4270 + $0x8] sm:$0xff]
        %v4273 = vld [vmem:[%s4270 + $0x10] sm:$0xff]
        %v4274 = vld [vmem:[%s4270 + $0x18] sm:$0xff]
        %v4275 = vld [vmem:[%s4270 + $0x20] sm:$0xff]
        %v4276 = vld [vmem:[%s4270 + $0x28] sm:$0xff]
        %v4277 = vld [vmem:[%s4270 + $0x30] sm:$0xff]
        %v4278 = vld [vmem:[%s4270 + $0x38] sm:$0xff]
        %v4279 = vld [vmem:[%s4270 + $0x40] sm:$0xff]
        %v4280 = vld [vmem:[%s4270 + $0x48] sm:$0xff]
        %v4281 = vld [vmem:[%s4270 + $0x50] sm:$0xff]
        %v4282 = vld [vmem:[%s4270 + $0x58] sm:$0xff]
        %v4283 = vld [vmem:[%s4270 + $0x60] sm:$0xff]
        %v4284 = vld [vmem:[%s4270 + $0x68] sm:$0xff]
        %v4285 = vld [vmem:[%s4270 + $0x70] sm:$0xff]
        %v4294 = vunpack.c.l.b16 %v4262
        %v4295 = vunpack.c.l.b16 %v4263
        %v4296 = vunpack.c.l.b16 %v4264
        %v4297 = vunpack.c.l.b16 %v4265
        %v4298 = vunpack.c.l.b16 %v4266
        %v4299 = vunpack.c.l.b16 %v4267
        %v4300 = vunpack.c.l.b16 %v4268
        %v4301 = vunpack.c.l.b16 %v4269
        %v4302 = vrot.slane %v3612, 7
        %v4303 = vsel %vm3675, %v4302, %v3611
        %v4304 = vrot.slane %v3613, 6
        %v4305 = vsel %vm3678, %v4304, %v4303
        %v4306 = vrot.slane %v3614, 5
        %v4307 = vsel %vm3681, %v4306, %v4305
        %v4308 = vrot.slane %v3615, 4
        %v4309 = vsel %vm3684, %v4308, %v4307
        %v4310 = vrot.slane %v3616, 3
        %v4311 = vsel %vm3687, %v4310, %v4309
        %v4312 = vrot.slane %v3617, 2
        %v4313 = vsel %vm3690, %v4312, %v4311
        %v4314 = vrot.slane %v4294, 1
        %v4315 = vsel %vm3693, %v4314, %v4313
        %v4316 = vrot.slane %v3620, 7
        %v4317 = vsel %vm3675, %v4316, %v3619
        %v4318 = vrot.slane %v3621, 6
        %v4319 = vsel %vm3678, %v4318, %v4317
        %v4320 = vrot.slane %v3622, 5
        %v4321 = vsel %vm3681, %v4320, %v4319
        %v4322 = vrot.slane %v3623, 4
        %v4323 = vsel %vm3684, %v4322, %v4321
        %v4324 = vrot.slane %v3624, 3
        %v4325 = vsel %vm3687, %v4324, %v4323
        %v4326 = vrot.slane %v3625, 2
        %v4327 = vsel %vm3690, %v4326, %v4325
        %v4328 = vrot.slane %v4295, 1
        %v4329 = vsel %vm3693, %v4328, %v4327
        %v4330 = vrot.slane %v3628, 7
        %v4331 = vsel %vm3675, %v4330, %v3627
        %v4332 = vrot.slane %v3629, 6
        %v4333 = vsel %vm3678, %v4332, %v4331
        %v4334 = vrot.slane %v3630, 5
        %v4335 = vsel %vm3681, %v4334, %v4333
        %v4336 = vrot.slane %v3631, 4
        %v4337 = vsel %vm3684, %v4336, %v4335
        %v4338 = vrot.slane %v3632, 3
        %v4339 = vsel %vm3687, %v4338, %v4337
        %v4340 = vrot.slane %v3633, 2
        %v4341 = vsel %vm3690, %v4340, %v4339
        %v4342 = vrot.slane %v4296, 1
        %v4343 = vsel %vm3693, %v4342, %v4341
        %v4344 = vrot.slane %v3636, 7
        %v4345 = vsel %vm3675, %v4344, %v3635
        %v4346 = vrot.slane %v3637, 6
        %v4347 = vsel %vm3678, %v4346, %v4345
        %v4348 = vrot.slane %v3638, 5
        %v4349 = vsel %vm3681, %v4348, %v4347
        %v4350 = vrot.slane %v3639, 4
        %v4351 = vsel %vm3684, %v4350, %v4349
        %v4352 = vrot.slane %v3640, 3
        %v4353 = vsel %vm3687, %v4352, %v4351
        %v4354 = vrot.slane %v3641, 2
        %v4355 = vsel %vm3690, %v4354, %v4353
        %v4356 = vrot.slane %v4297, 1
        %v4357 = vsel %vm3693, %v4356, %v4355
        %v4358 = vrot.slane %v3644, 7
        %v4359 = vsel %vm3675, %v4358, %v3643
        %v4360 = vrot.slane %v3645, 6
        %v4361 = vsel %vm3678, %v4360, %v4359
        %v4362 = vrot.slane %v3646, 5
        %v4363 = vsel %vm3681, %v4362, %v4361
        %v4364 = vrot.slane %v3647, 4
        %v4365 = vsel %vm3684, %v4364, %v4363
        %v4366 = vrot.slane %v3648, 3
        %v4367 = vsel %vm3687, %v4366, %v4365
        %v4368 = vrot.slane %v3649, 2
        %v4369 = vsel %vm3690, %v4368, %v4367
        %v4370 = vrot.slane %v4298, 1
        %v4371 = vsel %vm3693, %v4370, %v4369
        %v4372 = vrot.slane %v3652, 7
        %v4373 = vsel %vm3675, %v4372, %v3651
        %v4374 = vrot.slane %v3653, 6
        %v4375 = vsel %vm3678, %v4374, %v4373
        %v4376 = vrot.slane %v3654, 5
        %v4377 = vsel %vm3681, %v4376, %v4375
        %v4378 = vrot.slane %v3655, 4
        %v4379 = vsel %vm3684, %v4378, %v4377
        %v4380 = vrot.slane %v3656, 3
        %v4381 = vsel %vm3687, %v4380, %v4379
        %v4382 = vrot.slane %v3657, 2
        %v4383 = vsel %vm3690, %v4382, %v4381
        %v4384 = vrot.slane %v4299, 1
        %v4385 = vsel %vm3693, %v4384, %v4383
        %v4386 = vrot.slane %v3660, 7
        %v4387 = vsel %vm3675, %v4386, %v3659
        %v4388 = vrot.slane %v3661, 6
        %v4389 = vsel %vm3678, %v4388, %v4387
        %v4390 = vrot.slane %v3662, 5
        %v4391 = vsel %vm3681, %v4390, %v4389
        %v4392 = vrot.slane %v3663, 4
        %v4393 = vsel %vm3684, %v4392, %v4391
        %v4394 = vrot.slane %v3664, 3
        %v4395 = vsel %vm3687, %v4394, %v4393
        %v4396 = vrot.slane %v3665, 2
        %v4397 = vsel %vm3690, %v4396, %v4395
        %v4398 = vrot.slane %v4300, 1
        %v4399 = vsel %vm3693, %v4398, %v4397
        %v4400 = vrot.slane %v3668, 7
        %v4401 = vsel %vm3675, %v4400, %v3667
        %v4402 = vrot.slane %v3669, 6
        %v4403 = vsel %vm3678, %v4402, %v4401
        %v4404 = vrot.slane %v3670, 5
        %v4405 = vsel %vm3681, %v4404, %v4403
        %v4406 = vrot.slane %v3671, 4
        %v4407 = vsel %vm3684, %v4406, %v4405
        %v4408 = vrot.slane %v3672, 3
        %v4409 = vsel %vm3687, %v4408, %v4407
        %v4410 = vrot.slane %v3673, 2
        %v4411 = vsel %vm3690, %v4410, %v4409
        %v4412 = vrot.slane %v4301, 1
        %v4413 = vsel %vm3693, %v4412, %v4411
        %v4414 = vpack.c.b16 %v4329, %v4315
        %v4415 = vpack.c.b16 %v4357, %v4343
        %v4416 = vpack.c.b16 %v4385, %v4371
        %v4417 = vpack.c.b16 %v4413, %v4399
        %v4433 = vunpack.c.l.b16 %v4271
        %v4434 = vunpack.c.h.b16 %v4271
        %v4435 = vunpack.c.l.b16 %v4272
        %v4436 = vunpack.c.h.b16 %v4272
        %v4437 = vunpack.c.l.b16 %v4273
        %v4438 = vunpack.c.h.b16 %v4273
        %v4439 = vunpack.c.l.b16 %v4274
        %v4440 = vunpack.c.h.b16 %v4274
        %v4441 = vunpack.c.l.b16 %v4275
        %v4442 = vunpack.c.h.b16 %v4275
        %v4443 = vunpack.c.l.b16 %v4276
        %v4444 = vunpack.c.h.b16 %v4276
        %v4445 = vunpack.c.l.b16 %v4277
        %v4446 = vunpack.c.h.b16 %v4277
        %v4447 = vunpack.c.l.b16 %v4278
        %v4448 = vunpack.c.h.b16 %v4278
        %v4449 = vunpack.c.l.b16 %v4279
        %v4450 = vunpack.c.h.b16 %v4279
        %v4451 = vunpack.c.l.b16 %v4280
        %v4452 = vunpack.c.h.b16 %v4280
        %v4453 = vunpack.c.l.b16 %v4281
        %v4454 = vunpack.c.h.b16 %v4281
        %v4455 = vunpack.c.l.b16 %v4282
        %v4456 = vunpack.c.h.b16 %v4282
        %v4457 = vunpack.c.l.b16 %v4283
        %v4458 = vunpack.c.h.b16 %v4283
        %v4459 = vunpack.c.l.b16 %v4284
        %v4460 = vunpack.c.h.b16 %v4284
        %v4461 = vunpack.c.l.b16 %v4285
        %v4462 = vunpack.c.h.b16 %v4285
        %v4463 = vpack.c.b16 %v4435, %v4433
        %v4464 = vpack.c.b16 %v4436, %v4434
        %v4465 = vpack.c.b16 %v4439, %v4437
        %v4466 = vpack.c.b16 %v4440, %v4438
        %v4467 = vpack.c.b16 %v4443, %v4441
        %v4468 = vpack.c.b16 %v4444, %v4442
        %v4469 = vpack.c.b16 %v4447, %v4445
        %v4470 = vpack.c.b16 %v4448, %v4446
        %v4471 = vpack.c.b16 %v4451, %v4449
        %v4472 = vpack.c.b16 %v4452, %v4450
        %v4473 = vpack.c.b16 %v4455, %v4453
        %v4474 = vpack.c.b16 %v4456, %v4454
        %v4475 = vpack.c.b16 %v4459, %v4457
        %v4476 = vpack.c.b16 %v4460, %v4458
        %v4477 = vpack.c.b16 %v4461, %v4461
        %v4478 = vpack.c.b16 %v4462, %v4462
        %v4494 = vsel %vm3872, %v4414, 0
        %v4497 = vsel %vm3872, %v4415, 0
        %v4500 = vsel %vm3872, %v4416, 0
        %v4503 = vsel %vm3872, %v4417, 0
        %v4506 = vsel %vm1660, %v4477, 0
        %v4509 = vsel %vm1660, %v4478, 0
        %4511 = vmatprep.subr.bf16.mxu0 %v4509
        %4512 = vmatpush1.bf16.msra.mxu0 %v4506
        %4513 = vmatprep.subr.bf16.mxu0 %v4476
        %4514 = vmatpush1.bf16.msra.mxu0 %v4475
        %4515 = vmatprep.subr.bf16.mxu0 %v4474
        %4516 = vmatpush1.bf16.msra.mxu0 %v4473
        %4517 = vmatprep.subr.bf16.mxu0 %v4472
        %4518 = vmatpush1.bf16.msra.mxu0 %v4471
        %4519 = vmatprep.subr.bf16.mxu0 %v4470
        %4520 = vmatpush1.bf16.msra.mxu0 %v4469
        %4521 = vmatprep.subr.bf16.mxu0 %v4468
        %4522 = vmatpush1.bf16.msra.mxu0 %v4467
        %4523 = vmatprep.subr.bf16.mxu0 %v4466
        %4524 = vmatpush1.bf16.msra.mxu0 %v4465
        %4525 = vmatprep.subr.bf16.mxu0 %v4464
        %4526 = vmatpush1.bf16.msra.mxu0 %v4463
        %4527 = vmatprep.subr.bf16.mxu0 0
        %4528 = vmatpush2.bf16.msra.mxu0 0
        %4529 = vmatprep.subr.bf16.mxu0 0
        %4530 = vmatpush2.bf16.msra.mxu0 0
        %4531 = vmatprep.subr.bf16.mxu0 0
        %4532 = vmatpush2.bf16.msra.mxu0 0
        %4533 = vmatprep.subr.bf16.mxu0 0
        %4534 = vmatpush2.bf16.msra.mxu0 0
        %4535 = vmatprep.subr.bf16.mxu0 0
        %4536 = vmatpush2.bf16.msra.mxu0 0
        %4537 = vmatprep.subr.bf16.mxu0 0
        %4538 = vmatpush2.bf16.msra.mxu0 0
        %4539 = vmatprep.subr.bf16.mxu0 0
        %4540 = vmatpush2.bf16.msra.mxu0 0
        %4541 = vmatprep.subr.bf16.mxu0 0
        %4542 = vmatpush2.bf16.msra.mxu0 0
        %4543 = vmatprep.mubr.bf16.mxu0 0
        %4544 = vmatmul.mubr.bf16.gmra.mxu0 %v4494
        %v4545 = vpop.f32.mrf.mxu0
        %v4546 = vadd.f32 0.0, %v4545
        %v4547 = vpop.f32.mrf.mxu0
        %v4548 = vadd.f32 0.0, %v4547
        %v4549 = vpop.f32.mrf.mxu0
        %v4550 = vadd.f32 0.0, %v4549
        %v4551 = vpop.f32.mrf.mxu0
        %v4552 = vadd.f32 0.0, %v4551
        %4553 = vmatprep.mubr.bf16.mxu0 0
        %4554 = vmatmul.mubr.bf16.gmra.mxu0 %v4497
        %v4555 = vpop.f32.mrf.mxu0
        %v4556 = vadd.f32 0.0, %v4555
        %v4557 = vpop.f32.mrf.mxu0
        %v4558 = vadd.f32 0.0, %v4557
        %v4559 = vpop.f32.mrf.mxu0
        %v4560 = vadd.f32 0.0, %v4559
        %v4561 = vpop.f32.mrf.mxu0
        %v4562 = vadd.f32 0.0, %v4561
        %4563 = vmatprep.mubr.bf16.mxu0 0
        %4564 = vmatmul.mubr.bf16.gmra.mxu0 %v4500
        %v4565 = vpop.f32.mrf.mxu0
        %v4566 = vadd.f32 0.0, %v4565
        %v4567 = vpop.f32.mrf.mxu0
        %v4568 = vadd.f32 0.0, %v4567
        %v4569 = vpop.f32.mrf.mxu0
        %v4570 = vadd.f32 0.0, %v4569
        %v4571 = vpop.f32.mrf.mxu0
        %v4572 = vadd.f32 0.0, %v4571
        %4573 = vmatprep.mubr.bf16.mxu0 0
        %4574 = vmatmul.mubr.bf16.gmra.mxu0 %v4503
        %v4575 = vpop.f32.mrf.mxu0
        %v4576 = vadd.f32 0.0, %v4575
        %v4577 = vpop.f32.mrf.mxu0
        %v4578 = vadd.f32 0.0, %v4577
        %v4579 = vpop.f32.mrf.mxu0
        %v4580 = vadd.f32 0.0, %v4579
        %v4581 = vpop.f32.mrf.mxu0
        %v4582 = vadd.f32 0.0, %v4581
        %4583 = vdwg.mxu0
        %v4584 = vadd.f32 %v4224, %v4546
        %v4585 = vadd.f32 %v4226, %v4548
        %v4586 = vadd.f32 %v4228, %v4550
        %v4587 = vadd.f32 %v4230, %v4552
        %v4588 = vadd.f32 %v4234, %v4556
        %v4589 = vadd.f32 %v4236, %v4558
        %v4590 = vadd.f32 %v4238, %v4560
        %v4591 = vadd.f32 %v4240, %v4562
        %v4592 = vadd.f32 %v4244, %v4566
        %v4593 = vadd.f32 %v4246, %v4568
        %v4594 = vadd.f32 %v4248, %v4570
        %v4595 = vadd.f32 %v4250, %v4572
        %v4596 = vadd.f32 %v4254, %v4576
        %v4597 = vadd.f32 %v4256, %v4578
        %v4598 = vadd.f32 %v4258, %v4580
        %v4599 = vadd.f32 %v4260, %v4582
        %v4600 = vpack.c.bf16 %v3357, %v3357
        %v4601 = vpack.c.bf16 %v3369, %v3369
        %v4602 = vpack.c.bf16 %v3381, %v3381
        %v4603 = vpack.c.bf16 %v3393, %v3393
        %v4604 = vpack.c.bf16 %v3405, %v3405
        %v4605 = vpack.c.bf16 %v3417, %v3417
        %v4606 = vpack.c.bf16 %v3429, %v3429
        %v4607 = vpack.c.bf16 %v3441, %v3441
        %s4608 = scalar_lea.vmem %s3, 360
        %v4609 = vld [vmem:[%s4608] sm:$0xff]
        %v4610 = vld [vmem:[%s4608 + $0x8] sm:$0xff]
        %v4611 = vld [vmem:[%s4608 + $0x10] sm:$0xff]
        %v4612 = vld [vmem:[%s4608 + $0x18] sm:$0xff]
        %v4613 = vld [vmem:[%s4608 + $0x20] sm:$0xff]
        %v4614 = vld [vmem:[%s4608 + $0x28] sm:$0xff]
        %v4615 = vld [vmem:[%s4608 + $0x30] sm:$0xff]
        %v4616 = vld [vmem:[%s4608 + $0x38] sm:$0xff]
        %v4617 = vld [vmem:[%s4608 + $0x40] sm:$0xff]
        %v4618 = vld [vmem:[%s4608 + $0x48] sm:$0xff]
        %v4619 = vld [vmem:[%s4608 + $0x50] sm:$0xff]
        %v4620 = vld [vmem:[%s4608 + $0x58] sm:$0xff]
        %v4621 = vld [vmem:[%s4608 + $0x60] sm:$0xff]
        %v4622 = vld [vmem:[%s4608 + $0x68] sm:$0xff]
        %v4623 = vld [vmem:[%s4608 + $0x70] sm:$0xff]
        %v4632 = vunpack.c.l.b16 %v4600
        %v4633 = vunpack.c.l.b16 %v4601
        %v4634 = vunpack.c.l.b16 %v4602
        %v4635 = vunpack.c.l.b16 %v4603
        %v4636 = vunpack.c.l.b16 %v4604
        %v4637 = vunpack.c.l.b16 %v4605
        %v4638 = vunpack.c.l.b16 %v4606
        %v4639 = vunpack.c.l.b16 %v4607
        %v4640 = vrot.slane %v3613, 7
        %v4641 = vsel %vm3675, %v4640, %v3612
        %v4642 = vrot.slane %v3614, 6
        %v4643 = vsel %vm3678, %v4642, %v4641
        %v4644 = vrot.slane %v3615, 5
        %v4645 = vsel %vm3681, %v4644, %v4643
        %v4646 = vrot.slane %v3616, 4
        %v4647 = vsel %vm3684, %v4646, %v4645
        %v4648 = vrot.slane %v3617, 3
        %v4649 = vsel %vm3687, %v4648, %v4647
        %v4650 = vrot.slane %v4294, 2
        %v4651 = vsel %vm3690, %v4650, %v4649
        %v4652 = vrot.slane %v4632, 1
        %v4653 = vsel %vm3693, %v4652, %v4651
        %v4654 = vrot.slane %v3621, 7
        %v4655 = vsel %vm3675, %v4654, %v3620
        %v4656 = vrot.slane %v3622, 6
        %v4657 = vsel %vm3678, %v4656, %v4655
        %v4658 = vrot.slane %v3623, 5
        %v4659 = vsel %vm3681, %v4658, %v4657
        %v4660 = vrot.slane %v3624, 4
        %v4661 = vsel %vm3684, %v4660, %v4659
        %v4662 = vrot.slane %v3625, 3
        %v4663 = vsel %vm3687, %v4662, %v4661
        %v4664 = vrot.slane %v4295, 2
        %v4665 = vsel %vm3690, %v4664, %v4663
        %v4666 = vrot.slane %v4633, 1
        %v4667 = vsel %vm3693, %v4666, %v4665
        %v4668 = vrot.slane %v3629, 7
        %v4669 = vsel %vm3675, %v4668, %v3628
        %v4670 = vrot.slane %v3630, 6
        %v4671 = vsel %vm3678, %v4670, %v4669
        %v4672 = vrot.slane %v3631, 5
        %v4673 = vsel %vm3681, %v4672, %v4671
        %v4674 = vrot.slane %v3632, 4
        %v4675 = vsel %vm3684, %v4674, %v4673
        %v4676 = vrot.slane %v3633, 3
        %v4677 = vsel %vm3687, %v4676, %v4675
        %v4678 = vrot.slane %v4296, 2
        %v4679 = vsel %vm3690, %v4678, %v4677
        %v4680 = vrot.slane %v4634, 1
        %v4681 = vsel %vm3693, %v4680, %v4679
        %v4682 = vrot.slane %v3637, 7
        %v4683 = vsel %vm3675, %v4682, %v3636
        %v4684 = vrot.slane %v3638, 6
        %v4685 = vsel %vm3678, %v4684, %v4683
        %v4686 = vrot.slane %v3639, 5
        %v4687 = vsel %vm3681, %v4686, %v4685
        %v4688 = vrot.slane %v3640, 4
        %v4689 = vsel %vm3684, %v4688, %v4687
        %v4690 = vrot.slane %v3641, 3
        %v4691 = vsel %vm3687, %v4690, %v4689
        %v4692 = vrot.slane %v4297, 2
        %v4693 = vsel %vm3690, %v4692, %v4691
        %v4694 = vrot.slane %v4635, 1
        %v4695 = vsel %vm3693, %v4694, %v4693
        %v4696 = vrot.slane %v3645, 7
        %v4697 = vsel %vm3675, %v4696, %v3644
        %v4698 = vrot.slane %v3646, 6
        %v4699 = vsel %vm3678, %v4698, %v4697
        %v4700 = vrot.slane %v3647, 5
        %v4701 = vsel %vm3681, %v4700, %v4699
        %v4702 = vrot.slane %v3648, 4
        %v4703 = vsel %vm3684, %v4702, %v4701
        %v4704 = vrot.slane %v3649, 3
        %v4705 = vsel %vm3687, %v4704, %v4703
        %v4706 = vrot.slane %v4298, 2
        %v4707 = vsel %vm3690, %v4706, %v4705
        %v4708 = vrot.slane %v4636, 1
        %v4709 = vsel %vm3693, %v4708, %v4707
        %v4710 = vrot.slane %v3653, 7
        %v4711 = vsel %vm3675, %v4710, %v3652
        %v4712 = vrot.slane %v3654, 6
        %v4713 = vsel %vm3678, %v4712, %v4711
        %v4714 = vrot.slane %v3655, 5
        %v4715 = vsel %vm3681, %v4714, %v4713
        %v4716 = vrot.slane %v3656, 4
        %v4717 = vsel %vm3684, %v4716, %v4715
        %v4718 = vrot.slane %v3657, 3
        %v4719 = vsel %vm3687, %v4718, %v4717
        %v4720 = vrot.slane %v4299, 2
        %v4721 = vsel %vm3690, %v4720, %v4719
        %v4722 = vrot.slane %v4637, 1
        %v4723 = vsel %vm3693, %v4722, %v4721
        %v4724 = vrot.slane %v3661, 7
        %v4725 = vsel %vm3675, %v4724, %v3660
        %v4726 = vrot.slane %v3662, 6
        %v4727 = vsel %vm3678, %v4726, %v4725
        %v4728 = vrot.slane %v3663, 5
        %v4729 = vsel %vm3681, %v4728, %v4727
        %v4730 = vrot.slane %v3664, 4
        %v4731 = vsel %vm3684, %v4730, %v4729
        %v4732 = vrot.slane %v3665, 3
        %v4733 = vsel %vm3687, %v4732, %v4731
        %v4734 = vrot.slane %v4300, 2
        %v4735 = vsel %vm3690, %v4734, %v4733
        %v4736 = vrot.slane %v4638, 1
        %v4737 = vsel %vm3693, %v4736, %v4735
        %v4738 = vrot.slane %v3669, 7
        %v4739 = vsel %vm3675, %v4738, %v3668
        %v4740 = vrot.slane %v3670, 6
        %v4741 = vsel %vm3678, %v4740, %v4739
        %v4742 = vrot.slane %v3671, 5
        %v4743 = vsel %vm3681, %v4742, %v4741
        %v4744 = vrot.slane %v3672, 4
        %v4745 = vsel %vm3684, %v4744, %v4743
        %v4746 = vrot.slane %v3673, 3
        %v4747 = vsel %vm3687, %v4746, %v4745
        %v4748 = vrot.slane %v4301, 2
        %v4749 = vsel %vm3690, %v4748, %v4747
        %v4750 = vrot.slane %v4639, 1
        %v4751 = vsel %vm3693, %v4750, %v4749
        %v4752 = vpack.c.b16 %v4667, %v4653
        %v4753 = vpack.c.b16 %v4695, %v4681
        %v4754 = vpack.c.b16 %v4723, %v4709
        %v4755 = vpack.c.b16 %v4751, %v4737
        %v4771 = vunpack.c.l.b16 %v4609
        %v4772 = vunpack.c.h.b16 %v4609
        %v4773 = vunpack.c.l.b16 %v4610
        %v4774 = vunpack.c.h.b16 %v4610
        %v4775 = vunpack.c.l.b16 %v4611
        %v4776 = vunpack.c.h.b16 %v4611
        %v4777 = vunpack.c.l.b16 %v4612
        %v4778 = vunpack.c.h.b16 %v4612
        %v4779 = vunpack.c.l.b16 %v4613
        %v4780 = vunpack.c.h.b16 %v4613
        %v4781 = vunpack.c.l.b16 %v4614
        %v4782 = vunpack.c.h.b16 %v4614
        %v4783 = vunpack.c.l.b16 %v4615
        %v4784 = vunpack.c.h.b16 %v4615
        %v4785 = vunpack.c.l.b16 %v4616
        %v4786 = vunpack.c.h.b16 %v4616
        %v4787 = vunpack.c.l.b16 %v4617
        %v4788 = vunpack.c.h.b16 %v4617
        %v4789 = vunpack.c.l.b16 %v4618
        %v4790 = vunpack.c.h.b16 %v4618
        %v4791 = vunpack.c.l.b16 %v4619
        %v4792 = vunpack.c.h.b16 %v4619
        %v4793 = vunpack.c.l.b16 %v4620
        %v4794 = vunpack.c.h.b16 %v4620
        %v4795 = vunpack.c.l.b16 %v4621
        %v4796 = vunpack.c.h.b16 %v4621
        %v4797 = vunpack.c.l.b16 %v4622
        %v4798 = vunpack.c.h.b16 %v4622
        %v4799 = vunpack.c.l.b16 %v4623
        %v4800 = vunpack.c.h.b16 %v4623
        %v4801 = vpack.c.b16 %v4773, %v4771
        %v4802 = vpack.c.b16 %v4774, %v4772
        %v4803 = vpack.c.b16 %v4777, %v4775
        %v4804 = vpack.c.b16 %v4778, %v4776
        %v4805 = vpack.c.b16 %v4781, %v4779
        %v4806 = vpack.c.b16 %v4782, %v4780
        %v4807 = vpack.c.b16 %v4785, %v4783
        %v4808 = vpack.c.b16 %v4786, %v4784
        %v4809 = vpack.c.b16 %v4789, %v4787
        %v4810 = vpack.c.b16 %v4790, %v4788
        %v4811 = vpack.c.b16 %v4793, %v4791
        %v4812 = vpack.c.b16 %v4794, %v4792
        %v4813 = vpack.c.b16 %v4797, %v4795
        %v4814 = vpack.c.b16 %v4798, %v4796
        %v4815 = vpack.c.b16 %v4799, %v4799
        %v4816 = vpack.c.b16 %v4800, %v4800
        %v4832 = vsel %vm3872, %v4752, 0
        %v4835 = vsel %vm3872, %v4753, 0
        %v4838 = vsel %vm3872, %v4754, 0
        %v4841 = vsel %vm3872, %v4755, 0
        %v4844 = vsel %vm1660, %v4815, 0
        %v4847 = vsel %vm1660, %v4816, 0
        %4849 = vmatprep.subr.bf16.mxu0 %v4847
        %4850 = vmatpush1.bf16.msra.mxu0 %v4844
        %4851 = vmatprep.subr.bf16.mxu0 %v4814
        %4852 = vmatpush1.bf16.msra.mxu0 %v4813
        %4853 = vmatprep.subr.bf16.mxu0 %v4812
        %4854 = vmatpush1.bf16.msra.mxu0 %v4811
        %4855 = vmatprep.subr.bf16.mxu0 %v4810
        %4856 = vmatpush1.bf16.msra.mxu0 %v4809
        %4857 = vmatprep.subr.bf16.mxu0 %v4808
        %4858 = vmatpush1.bf16.msra.mxu0 %v4807
        %4859 = vmatprep.subr.bf16.mxu0 %v4806
        %4860 = vmatpush1.bf16.msra.mxu0 %v4805
        %4861 = vmatprep.subr.bf16.mxu0 %v4804
        %4862 = vmatpush1.bf16.msra.mxu0 %v4803
        %4863 = vmatprep.subr.bf16.mxu0 %v4802
        %4864 = vmatpush1.bf16.msra.mxu0 %v4801
        %4865 = vmatprep.subr.bf16.mxu0 0
        %4866 = vmatpush2.bf16.msra.mxu0 0
        %4867 = vmatprep.subr.bf16.mxu0 0
        %4868 = vmatpush2.bf16.msra.mxu0 0
        %4869 = vmatprep.subr.bf16.mxu0 0
        %4870 = vmatpush2.bf16.msra.mxu0 0
        %4871 = vmatprep.subr.bf16.mxu0 0
        %4872 = vmatpush2.bf16.msra.mxu0 0
        %4873 = vmatprep.subr.bf16.mxu0 0
        %4874 = vmatpush2.bf16.msra.mxu0 0
        %4875 = vmatprep.subr.bf16.mxu0 0
        %4876 = vmatpush2.bf16.msra.mxu0 0
        %4877 = vmatprep.subr.bf16.mxu0 0
        %4878 = vmatpush2.bf16.msra.mxu0 0
        %4879 = vmatprep.subr.bf16.mxu0 0
        %4880 = vmatpush2.bf16.msra.mxu0 0
        %4881 = vmatprep.mubr.bf16.mxu0 0
        %4882 = vmatmul.mubr.bf16.gmra.mxu0 %v4832
        %v4883 = vpop.f32.mrf.mxu0
        %v4884 = vadd.f32 0.0, %v4883
        %v4885 = vpop.f32.mrf.mxu0
        %v4886 = vadd.f32 0.0, %v4885
        %v4887 = vpop.f32.mrf.mxu0
        %v4888 = vadd.f32 0.0, %v4887
        %v4889 = vpop.f32.mrf.mxu0
        %v4890 = vadd.f32 0.0, %v4889
        %4891 = vmatprep.mubr.bf16.mxu0 0
        %4892 = vmatmul.mubr.bf16.gmra.mxu0 %v4835
        %v4893 = vpop.f32.mrf.mxu0
        %v4894 = vadd.f32 0.0, %v4893
        %v4895 = vpop.f32.mrf.mxu0
        %v4896 = vadd.f32 0.0, %v4895
        %v4897 = vpop.f32.mrf.mxu0
        %v4898 = vadd.f32 0.0, %v4897
        %v4899 = vpop.f32.mrf.mxu0
        %v4900 = vadd.f32 0.0, %v4899
        %4901 = vmatprep.mubr.bf16.mxu0 0
        %4902 = vmatmul.mubr.bf16.gmra.mxu0 %v4838
        %v4903 = vpop.f32.mrf.mxu0
        %v4904 = vadd.f32 0.0, %v4903
        %v4905 = vpop.f32.mrf.mxu0
        %v4906 = vadd.f32 0.0, %v4905
        %v4907 = vpop.f32.mrf.mxu0
        %v4908 = vadd.f32 0.0, %v4907
        %v4909 = vpop.f32.mrf.mxu0
        %v4910 = vadd.f32 0.0, %v4909
        %4911 = vmatprep.mubr.bf16.mxu0 0
        %4912 = vmatmul.mubr.bf16.gmra.mxu0 %v4841
        %v4913 = vpop.f32.mrf.mxu0
        %v4914 = vadd.f32 0.0, %v4913
        %v4915 = vpop.f32.mrf.mxu0
        %v4916 = vadd.f32 0.0, %v4915
        %v4917 = vpop.f32.mrf.mxu0
        %v4918 = vadd.f32 0.0, %v4917
        %v4919 = vpop.f32.mrf.mxu0
        %v4920 = vadd.f32 0.0, %v4919
        %4921 = vdwg.mxu0
        %v4922 = vadd.f32 %v4584, %v4884
        %v4923 = vadd.f32 %v4585, %v4886
        %v4924 = vadd.f32 %v4586, %v4888
        %v4925 = vadd.f32 %v4587, %v4890
        %v4926 = vadd.f32 %v4588, %v4894
        %v4927 = vadd.f32 %v4589, %v4896
        %v4928 = vadd.f32 %v4590, %v4898
        %v4929 = vadd.f32 %v4591, %v4900
        %v4930 = vadd.f32 %v4592, %v4904
        %v4931 = vadd.f32 %v4593, %v4906
        %v4932 = vadd.f32 %v4594, %v4908
        %v4933 = vadd.f32 %v4595, %v4910
        %v4934 = vadd.f32 %v4596, %v4914
        %v4935 = vadd.f32 %v4597, %v4916
        %v4936 = vadd.f32 %v4598, %v4918
        %v4937 = vadd.f32 %v4599, %v4920
        %v4938 = vpack.c.bf16 %v3358, %v3358
        %v4939 = vpack.c.bf16 %v3370, %v3370
        %v4940 = vpack.c.bf16 %v3382, %v3382
        %v4941 = vpack.c.bf16 %v3394, %v3394
        %v4942 = vpack.c.bf16 %v3406, %v3406
        %v4943 = vpack.c.bf16 %v3418, %v3418
        %v4944 = vpack.c.bf16 %v3430, %v3430
        %v4945 = vpack.c.bf16 %v3442, %v3442
        %s4946 = scalar_lea.vmem %s3, 480
        %v4947 = vld [vmem:[%s4946] sm:$0xff]
        %v4948 = vld [vmem:[%s4946 + $0x8] sm:$0xff]
        %v4949 = vld [vmem:[%s4946 + $0x10] sm:$0xff]
        %v4950 = vld [vmem:[%s4946 + $0x18] sm:$0xff]
        %v4951 = vld [vmem:[%s4946 + $0x20] sm:$0xff]
        %v4952 = vld [vmem:[%s4946 + $0x28] sm:$0xff]
        %v4953 = vld [vmem:[%s4946 + $0x30] sm:$0xff]
        %v4954 = vld [vmem:[%s4946 + $0x38] sm:$0xff]
        %v4955 = vld [vmem:[%s4946 + $0x40] sm:$0xff]
        %v4956 = vld [vmem:[%s4946 + $0x48] sm:$0xff]
        %v4957 = vld [vmem:[%s4946 + $0x50] sm:$0xff]
        %v4958 = vld [vmem:[%s4946 + $0x58] sm:$0xff]
        %v4959 = vld [vmem:[%s4946 + $0x60] sm:$0xff]
        %v4960 = vld [vmem:[%s4946 + $0x68] sm:$0xff]
        %v4961 = vld [vmem:[%s4946 + $0x70] sm:$0xff]
        %v4970 = vunpack.c.l.b16 %v4938
        %v4971 = vunpack.c.l.b16 %v4939
        %v4972 = vunpack.c.l.b16 %v4940
        %v4973 = vunpack.c.l.b16 %v4941
        %v4974 = vunpack.c.l.b16 %v4942
        %v4975 = vunpack.c.l.b16 %v4943
        %v4976 = vunpack.c.l.b16 %v4944
        %v4977 = vunpack.c.l.b16 %v4945
        %v4978 = vrot.slane %v3614, 7
        %v4979 = vsel %vm3675, %v4978, %v3613
        %v4980 = vrot.slane %v3615, 6
        %v4981 = vsel %vm3678, %v4980, %v4979
        %v4982 = vrot.slane %v3616, 5
        %v4983 = vsel %vm3681, %v4982, %v4981
        %v4984 = vrot.slane %v3617, 4
        %v4985 = vsel %vm3684, %v4984, %v4983
        %v4986 = vrot.slane %v4294, 3
        %v4987 = vsel %vm3687, %v4986, %v4985
        %v4988 = vrot.slane %v4632, 2
        %v4989 = vsel %vm3690, %v4988, %v4987
        %v4990 = vrot.slane %v4970, 1
        %v4991 = vsel %vm3693, %v4990, %v4989
        %v4992 = vrot.slane %v3622, 7
        %v4993 = vsel %vm3675, %v4992, %v3621
        %v4994 = vrot.slane %v3623, 6
        %v4995 = vsel %vm3678, %v4994, %v4993
        %v4996 = vrot.slane %v3624, 5
        %v4997 = vsel %vm3681, %v4996, %v4995
        %v4998 = vrot.slane %v3625, 4
        %v4999 = vsel %vm3684, %v4998, %v4997
        %v5000 = vrot.slane %v4295, 3
        %v5001 = vsel %vm3687, %v5000, %v4999
        %v5002 = vrot.slane %v4633, 2
        %v5003 = vsel %vm3690, %v5002, %v5001
        %v5004 = vrot.slane %v4971, 1
        %v5005 = vsel %vm3693, %v5004, %v5003
        %v5006 = vrot.slane %v3630, 7
        %v5007 = vsel %vm3675, %v5006, %v3629
        %v5008 = vrot.slane %v3631, 6
        %v5009 = vsel %vm3678, %v5008, %v5007
        %v5010 = vrot.slane %v3632, 5
        %v5011 = vsel %vm3681, %v5010, %v5009
        %v5012 = vrot.slane %v3633, 4
        %v5013 = vsel %vm3684, %v5012, %v5011
        %v5014 = vrot.slane %v4296, 3
        %v5015 = vsel %vm3687, %v5014, %v5013
        %v5016 = vrot.slane %v4634, 2
        %v5017 = vsel %vm3690, %v5016, %v5015
        %v5018 = vrot.slane %v4972, 1
        %v5019 = vsel %vm3693, %v5018, %v5017
        %v5020 = vrot.slane %v3638, 7
        %v5021 = vsel %vm3675, %v5020, %v3637
        %v5022 = vrot.slane %v3639, 6
        %v5023 = vsel %vm3678, %v5022, %v5021
        %v5024 = vrot.slane %v3640, 5
        %v5025 = vsel %vm3681, %v5024, %v5023
        %v5026 = vrot.slane %v3641, 4
        %v5027 = vsel %vm3684, %v5026, %v5025
        %v5028 = vrot.slane %v4297, 3
        %v5029 = vsel %vm3687, %v5028, %v5027
        %v5030 = vrot.slane %v4635, 2
        %v5031 = vsel %vm3690, %v5030, %v5029
        %v5032 = vrot.slane %v4973, 1
        %v5033 = vsel %vm3693, %v5032, %v5031
        %v5034 = vrot.slane %v3646, 7
        %v5035 = vsel %vm3675, %v5034, %v3645
        %v5036 = vrot.slane %v3647, 6
        %v5037 = vsel %vm3678, %v5036, %v5035
        %v5038 = vrot.slane %v3648, 5
        %v5039 = vsel %vm3681, %v5038, %v5037
        %v5040 = vrot.slane %v3649, 4
        %v5041 = vsel %vm3684, %v5040, %v5039
        %v5042 = vrot.slane %v4298, 3
        %v5043 = vsel %vm3687, %v5042, %v5041
        %v5044 = vrot.slane %v4636, 2
        %v5045 = vsel %vm3690, %v5044, %v5043
        %v5046 = vrot.slane %v4974, 1
        %v5047 = vsel %vm3693, %v5046, %v5045
        %v5048 = vrot.slane %v3654, 7
        %v5049 = vsel %vm3675, %v5048, %v3653
        %v5050 = vrot.slane %v3655, 6
        %v5051 = vsel %vm3678, %v5050, %v5049
        %v5052 = vrot.slane %v3656, 5
        %v5053 = vsel %vm3681, %v5052, %v5051
        %v5054 = vrot.slane %v3657, 4
        %v5055 = vsel %vm3684, %v5054, %v5053
        %v5056 = vrot.slane %v4299, 3
        %v5057 = vsel %vm3687, %v5056, %v5055
        %v5058 = vrot.slane %v4637, 2
        %v5059 = vsel %vm3690, %v5058, %v5057
        %v5060 = vrot.slane %v4975, 1
        %v5061 = vsel %vm3693, %v5060, %v5059
        %v5062 = vrot.slane %v3662, 7
        %v5063 = vsel %vm3675, %v5062, %v3661
        %v5064 = vrot.slane %v3663, 6
        %v5065 = vsel %vm3678, %v5064, %v5063
        %v5066 = vrot.slane %v3664, 5
        %v5067 = vsel %vm3681, %v5066, %v5065
        %v5068 = vrot.slane %v3665, 4
        %v5069 = vsel %vm3684, %v5068, %v5067
        %v5070 = vrot.slane %v4300, 3
        %v5071 = vsel %vm3687, %v5070, %v5069
        %v5072 = vrot.slane %v4638, 2
        %v5073 = vsel %vm3690, %v5072, %v5071
        %v5074 = vrot.slane %v4976, 1
        %v5075 = vsel %vm3693, %v5074, %v5073
        %v5076 = vrot.slane %v3670, 7
        %v5077 = vsel %vm3675, %v5076, %v3669
        %v5078 = vrot.slane %v3671, 6
        %v5079 = vsel %vm3678, %v5078, %v5077
        %v5080 = vrot.slane %v3672, 5
        %v5081 = vsel %vm3681, %v5080, %v5079
        %v5082 = vrot.slane %v3673, 4
        %v5083 = vsel %vm3684, %v5082, %v5081
        %v5084 = vrot.slane %v4301, 3
        %v5085 = vsel %vm3687, %v5084, %v5083
        %v5086 = vrot.slane %v4639, 2
        %v5087 = vsel %vm3690, %v5086, %v5085
        %v5088 = vrot.slane %v4977, 1
        %v5089 = vsel %vm3693, %v5088, %v5087
        %v5090 = vpack.c.b16 %v5005, %v4991
        %v5091 = vpack.c.b16 %v5033, %v5019
        %v5092 = vpack.c.b16 %v5061, %v5047
        %v5093 = vpack.c.b16 %v5089, %v5075
        %v5109 = vunpack.c.l.b16 %v4947
        %v5110 = vunpack.c.h.b16 %v4947
        %v5111 = vunpack.c.l.b16 %v4948
        %v5112 = vunpack.c.h.b16 %v4948
        %v5113 = vunpack.c.l.b16 %v4949
        %v5114 = vunpack.c.h.b16 %v4949
        %v5115 = vunpack.c.l.b16 %v4950
        %v5116 = vunpack.c.h.b16 %v4950
        %v5117 = vunpack.c.l.b16 %v4951
        %v5118 = vunpack.c.h.b16 %v4951
        %v5119 = vunpack.c.l.b16 %v4952
        %v5120 = vunpack.c.h.b16 %v4952
        %v5121 = vunpack.c.l.b16 %v4953
        %v5122 = vunpack.c.h.b16 %v4953
        %v5123 = vunpack.c.l.b16 %v4954
        %v5124 = vunpack.c.h.b16 %v4954
        %v5125 = vunpack.c.l.b16 %v4955
        %v5126 = vunpack.c.h.b16 %v4955
        %v5127 = vunpack.c.l.b16 %v4956
        %v5128 = vunpack.c.h.b16 %v4956
        %v5129 = vunpack.c.l.b16 %v4957
        %v5130 = vunpack.c.h.b16 %v4957
        %v5131 = vunpack.c.l.b16 %v4958
        %v5132 = vunpack.c.h.b16 %v4958
        %v5133 = vunpack.c.l.b16 %v4959
        %v5134 = vunpack.c.h.b16 %v4959
        %v5135 = vunpack.c.l.b16 %v4960
        %v5136 = vunpack.c.h.b16 %v4960
        %v5137 = vunpack.c.l.b16 %v4961
        %v5138 = vunpack.c.h.b16 %v4961
        %v5139 = vpack.c.b16 %v5111, %v5109
        %v5140 = vpack.c.b16 %v5112, %v5110
        %v5141 = vpack.c.b16 %v5115, %v5113
        %v5142 = vpack.c.b16 %v5116, %v5114
        %v5143 = vpack.c.b16 %v5119, %v5117
        %v5144 = vpack.c.b16 %v5120, %v5118
        %v5145 = vpack.c.b16 %v5123, %v5121
        %v5146 = vpack.c.b16 %v5124, %v5122
        %v5147 = vpack.c.b16 %v5127, %v5125
        %v5148 = vpack.c.b16 %v5128, %v5126
        %v5149 = vpack.c.b16 %v5131, %v5129
        %v5150 = vpack.c.b16 %v5132, %v5130
        %v5151 = vpack.c.b16 %v5135, %v5133
        %v5152 = vpack.c.b16 %v5136, %v5134
        %v5153 = vpack.c.b16 %v5137, %v5137
        %v5154 = vpack.c.b16 %v5138, %v5138
        %v5170 = vsel %vm3872, %v5090, 0
        %v5173 = vsel %vm3872, %v5091, 0
        %v5176 = vsel %vm3872, %v5092, 0
        %v5179 = vsel %vm3872, %v5093, 0
        %v5182 = vsel %vm1660, %v5153, 0
        %v5185 = vsel %vm1660, %v5154, 0
        %5187 = vmatprep.subr.bf16.mxu0 %v5185
        %5188 = vmatpush1.bf16.msra.mxu0 %v5182
        %5189 = vmatprep.subr.bf16.mxu0 %v5152
        %5190 = vmatpush1.bf16.msra.mxu0 %v5151
        %5191 = vmatprep.subr.bf16.mxu0 %v5150
        %5192 = vmatpush1.bf16.msra.mxu0 %v5149
        %5193 = vmatprep.subr.bf16.mxu0 %v5148
        %5194 = vmatpush1.bf16.msra.mxu0 %v5147
        %5195 = vmatprep.subr.bf16.mxu0 %v5146
        %5196 = vmatpush1.bf16.msra.mxu0 %v5145
        %5197 = vmatprep.subr.bf16.mxu0 %v5144
        %5198 = vmatpush1.bf16.msra.mxu0 %v5143
        %5199 = vmatprep.subr.bf16.mxu0 %v5142
        %5200 = vmatpush1.bf16.msra.mxu0 %v5141
        %5201 = vmatprep.subr.bf16.mxu0 %v5140
        %5202 = vmatpush1.bf16.msra.mxu0 %v5139
        %5203 = vmatprep.subr.bf16.mxu0 0
        %5204 = vmatpush2.bf16.msra.mxu0 0
        %5205 = vmatprep.subr.bf16.mxu0 0
        %5206 = vmatpush2.bf16.msra.mxu0 0
        %5207 = vmatprep.subr.bf16.mxu0 0
        %5208 = vmatpush2.bf16.msra.mxu0 0
        %5209 = vmatprep.subr.bf16.mxu0 0
        %5210 = vmatpush2.bf16.msra.mxu0 0
        %5211 = vmatprep.subr.bf16.mxu0 0
        %5212 = vmatpush2.bf16.msra.mxu0 0
        %5213 = vmatprep.subr.bf16.mxu0 0
        %5214 = vmatpush2.bf16.msra.mxu0 0
        %5215 = vmatprep.subr.bf16.mxu0 0
        %5216 = vmatpush2.bf16.msra.mxu0 0
        %5217 = vmatprep.subr.bf16.mxu0 0
        %5218 = vmatpush2.bf16.msra.mxu0 0
        %5219 = vmatprep.mubr.bf16.mxu0 0
        %5220 = vmatmul.mubr.bf16.gmra.mxu0 %v5170
        %v5221 = vpop.f32.mrf.mxu0
        %v5222 = vadd.f32 0.0, %v5221
        %v5223 = vpop.f32.mrf.mxu0
        %v5224 = vadd.f32 0.0, %v5223
        %v5225 = vpop.f32.mrf.mxu0
        %v5226 = vadd.f32 0.0, %v5225
        %v5227 = vpop.f32.mrf.mxu0
        %v5228 = vadd.f32 0.0, %v5227
        %5229 = vmatprep.mubr.bf16.mxu0 0
        %5230 = vmatmul.mubr.bf16.gmra.mxu0 %v5173
        %v5231 = vpop.f32.mrf.mxu0
        %v5232 = vadd.f32 0.0, %v5231
        %v5233 = vpop.f32.mrf.mxu0
        %v5234 = vadd.f32 0.0, %v5233
        %v5235 = vpop.f32.mrf.mxu0
        %v5236 = vadd.f32 0.0, %v5235
        %v5237 = vpop.f32.mrf.mxu0
        %v5238 = vadd.f32 0.0, %v5237
        %5239 = vmatprep.mubr.bf16.mxu0 0
        %5240 = vmatmul.mubr.bf16.gmra.mxu0 %v5176
        %v5241 = vpop.f32.mrf.mxu0
        %v5242 = vadd.f32 0.0, %v5241
        %v5243 = vpop.f32.mrf.mxu0
        %v5244 = vadd.f32 0.0, %v5243
        %v5245 = vpop.f32.mrf.mxu0
        %v5246 = vadd.f32 0.0, %v5245
        %v5247 = vpop.f32.mrf.mxu0
        %v5248 = vadd.f32 0.0, %v5247
        %5249 = vmatprep.mubr.bf16.mxu0 0
        %5250 = vmatmul.mubr.bf16.gmra.mxu0 %v5179
        %v5251 = vpop.f32.mrf.mxu0
        %v5252 = vadd.f32 0.0, %v5251
        %v5253 = vpop.f32.mrf.mxu0
        %v5254 = vadd.f32 0.0, %v5253
        %v5255 = vpop.f32.mrf.mxu0
        %v5256 = vadd.f32 0.0, %v5255
        %v5257 = vpop.f32.mrf.mxu0
        %v5258 = vadd.f32 0.0, %v5257
        %5259 = vdwg.mxu0
        %v5260 = vadd.f32 %v4922, %v5222
        %v5261 = vadd.f32 %v4923, %v5224
        %v5262 = vadd.f32 %v4924, %v5226
        %v5263 = vadd.f32 %v4925, %v5228
        %v5264 = vadd.f32 %v4926, %v5232
        %v5265 = vadd.f32 %v4927, %v5234
        %v5266 = vadd.f32 %v4928, %v5236
        %v5267 = vadd.f32 %v4929, %v5238
        %v5268 = vadd.f32 %v4930, %v5242
        %v5269 = vadd.f32 %v4931, %v5244
        %v5270 = vadd.f32 %v4932, %v5246
        %v5271 = vadd.f32 %v4933, %v5248
        %v5272 = vadd.f32 %v4934, %v5252
        %v5273 = vadd.f32 %v4935, %v5254
        %v5274 = vadd.f32 %v4936, %v5256
        %v5275 = vadd.f32 %v4937, %v5258
        %v5276 = vmax.f32 %v5260, %v5261
        %v5277 = vmax.f32 %v5262, %v5263
        %v5278 = vmax.f32 %v5264, %v5265
        %v5279 = vmax.f32 %v5266, %v5267
        %v5280 = vmax.f32 %v5268, %v5269
        %v5281 = vmax.f32 %v5270, %v5271
        %v5282 = vmax.f32 %v5272, %v5273
        %v5283 = vmax.f32 %v5274, %v5275
        %v5292 = vcombine.high %v5276, %v5276
        %v5294 = vunpack.c.l.s4 1983009808
        %v5295 = vunpack.c.0.s8 %v5294
        %v5296 = vlaneseq
        %v5297 = vshrl.u32 %v5296, 7
        %v5298 = vsub.s32 %v5295, %v5297
        %v5299 = vrot.slane %v5276, %v5298
        %v5301 = vunpack.c.l.s4 1983009808
        %v5302 = vunpack.c.0.s8 %v5301
        %v5303 = vlaneseq
        %v5304 = vshrl.u32 %v5303, 7
        %v5305 = vsub.s32 %v5302, %v5304
        %v5306 = vrot.slane %v5292, %v5305
        %v5307 = vcombine.high %v5299, %v5299
        %v5308 = vcombine.high %v5306, %v5306
        %v5309 = vcombine.high %v5277, %v5277
        %v5311 = vunpack.c.l.s4 1983009808
        %v5312 = vunpack.c.0.s8 %v5311
        %v5313 = vlaneseq
        %v5314 = vshrl.u32 %v5313, 7
        %v5315 = vsub.s32 %v5312, %v5314
        %v5316 = vrot.slane %v5277, %v5315
        %v5318 = vunpack.c.l.s4 1983009808
        %v5319 = vunpack.c.0.s8 %v5318
        %v5320 = vlaneseq
        %v5321 = vshrl.u32 %v5320, 7
        %v5322 = vsub.s32 %v5319, %v5321
        %v5323 = vrot.slane %v5309, %v5322
        %v5324 = vcombine.high %v5316, %v5316
        %v5325 = vcombine.high %v5323, %v5323
        %v5326 = vcombine.high %v5278, %v5278
        %v5328 = vunpack.c.l.s4 1983009808
        %v5329 = vunpack.c.0.s8 %v5328
        %v5330 = vlaneseq
        %v5331 = vshrl.u32 %v5330, 7
        %v5332 = vsub.s32 %v5329, %v5331
        %v5333 = vrot.slane %v5278, %v5332
        %v5335 = vunpack.c.l.s4 1983009808
        %v5336 = vunpack.c.0.s8 %v5335
        %v5337 = vlaneseq
        %v5338 = vshrl.u32 %v5337, 7
        %v5339 = vsub.s32 %v5336, %v5338
        %v5340 = vrot.slane %v5326, %v5339
        %v5341 = vcombine.high %v5333, %v5333
        %v5342 = vcombine.high %v5340, %v5340
        %v5343 = vcombine.high %v5279, %v5279
        %v5345 = vunpack.c.l.s4 1983009808
        %v5346 = vunpack.c.0.s8 %v5345
        %v5347 = vlaneseq
        %v5348 = vshrl.u32 %v5347, 7
        %v5349 = vsub.s32 %v5346, %v5348
        %v5350 = vrot.slane %v5279, %v5349
        %v5352 = vunpack.c.l.s4 1983009808
        %v5353 = vunpack.c.0.s8 %v5352
        %v5354 = vlaneseq
        %v5355 = vshrl.u32 %v5354, 7
        %v5356 = vsub.s32 %v5353, %v5355
        %v5357 = vrot.slane %v5343, %v5356
        %v5358 = vcombine.high %v5350, %v5350
        %v5359 = vcombine.high %v5357, %v5357
        %v5360 = vcombine.high %v5280, %v5280
        %v5362 = vunpack.c.l.s4 1983009808
        %v5363 = vunpack.c.0.s8 %v5362
        %v5364 = vlaneseq
        %v5365 = vshrl.u32 %v5364, 7
        %v5366 = vsub.s32 %v5363, %v5365
        %v5367 = vrot.slane %v5280, %v5366
        %v5369 = vunpack.c.l.s4 1983009808
        %v5370 = vunpack.c.0.s8 %v5369
        %v5371 = vlaneseq
        %v5372 = vshrl.u32 %v5371, 7
        %v5373 = vsub.s32 %v5370, %v5372
        %v5374 = vrot.slane %v5360, %v5373
        %v5375 = vcombine.high %v5367, %v5367
        %v5376 = vcombine.high %v5374, %v5374
        %v5377 = vcombine.high %v5281, %v5281
        %v5379 = vunpack.c.l.s4 1983009808
        %v5380 = vunpack.c.0.s8 %v5379
        %v5381 = vlaneseq
        %v5382 = vshrl.u32 %v5381, 7
        %v5383 = vsub.s32 %v5380, %v5382
        %v5384 = vrot.slane %v5281, %v5383
        %v5386 = vunpack.c.l.s4 1983009808
        %v5387 = vunpack.c.0.s8 %v5386
        %v5388 = vlaneseq
        %v5389 = vshrl.u32 %v5388, 7
        %v5390 = vsub.s32 %v5387, %v5389
        %v5391 = vrot.slane %v5377, %v5390
        %v5392 = vcombine.high %v5384, %v5384
        %v5393 = vcombine.high %v5391, %v5391
        %v5394 = vcombine.high %v5282, %v5282
        %v5396 = vunpack.c.l.s4 1983009808
        %v5397 = vunpack.c.0.s8 %v5396
        %v5398 = vlaneseq
        %v5399 = vshrl.u32 %v5398, 7
        %v5400 = vsub.s32 %v5397, %v5399
        %v5401 = vrot.slane %v5282, %v5400
        %v5403 = vunpack.c.l.s4 1983009808
        %v5404 = vunpack.c.0.s8 %v5403
        %v5405 = vlaneseq
        %v5406 = vshrl.u32 %v5405, 7
        %v5407 = vsub.s32 %v5404, %v5406
        %v5408 = vrot.slane %v5394, %v5407
        %v5409 = vcombine.high %v5401, %v5401
        %v5410 = vcombine.high %v5408, %v5408
        %v5411 = vcombine.high %v5283, %v5283
        %v5413 = vunpack.c.l.s4 1983009808
        %v5414 = vunpack.c.0.s8 %v5413
        %v5415 = vlaneseq
        %v5416 = vshrl.u32 %v5415, 7
        %v5417 = vsub.s32 %v5414, %v5416
        %v5418 = vrot.slane %v5283, %v5417
        %v5420 = vunpack.c.l.s4 1983009808
        %v5421 = vunpack.c.0.s8 %v5420
        %v5422 = vlaneseq
        %v5423 = vshrl.u32 %v5422, 7
        %v5424 = vsub.s32 %v5421, %v5423
        %v5425 = vrot.slane %v5411, %v5424
        %v5426 = vcombine.high %v5418, %v5418
        %v5427 = vcombine.high %v5425, %v5425
        %vm5460 = vcmask 648192
        %v5461 = vsel %vm5460, %v5299, -inf
        %v5462 = vrot.slane %v5461, 4
        %v5463 = vmax.f32 %v5461, %v5462
        %v5464 = vrot.slane %v5463, 2
        %v5465 = vmax.f32 %v5463, %v5464
        %v5466 = vrot.slane %v5465, 1
        %v5467 = vmax.f32 %v5465, %v5466
        %v5468 = vsel %vm5460, %v5307, -inf
        %v5469 = vrot.slane %v5468, 4
        %v5470 = vmax.f32 %v5468, %v5469
        %v5471 = vrot.slane %v5470, 2
        %v5472 = vmax.f32 %v5470, %v5471
        %v5473 = vrot.slane %v5472, 1
        %v5474 = vmax.f32 %v5472, %v5473
        %v5475 = vsel %vm5460, %v5306, -inf
        %v5476 = vrot.slane %v5475, 4
        %v5477 = vmax.f32 %v5475, %v5476
        %v5478 = vrot.slane %v5477, 2
        %v5479 = vmax.f32 %v5477, %v5478
        %v5480 = vrot.slane %v5479, 1
        %v5481 = vmax.f32 %v5479, %v5480
        %v5482 = vsel %vm5460, %v5308, -inf
        %v5483 = vrot.slane %v5482, 4
        %v5484 = vmax.f32 %v5482, %v5483
        %v5485 = vrot.slane %v5484, 2
        %v5486 = vmax.f32 %v5484, %v5485
        %v5487 = vrot.slane %v5486, 1
        %v5488 = vmax.f32 %v5486, %v5487
        %v5489 = vsel %vm5460, %v5316, -inf
        %v5490 = vrot.slane %v5489, 4
        %v5491 = vmax.f32 %v5489, %v5490
        %v5492 = vrot.slane %v5491, 2
        %v5493 = vmax.f32 %v5491, %v5492
        %v5494 = vrot.slane %v5493, 1
        %v5495 = vmax.f32 %v5493, %v5494
        %v5496 = vsel %vm5460, %v5324, -inf
        %v5497 = vrot.slane %v5496, 4
        %v5498 = vmax.f32 %v5496, %v5497
        %v5499 = vrot.slane %v5498, 2
        %v5500 = vmax.f32 %v5498, %v5499
        %v5501 = vrot.slane %v5500, 1
        %v5502 = vmax.f32 %v5500, %v5501
        %v5503 = vsel %vm5460, %v5323, -inf
        %v5504 = vrot.slane %v5503, 4
        %v5505 = vmax.f32 %v5503, %v5504
        %v5506 = vrot.slane %v5505, 2
        %v5507 = vmax.f32 %v5505, %v5506
        %v5508 = vrot.slane %v5507, 1
        %v5509 = vmax.f32 %v5507, %v5508
        %v5510 = vsel %vm5460, %v5325, -inf
        %v5511 = vrot.slane %v5510, 4
        %v5512 = vmax.f32 %v5510, %v5511
        %v5513 = vrot.slane %v5512, 2
        %v5514 = vmax.f32 %v5512, %v5513
        %v5515 = vrot.slane %v5514, 1
        %v5516 = vmax.f32 %v5514, %v5515
        %v5517 = vsel %vm5460, %v5333, -inf
        %v5518 = vrot.slane %v5517, 4
        %v5519 = vmax.f32 %v5517, %v5518
        %v5520 = vrot.slane %v5519, 2
        %v5521 = vmax.f32 %v5519, %v5520
        %v5522 = vrot.slane %v5521, 1
        %v5523 = vmax.f32 %v5521, %v5522
        %v5524 = vsel %vm5460, %v5341, -inf
        %v5525 = vrot.slane %v5524, 4
        %v5526 = vmax.f32 %v5524, %v5525
        %v5527 = vrot.slane %v5526, 2
        %v5528 = vmax.f32 %v5526, %v5527
        %v5529 = vrot.slane %v5528, 1
        %v5530 = vmax.f32 %v5528, %v5529
        %v5531 = vsel %vm5460, %v5340, -inf
        %v5532 = vrot.slane %v5531, 4
        %v5533 = vmax.f32 %v5531, %v5532
        %v5534 = vrot.slane %v5533, 2
        %v5535 = vmax.f32 %v5533, %v5534
        %v5536 = vrot.slane %v5535, 1
        %v5537 = vmax.f32 %v5535, %v5536
        %v5538 = vsel %vm5460, %v5342, -inf
        %v5539 = vrot.slane %v5538, 4
        %v5540 = vmax.f32 %v5538, %v5539
        %v5541 = vrot.slane %v5540, 2
        %v5542 = vmax.f32 %v5540, %v5541
        %v5543 = vrot.slane %v5542, 1
        %v5544 = vmax.f32 %v5542, %v5543
        %v5545 = vsel %vm5460, %v5350, -inf
        %v5546 = vrot.slane %v5545, 4
        %v5547 = vmax.f32 %v5545, %v5546
        %v5548 = vrot.slane %v5547, 2
        %v5549 = vmax.f32 %v5547, %v5548
        %v5550 = vrot.slane %v5549, 1
        %v5551 = vmax.f32 %v5549, %v5550
        %v5552 = vsel %vm5460, %v5358, -inf
        %v5553 = vrot.slane %v5552, 4
        %v5554 = vmax.f32 %v5552, %v5553
        %v5555 = vrot.slane %v5554, 2
        %v5556 = vmax.f32 %v5554, %v5555
        %v5557 = vrot.slane %v5556, 1
        %v5558 = vmax.f32 %v5556, %v5557
        %v5559 = vsel %vm5460, %v5357, -inf
        %v5560 = vrot.slane %v5559, 4
        %v5561 = vmax.f32 %v5559, %v5560
        %v5562 = vrot.slane %v5561, 2
        %v5563 = vmax.f32 %v5561, %v5562
        %v5564 = vrot.slane %v5563, 1
        %v5565 = vmax.f32 %v5563, %v5564
        %v5566 = vsel %vm5460, %v5359, -inf
        %v5567 = vrot.slane %v5566, 4
        %v5568 = vmax.f32 %v5566, %v5567
        %v5569 = vrot.slane %v5568, 2
        %v5570 = vmax.f32 %v5568, %v5569
        %v5571 = vrot.slane %v5570, 1
        %v5572 = vmax.f32 %v5570, %v5571
        %v5573 = vsel %vm5460, %v5367, -inf
        %v5574 = vrot.slane %v5573, 4
        %v5575 = vmax.f32 %v5573, %v5574
        %v5576 = vrot.slane %v5575, 2
        %v5577 = vmax.f32 %v5575, %v5576
        %v5578 = vrot.slane %v5577, 1
        %v5579 = vmax.f32 %v5577, %v5578
        %v5580 = vsel %vm5460, %v5375, -inf
        %v5581 = vrot.slane %v5580, 4
        %v5582 = vmax.f32 %v5580, %v5581
        %v5583 = vrot.slane %v5582, 2
        %v5584 = vmax.f32 %v5582, %v5583
        %v5585 = vrot.slane %v5584, 1
        %v5586 = vmax.f32 %v5584, %v5585
        %v5587 = vsel %vm5460, %v5374, -inf
        %v5588 = vrot.slane %v5587, 4
        %v5589 = vmax.f32 %v5587, %v5588
        %v5590 = vrot.slane %v5589, 2
        %v5591 = vmax.f32 %v5589, %v5590
        %v5592 = vrot.slane %v5591, 1
        %v5593 = vmax.f32 %v5591, %v5592
        %v5594 = vsel %vm5460, %v5376, -inf
        %v5595 = vrot.slane %v5594, 4
        %v5596 = vmax.f32 %v5594, %v5595
        %v5597 = vrot.slane %v5596, 2
        %v5598 = vmax.f32 %v5596, %v5597
        %v5599 = vrot.slane %v5598, 1
        %v5600 = vmax.f32 %v5598, %v5599
        %v5601 = vsel %vm5460, %v5384, -inf
        %v5602 = vrot.slane %v5601, 4
        %v5603 = vmax.f32 %v5601, %v5602
        %v5604 = vrot.slane %v5603, 2
        %v5605 = vmax.f32 %v5603, %v5604
        %v5606 = vrot.slane %v5605, 1
        %v5607 = vmax.f32 %v5605, %v5606
        %v5608 = vsel %vm5460, %v5392, -inf
        %v5609 = vrot.slane %v5608, 4
        %v5610 = vmax.f32 %v5608, %v5609
        %v5611 = vrot.slane %v5610, 2
        %v5612 = vmax.f32 %v5610, %v5611
        %v5613 = vrot.slane %v5612, 1
        %v5614 = vmax.f32 %v5612, %v5613
        %v5615 = vsel %vm5460, %v5391, -inf
        %v5616 = vrot.slane %v5615, 4
        %v5617 = vmax.f32 %v5615, %v5616
        %v5618 = vrot.slane %v5617, 2
        %v5619 = vmax.f32 %v5617, %v5618
        %v5620 = vrot.slane %v5619, 1
        %v5621 = vmax.f32 %v5619, %v5620
        %v5622 = vsel %vm5460, %v5393, -inf
        %v5623 = vrot.slane %v5622, 4
        %v5624 = vmax.f32 %v5622, %v5623
        %v5625 = vrot.slane %v5624, 2
        %v5626 = vmax.f32 %v5624, %v5625
        %v5627 = vrot.slane %v5626, 1
        %v5628 = vmax.f32 %v5626, %v5627
        %v5629 = vsel %vm5460, %v5401, -inf
        %v5630 = vrot.slane %v5629, 4
        %v5631 = vmax.f32 %v5629, %v5630
        %v5632 = vrot.slane %v5631, 2
        %v5633 = vmax.f32 %v5631, %v5632
        %v5634 = vrot.slane %v5633, 1
        %v5635 = vmax.f32 %v5633, %v5634
        %v5636 = vsel %vm5460, %v5409, -inf
        %v5637 = vrot.slane %v5636, 4
        %v5638 = vmax.f32 %v5636, %v5637
        %v5639 = vrot.slane %v5638, 2
        %v5640 = vmax.f32 %v5638, %v5639
        %v5641 = vrot.slane %v5640, 1
        %v5642 = vmax.f32 %v5640, %v5641
        %v5643 = vsel %vm5460, %v5408, -inf
        %v5644 = vrot.slane %v5643, 4
        %v5645 = vmax.f32 %v5643, %v5644
        %v5646 = vrot.slane %v5645, 2
        %v5647 = vmax.f32 %v5645, %v5646
        %v5648 = vrot.slane %v5647, 1
        %v5649 = vmax.f32 %v5647, %v5648
        %v5650 = vsel %vm5460, %v5410, -inf
        %v5651 = vrot.slane %v5650, 4
        %v5652 = vmax.f32 %v5650, %v5651
        %v5653 = vrot.slane %v5652, 2
        %v5654 = vmax.f32 %v5652, %v5653
        %v5655 = vrot.slane %v5654, 1
        %v5656 = vmax.f32 %v5654, %v5655
        %v5657 = vsel %vm5460, %v5418, -inf
        %v5658 = vrot.slane %v5657, 4
        %v5659 = vmax.f32 %v5657, %v5658
        %v5660 = vrot.slane %v5659, 2
        %v5661 = vmax.f32 %v5659, %v5660
        %v5662 = vrot.slane %v5661, 1
        %v5663 = vmax.f32 %v5661, %v5662
        %v5664 = vsel %vm5460, %v5426, -inf
        %v5665 = vrot.slane %v5664, 4
        %v5666 = vmax.f32 %v5664, %v5665
        %v5667 = vrot.slane %v5666, 2
        %v5668 = vmax.f32 %v5666, %v5667
        %v5669 = vrot.slane %v5668, 1
        %v5670 = vmax.f32 %v5668, %v5669
        %v5671 = vsel %vm5460, %v5425, -inf
        %v5672 = vrot.slane %v5671, 4
        %v5673 = vmax.f32 %v5671, %v5672
        %v5674 = vrot.slane %v5673, 2
        %v5675 = vmax.f32 %v5673, %v5674
        %v5676 = vrot.slane %v5675, 1
        %v5677 = vmax.f32 %v5675, %v5676
        %v5678 = vsel %vm5460, %v5427, -inf
        %v5679 = vrot.slane %v5678, 4
        %v5680 = vmax.f32 %v5678, %v5679
        %v5681 = vrot.slane %v5680, 2
        %v5682 = vmax.f32 %v5680, %v5681
        %v5683 = vrot.slane %v5682, 1
        %v5684 = vmax.f32 %v5682, %v5683
        %v5685 = vld [vmem:[%s4] sm:$0x1]
        %v5687 = vlaneseq
        %v5688 = vshrl.u32 %v5687, 7
        %v5689 = vsub.s32 0, %v5688
        %v5690 = vrot.slane %v5685, %v5689
        %v5692 = vadd.f32 %v5467, %v5690
        %v5693 = vadd.f32 %v5474, %v5690
        %v5694 = vadd.f32 %v5481, %v5690
        %v5695 = vadd.f32 %v5488, %v5690
        %v5696 = vadd.f32 %v5495, %v5690
        %v5697 = vadd.f32 %v5502, %v5690
        %v5698 = vadd.f32 %v5509, %v5690
        %v5699 = vadd.f32 %v5516, %v5690
        %v5700 = vadd.f32 %v5523, %v5690
        %v5701 = vadd.f32 %v5530, %v5690
        %v5702 = vadd.f32 %v5537, %v5690
        %v5703 = vadd.f32 %v5544, %v5690
        %v5704 = vadd.f32 %v5551, %v5690
        %v5705 = vadd.f32 %v5558, %v5690
        %v5706 = vadd.f32 %v5565, %v5690
        %v5707 = vadd.f32 %v5572, %v5690
        %v5708 = vadd.f32 %v5579, %v5690
        %v5709 = vadd.f32 %v5586, %v5690
        %v5710 = vadd.f32 %v5593, %v5690
        %v5711 = vadd.f32 %v5600, %v5690
        %v5712 = vadd.f32 %v5607, %v5690
        %v5713 = vadd.f32 %v5614, %v5690
        %v5714 = vadd.f32 %v5621, %v5690
        %v5715 = vadd.f32 %v5628, %v5690
        %v5716 = vadd.f32 %v5635, %v5690
        %v5717 = vadd.f32 %v5642, %v5690
        %v5718 = vadd.f32 %v5649, %v5690
        %v5719 = vadd.f32 %v5656, %v5690
        %v5720 = vadd.f32 %v5663, %v5690
        %v5721 = vadd.f32 %v5670, %v5690
        %v5722 = vadd.f32 %v5677, %v5690
        %v5723 = vadd.f32 %v5684, %v5690
        %v5724 = vmax.f32 %v5692, 0.0
        %v5725 = vmax.f32 %v5693, 0.0
        %v5726 = vmax.f32 %v5694, 0.0
        %v5727 = vmax.f32 %v5695, 0.0
        %v5728 = vmax.f32 %v5696, 0.0
        %v5729 = vmax.f32 %v5697, 0.0
        %v5730 = vmax.f32 %v5698, 0.0
        %v5731 = vmax.f32 %v5699, 0.0
        %v5732 = vmax.f32 %v5700, 0.0
        %v5733 = vmax.f32 %v5701, 0.0
        %v5734 = vmax.f32 %v5702, 0.0
        %v5735 = vmax.f32 %v5703, 0.0
        %v5736 = vmax.f32 %v5704, 0.0
        %v5737 = vmax.f32 %v5705, 0.0
        %v5738 = vmax.f32 %v5706, 0.0
        %v5739 = vmax.f32 %v5707, 0.0
        %v5740 = vmax.f32 %v5708, 0.0
        %v5741 = vmax.f32 %v5709, 0.0
        %v5742 = vmax.f32 %v5710, 0.0
        %v5743 = vmax.f32 %v5711, 0.0
        %v5744 = vmax.f32 %v5712, 0.0
        %v5745 = vmax.f32 %v5713, 0.0
        %v5746 = vmax.f32 %v5714, 0.0
        %v5747 = vmax.f32 %v5715, 0.0
        %v5748 = vmax.f32 %v5716, 0.0
        %v5749 = vmax.f32 %v5717, 0.0
        %v5750 = vmax.f32 %v5718, 0.0
        %v5751 = vmax.f32 %v5719, 0.0
        %v5752 = vmax.f32 %v5720, 0.0
        %v5753 = vmax.f32 %v5721, 0.0
        %v5754 = vmax.f32 %v5722, 0.0
        %v5755 = vmax.f32 %v5723, 0.0
        %v5756 = vpack.c.bf16 %v5724, %v5724
        %v5757 = vpack.c.bf16 %v5728, %v5728
        %v5758 = vpack.c.bf16 %v5732, %v5732
        %v5759 = vpack.c.bf16 %v5736, %v5736
        %v5760 = vpack.c.bf16 %v5740, %v5740
        %v5761 = vpack.c.bf16 %v5744, %v5744
        %v5762 = vpack.c.bf16 %v5748, %v5748
        %v5763 = vpack.c.bf16 %v5752, %v5752
        %v5764 = vld [vmem:[%s5] sm:$0xf]
        %v5765 = vld [vmem:[%s5 + $0x4] sm:$0xf]
        %v5766 = vld [vmem:[%s5 + $0x8] sm:$0xf]
        %v5767 = vld [vmem:[%s5 + $0xc] sm:$0xf]
        %v5768 = vld [vmem:[%s5 + $0x10] sm:$0xf]
        %v5769 = vld [vmem:[%s5 + $0x14] sm:$0xf]
        %v5770 = vld [vmem:[%s5 + $0x18] sm:$0xf]
        %v5771 = vld [vmem:[%s5 + $0x1c] sm:$0xf]
        %v5772 = vld [vmem:[%s5 + $0x20] sm:$0xf]
        %v5773 = vld [vmem:[%s5 + $0x24] sm:$0xf]
        %v5774 = vpack.c.bf16 %v5725, %v5725
        %v5775 = vpack.c.bf16 %v5729, %v5729
        %v5776 = vpack.c.bf16 %v5733, %v5733
        %v5777 = vpack.c.bf16 %v5737, %v5737
        %v5778 = vpack.c.bf16 %v5741, %v5741
        %v5779 = vpack.c.bf16 %v5745, %v5745
        %v5780 = vpack.c.bf16 %v5749, %v5749
        %v5781 = vpack.c.bf16 %v5753, %v5753
        %s5782 = scalar_lea.vmem %s5, 40
        %v5783 = vld [vmem:[%s5782] sm:$0xf]
        %v5784 = vld [vmem:[%s5782 + $0x4] sm:$0xf]
        %v5785 = vld [vmem:[%s5782 + $0x8] sm:$0xf]
        %v5786 = vld [vmem:[%s5782 + $0xc] sm:$0xf]
        %v5787 = vld [vmem:[%s5782 + $0x10] sm:$0xf]
        %v5788 = vld [vmem:[%s5782 + $0x14] sm:$0xf]
        %v5789 = vld [vmem:[%s5782 + $0x18] sm:$0xf]
        %v5790 = vld [vmem:[%s5782 + $0x1c] sm:$0xf]
        %v5791 = vld [vmem:[%s5782 + $0x20] sm:$0xf]
        %v5792 = vld [vmem:[%s5782 + $0x24] sm:$0xf]
        %v5801 = vunpack.c.l.b16 %v5774
        %v5802 = vunpack.c.l.b16 %v5775
        %v5803 = vunpack.c.l.b16 %v5776
        %v5804 = vunpack.c.l.b16 %v5777
        %v5805 = vunpack.c.l.b16 %v5778
        %v5806 = vunpack.c.l.b16 %v5779
        %v5807 = vunpack.c.l.b16 %v5780
        %v5808 = vunpack.c.l.b16 %v5781
        %v5809 = vrot.slane %v5802, 7
        %v5810 = vsel %vm3675, %v5809, %v5801
        %v5811 = vrot.slane %v5803, 6
        %v5812 = vsel %vm3678, %v5811, %v5810
        %v5813 = vrot.slane %v5804, 5
        %v5814 = vsel %vm3681, %v5813, %v5812
        %v5815 = vrot.slane %v5805, 4
        %v5816 = vsel %vm3684, %v5815, %v5814
        %v5817 = vrot.slane %v5806, 3
        %v5818 = vsel %vm3687, %v5817, %v5816
        %v5819 = vrot.slane %v5807, 2
        %v5820 = vsel %vm3690, %v5819, %v5818
        %v5821 = vrot.slane %v5808, 1
        %v5822 = vsel %vm3693, %v5821, %v5820
        %v5823 = vpack.c.b16 %v5822, %v5822
        %v5834 = vunpack.c.l.b16 %v5783
        %v5835 = vunpack.c.l.b16 %v5784
        %v5836 = vunpack.c.l.b16 %v5785
        %v5837 = vunpack.c.l.b16 %v5786
        %v5838 = vunpack.c.l.b16 %v5787
        %v5839 = vunpack.c.l.b16 %v5788
        %v5840 = vunpack.c.l.b16 %v5789
        %v5841 = vunpack.c.l.b16 %v5790
        %v5842 = vunpack.c.l.b16 %v5791
        %v5843 = vunpack.c.l.b16 %v5792
        %v5844 = vpack.c.b16 %v5835, %v5834
        %v5845 = vpack.c.b16 %v5837, %v5836
        %v5846 = vpack.c.b16 %v5839, %v5838
        %v5847 = vpack.c.b16 %v5841, %v5840
        %v5848 = vpack.c.b16 %v5843, %v5842
        %vm5854 = vcmask 654336
        %v5856 = vsel %vm5854, %v5823, 0
        %5858 = vmatprep.subr.bf16.mxu0 0
        %5859 = vmatpush1.bf16.msra.mxu0 0
        %5860 = vmatprep.subr.bf16.mxu0 0
        %5861 = vmatpush1.bf16.msra.mxu0 0
        %5862 = vmatprep.subr.bf16.mxu0 0
        %5863 = vmatpush1.bf16.msra.mxu0 0
        %5864 = vmatprep.subr.bf16.mxu0 0
        %5865 = vmatpush1.bf16.msra.mxu0 %v5848
        %5866 = vmatprep.subr.bf16.mxu0 0
        %5867 = vmatpush1.bf16.msra.mxu0 %v5847
        %5868 = vmatprep.subr.bf16.mxu0 0
        %5869 = vmatpush1.bf16.msra.mxu0 %v5846
        %5870 = vmatprep.subr.bf16.mxu0 0
        %5871 = vmatpush1.bf16.msra.mxu0 %v5845
        %5872 = vmatprep.subr.bf16.mxu0 0
        %5873 = vmatpush1.bf16.msra.mxu0 %v5844
        %5874 = vmatprep.subr.bf16.mxu0 0
        %5875 = vmatpush2.bf16.msra.mxu0 0
        %5876 = vmatprep.subr.bf16.mxu0 0
        %5877 = vmatpush2.bf16.msra.mxu0 0
        %5878 = vmatprep.subr.bf16.mxu0 0
        %5879 = vmatpush2.bf16.msra.mxu0 0
        %5880 = vmatprep.subr.bf16.mxu0 0
        %5881 = vmatpush2.bf16.msra.mxu0 0
        %5882 = vmatprep.subr.bf16.mxu0 0
        %5883 = vmatpush2.bf16.msra.mxu0 0
        %5884 = vmatprep.subr.bf16.mxu0 0
        %5885 = vmatpush2.bf16.msra.mxu0 0
        %5886 = vmatprep.subr.bf16.mxu0 0
        %5887 = vmatpush2.bf16.msra.mxu0 0
        %5888 = vmatprep.subr.bf16.mxu0 0
        %5889 = vmatpush2.bf16.msra.mxu0 0
        %5890 = vmatprep.mubr.bf16.mxu0 0
        %5891 = vmatmul.mubr.bf16.gmra.mxu0 %v5856
        %v5892 = vpop.f32.mrf.mxu0
        %v5893 = vadd.f32 0.0, %v5892
        %v5894 = vpop.f32.mrf.mxu0
        %v5895 = vpop.f32.mrf.mxu0
        %v5896 = vpop.f32.mrf.mxu0
        %5897 = vdwg.mxu0
        %v5906 = vunpack.c.l.b16 %v5756
        %v5907 = vunpack.c.l.b16 %v5757
        %v5908 = vunpack.c.l.b16 %v5758
        %v5909 = vunpack.c.l.b16 %v5759
        %v5910 = vunpack.c.l.b16 %v5760
        %v5911 = vunpack.c.l.b16 %v5761
        %v5912 = vunpack.c.l.b16 %v5762
        %v5913 = vunpack.c.l.b16 %v5763
        %v5914 = vrot.slane %v5907, 7
        %v5915 = vsel %vm3675, %v5914, %v5906
        %v5916 = vrot.slane %v5908, 6
        %v5917 = vsel %vm3678, %v5916, %v5915
        %v5918 = vrot.slane %v5909, 5
        %v5919 = vsel %vm3681, %v5918, %v5917
        %v5920 = vrot.slane %v5910, 4
        %v5921 = vsel %vm3684, %v5920, %v5919
        %v5922 = vrot.slane %v5911, 3
        %v5923 = vsel %vm3687, %v5922, %v5921
        %v5924 = vrot.slane %v5912, 2
        %v5925 = vsel %vm3690, %v5924, %v5923
        %v5926 = vrot.slane %v5913, 1
        %v5927 = vsel %vm3693, %v5926, %v5925
        %v5928 = vpack.c.b16 %v5927, %v5927
        %v5939 = vunpack.c.l.b16 %v5764
        %v5940 = vunpack.c.l.b16 %v5765
        %v5941 = vunpack.c.l.b16 %v5766
        %v5942 = vunpack.c.l.b16 %v5767
        %v5943 = vunpack.c.l.b16 %v5768
        %v5944 = vunpack.c.l.b16 %v5769
        %v5945 = vunpack.c.l.b16 %v5770
        %v5946 = vunpack.c.l.b16 %v5771
        %v5947 = vunpack.c.l.b16 %v5772
        %v5948 = vunpack.c.l.b16 %v5773
        %v5949 = vpack.c.b16 %v5940, %v5939
        %v5950 = vpack.c.b16 %v5942, %v5941
        %v5951 = vpack.c.b16 %v5944, %v5943
        %v5952 = vpack.c.b16 %v5946, %v5945
        %v5953 = vpack.c.b16 %v5948, %v5947
        %v5960 = vsel %vm5854, %v5928, 0
        %5962 = vmatprep.subr.bf16.mxu0 0
        %5963 = vmatpush1.bf16.msra.mxu0 0
        %5964 = vmatprep.subr.bf16.mxu0 0
        %5965 = vmatpush1.bf16.msra.mxu0 0
        %5966 = vmatprep.subr.bf16.mxu0 0
        %5967 = vmatpush1.bf16.msra.mxu0 0
        %5968 = vmatprep.subr.bf16.mxu0 0
        %5969 = vmatpush1.bf16.msra.mxu0 %v5953
        %5970 = vmatprep.subr.bf16.mxu0 0
        %5971 = vmatpush1.bf16.msra.mxu0 %v5952
        %5972 = vmatprep.subr.bf16.mxu0 0
        %5973 = vmatpush1.bf16.msra.mxu0 %v5951
        %5974 = vmatprep.subr.bf16.mxu0 0
        %5975 = vmatpush1.bf16.msra.mxu0 %v5950
        %5976 = vmatprep.subr.bf16.mxu0 0
        %5977 = vmatpush1.bf16.msra.mxu0 %v5949
        %5978 = vmatprep.subr.bf16.mxu0 0
        %5979 = vmatpush2.bf16.msra.mxu0 0
        %5980 = vmatprep.subr.bf16.mxu0 0
        %5981 = vmatpush2.bf16.msra.mxu0 0
        %5982 = vmatprep.subr.bf16.mxu0 0
        %5983 = vmatpush2.bf16.msra.mxu0 0
        %5984 = vmatprep.subr.bf16.mxu0 0
        %5985 = vmatpush2.bf16.msra.mxu0 0
        %5986 = vmatprep.subr.bf16.mxu0 0
        %5987 = vmatpush2.bf16.msra.mxu0 0
        %5988 = vmatprep.subr.bf16.mxu0 0
        %5989 = vmatpush2.bf16.msra.mxu0 0
        %5990 = vmatprep.subr.bf16.mxu0 0
        %5991 = vmatpush2.bf16.msra.mxu0 0
        %5992 = vmatprep.subr.bf16.mxu0 0
        %5993 = vmatpush2.bf16.msra.mxu0 0
        %5994 = vmatprep.mubr.bf16.mxu0 0
        %5995 = vmatmul.mubr.bf16.gmra.mxu0 %v5960
        %v5996 = vpop.f32.mrf.mxu0
        %v5997 = vadd.f32 %v5893, %v5996
        %v5998 = vpop.f32.mrf.mxu0
        %v5999 = vpop.f32.mrf.mxu0
        %v6000 = vpop.f32.mrf.mxu0
        %6001 = vdwg.mxu0
        %v6002 = vpack.c.bf16 %v5726, %v5726
        %v6003 = vpack.c.bf16 %v5730, %v5730
        %v6004 = vpack.c.bf16 %v5734, %v5734
        %v6005 = vpack.c.bf16 %v5738, %v5738
        %v6006 = vpack.c.bf16 %v5742, %v5742
        %v6007 = vpack.c.bf16 %v5746, %v5746
        %v6008 = vpack.c.bf16 %v5750, %v5750
        %v6009 = vpack.c.bf16 %v5754, %v5754
        %s6010 = scalar_lea.vmem %s5, 80
        %v6011 = vld [vmem:[%s6010] sm:$0xf]
        %v6012 = vld [vmem:[%s6010 + $0x4] sm:$0xf]
        %v6013 = vld [vmem:[%s6010 + $0x8] sm:$0xf]
        %v6014 = vld [vmem:[%s6010 + $0xc] sm:$0xf]
        %v6015 = vld [vmem:[%s6010 + $0x10] sm:$0xf]
        %v6016 = vld [vmem:[%s6010 + $0x14] sm:$0xf]
        %v6017 = vld [vmem:[%s6010 + $0x18] sm:$0xf]
        %v6018 = vld [vmem:[%s6010 + $0x1c] sm:$0xf]
        %v6019 = vld [vmem:[%s6010 + $0x20] sm:$0xf]
        %v6020 = vld [vmem:[%s6010 + $0x24] sm:$0xf]
        %v6029 = vunpack.c.l.b16 %v6002
        %v6030 = vunpack.c.l.b16 %v6003
        %v6031 = vunpack.c.l.b16 %v6004
        %v6032 = vunpack.c.l.b16 %v6005
        %v6033 = vunpack.c.l.b16 %v6006
        %v6034 = vunpack.c.l.b16 %v6007
        %v6035 = vunpack.c.l.b16 %v6008
        %v6036 = vunpack.c.l.b16 %v6009
        %v6037 = vrot.slane %v6030, 7
        %v6038 = vsel %vm3675, %v6037, %v6029
        %v6039 = vrot.slane %v6031, 6
        %v6040 = vsel %vm3678, %v6039, %v6038
        %v6041 = vrot.slane %v6032, 5
        %v6042 = vsel %vm3681, %v6041, %v6040
        %v6043 = vrot.slane %v6033, 4
        %v6044 = vsel %vm3684, %v6043, %v6042
        %v6045 = vrot.slane %v6034, 3
        %v6046 = vsel %vm3687, %v6045, %v6044
        %v6047 = vrot.slane %v6035, 2
        %v6048 = vsel %vm3690, %v6047, %v6046
        %v6049 = vrot.slane %v6036, 1
        %v6050 = vsel %vm3693, %v6049, %v6048
        %v6051 = vpack.c.b16 %v6050, %v6050
        %v6062 = vunpack.c.l.b16 %v6011
        %v6063 = vunpack.c.l.b16 %v6012
        %v6064 = vunpack.c.l.b16 %v6013
        %v6065 = vunpack.c.l.b16 %v6014
        %v6066 = vunpack.c.l.b16 %v6015
        %v6067 = vunpack.c.l.b16 %v6016
        %v6068 = vunpack.c.l.b16 %v6017
        %v6069 = vunpack.c.l.b16 %v6018
        %v6070 = vunpack.c.l.b16 %v6019
        %v6071 = vunpack.c.l.b16 %v6020
        %v6072 = vpack.c.b16 %v6063, %v6062
        %v6073 = vpack.c.b16 %v6065, %v6064
        %v6074 = vpack.c.b16 %v6067, %v6066
        %v6075 = vpack.c.b16 %v6069, %v6068
        %v6076 = vpack.c.b16 %v6071, %v6070
        %v6083 = vsel %vm5854, %v6051, 0
        %6085 = vmatprep.subr.bf16.mxu0 0
        %6086 = vmatpush1.bf16.msra.mxu0 0
        %6087 = vmatprep.subr.bf16.mxu0 0
        %6088 = vmatpush1.bf16.msra.mxu0 0
        %6089 = vmatprep.subr.bf16.mxu0 0
        %6090 = vmatpush1.bf16.msra.mxu0 0
        %6091 = vmatprep.subr.bf16.mxu0 0
        %6092 = vmatpush1.bf16.msra.mxu0 %v6076
        %6093 = vmatprep.subr.bf16.mxu0 0
        %6094 = vmatpush1.bf16.msra.mxu0 %v6075
        %6095 = vmatprep.subr.bf16.mxu0 0
        %6096 = vmatpush1.bf16.msra.mxu0 %v6074
        %6097 = vmatprep.subr.bf16.mxu0 0
        %6098 = vmatpush1.bf16.msra.mxu0 %v6073
        %6099 = vmatprep.subr.bf16.mxu0 0
        %6100 = vmatpush1.bf16.msra.mxu0 %v6072
        %6101 = vmatprep.subr.bf16.mxu0 0
        %6102 = vmatpush2.bf16.msra.mxu0 0
        %6103 = vmatprep.subr.bf16.mxu0 0
        %6104 = vmatpush2.bf16.msra.mxu0 0
        %6105 = vmatprep.subr.bf16.mxu0 0
        %6106 = vmatpush2.bf16.msra.mxu0 0
        %6107 = vmatprep.subr.bf16.mxu0 0
        %6108 = vmatpush2.bf16.msra.mxu0 0
        %6109 = vmatprep.subr.bf16.mxu0 0
        %6110 = vmatpush2.bf16.msra.mxu0 0
        %6111 = vmatprep.subr.bf16.mxu0 0
        %6112 = vmatpush2.bf16.msra.mxu0 0
        %6113 = vmatprep.subr.bf16.mxu0 0
        %6114 = vmatpush2.bf16.msra.mxu0 0
        %6115 = vmatprep.subr.bf16.mxu0 0
        %6116 = vmatpush2.bf16.msra.mxu0 0
        %6117 = vmatprep.mubr.bf16.mxu0 0
        %6118 = vmatmul.mubr.bf16.gmra.mxu0 %v6083
        %v6119 = vpop.f32.mrf.mxu0
        %v6120 = vadd.f32 0.0, %v6119
        %v6121 = vpop.f32.mrf.mxu0
        %v6122 = vpop.f32.mrf.mxu0
        %v6123 = vpop.f32.mrf.mxu0
        %6124 = vdwg.mxu0
        %v6125 = vadd.f32 %v5997, %v6120
        %v6126 = vpack.c.bf16 %v5727, %v5727
        %v6127 = vpack.c.bf16 %v5731, %v5731
        %v6128 = vpack.c.bf16 %v5735, %v5735
        %v6129 = vpack.c.bf16 %v5739, %v5739
        %v6130 = vpack.c.bf16 %v5743, %v5743
        %v6131 = vpack.c.bf16 %v5747, %v5747
        %v6132 = vpack.c.bf16 %v5751, %v5751
        %v6133 = vpack.c.bf16 %v5755, %v5755
        %s6134 = scalar_lea.vmem %s5, 120
        %v6135 = vld [vmem:[%s6134] sm:$0xf]
        %v6136 = vld [vmem:[%s6134 + $0x4] sm:$0xf]
        %v6137 = vld [vmem:[%s6134 + $0x8] sm:$0xf]
        %v6138 = vld [vmem:[%s6134 + $0xc] sm:$0xf]
        %v6139 = vld [vmem:[%s6134 + $0x10] sm:$0xf]
        %v6140 = vld [vmem:[%s6134 + $0x14] sm:$0xf]
        %v6141 = vld [vmem:[%s6134 + $0x18] sm:$0xf]
        %v6142 = vld [vmem:[%s6134 + $0x1c] sm:$0xf]
        %v6143 = vld [vmem:[%s6134 + $0x20] sm:$0xf]
        %v6144 = vld [vmem:[%s6134 + $0x24] sm:$0xf]
        %v6153 = vunpack.c.l.b16 %v6126
        %v6154 = vunpack.c.l.b16 %v6127
        %v6155 = vunpack.c.l.b16 %v6128
        %v6156 = vunpack.c.l.b16 %v6129
        %v6157 = vunpack.c.l.b16 %v6130
        %v6158 = vunpack.c.l.b16 %v6131
        %v6159 = vunpack.c.l.b16 %v6132
        %v6160 = vunpack.c.l.b16 %v6133
        %v6161 = vrot.slane %v6154, 7
        %v6162 = vsel %vm3675, %v6161, %v6153
        %v6163 = vrot.slane %v6155, 6
        %v6164 = vsel %vm3678, %v6163, %v6162
        %v6165 = vrot.slane %v6156, 5
        %v6166 = vsel %vm3681, %v6165, %v6164
        %v6167 = vrot.slane %v6157, 4
        %v6168 = vsel %vm3684, %v6167, %v6166
        %v6169 = vrot.slane %v6158, 3
        %v6170 = vsel %vm3687, %v6169, %v6168
        %v6171 = vrot.slane %v6159, 2
        %v6172 = vsel %vm3690, %v6171, %v6170
        %v6173 = vrot.slane %v6160, 1
        %v6174 = vsel %vm3693, %v6173, %v6172
        %v6175 = vpack.c.b16 %v6174, %v6174
        %v6186 = vunpack.c.l.b16 %v6135
        %v6187 = vunpack.c.l.b16 %v6136
        %v6188 = vunpack.c.l.b16 %v6137
        %v6189 = vunpack.c.l.b16 %v6138
        %v6190 = vunpack.c.l.b16 %v6139
        %v6191 = vunpack.c.l.b16 %v6140
        %v6192 = vunpack.c.l.b16 %v6141
        %v6193 = vunpack.c.l.b16 %v6142
        %v6194 = vunpack.c.l.b16 %v6143
        %v6195 = vunpack.c.l.b16 %v6144
        %v6196 = vpack.c.b16 %v6187, %v6186
        %v6197 = vpack.c.b16 %v6189, %v6188
        %v6198 = vpack.c.b16 %v6191, %v6190
        %v6199 = vpack.c.b16 %v6193, %v6192
        %v6200 = vpack.c.b16 %v6195, %v6194
        %v6207 = vsel %vm5854, %v6175, 0
        %6209 = vmatprep.subr.bf16.mxu0 0
        %6210 = vmatpush1.bf16.msra.mxu0 0
        %6211 = vmatprep.subr.bf16.mxu0 0
        %6212 = vmatpush1.bf16.msra.mxu0 0
        %6213 = vmatprep.subr.bf16.mxu0 0
        %6214 = vmatpush1.bf16.msra.mxu0 0
        %6215 = vmatprep.subr.bf16.mxu0 0
        %6216 = vmatpush1.bf16.msra.mxu0 %v6200
        %6217 = vmatprep.subr.bf16.mxu0 0
        %6218 = vmatpush1.bf16.msra.mxu0 %v6199
        %6219 = vmatprep.subr.bf16.mxu0 0
        %6220 = vmatpush1.bf16.msra.mxu0 %v6198
        %6221 = vmatprep.subr.bf16.mxu0 0
        %6222 = vmatpush1.bf16.msra.mxu0 %v6197
        %6223 = vmatprep.subr.bf16.mxu0 0
        %6224 = vmatpush1.bf16.msra.mxu0 %v6196
        %6225 = vmatprep.subr.bf16.mxu0 0
        %6226 = vmatpush2.bf16.msra.mxu0 0
        %6227 = vmatprep.subr.bf16.mxu0 0
        %6228 = vmatpush2.bf16.msra.mxu0 0
        %6229 = vmatprep.subr.bf16.mxu0 0
        %6230 = vmatpush2.bf16.msra.mxu0 0
        %6231 = vmatprep.subr.bf16.mxu0 0
        %6232 = vmatpush2.bf16.msra.mxu0 0
        %6233 = vmatprep.subr.bf16.mxu0 0
        %6234 = vmatpush2.bf16.msra.mxu0 0
        %6235 = vmatprep.subr.bf16.mxu0 0
        %6236 = vmatpush2.bf16.msra.mxu0 0
        %6237 = vmatprep.subr.bf16.mxu0 0
        %6238 = vmatpush2.bf16.msra.mxu0 0
        %6239 = vmatprep.subr.bf16.mxu0 0
        %6240 = vmatpush2.bf16.msra.mxu0 0
        %6241 = vmatprep.mubr.bf16.mxu0 0
        %6242 = vmatmul.mubr.bf16.gmra.mxu0 %v6207
        %v6243 = vpop.f32.mrf.mxu0
        %v6244 = vadd.f32 0.0, %v6243
        %v6245 = vpop.f32.mrf.mxu0
        %v6246 = vpop.f32.mrf.mxu0
        %v6247 = vpop.f32.mrf.mxu0
        %6248 = vdwg.mxu0
        %v6249 = vadd.f32 %v6125, %v6244
        %v6250 = vld [vmem:[%s6] sm:$0x1]
        %v6252 = vlaneseq
        %v6253 = vshrl.u32 %v6252, 7
        %v6254 = vsub.s32 0, %v6253
        %v6255 = vrot.slane %v6250, %v6254
        %v6257 = vadd.f32 %v6249, %v6255
        %v6258 = vmax.f32 %v6257, 0.0
        %v6259 = vpack.c.bf16 %v6258, %v6258
        %v6260 = vld [vmem:[%s7] sm:$0xf]
        %v6261 = vld [vmem:[%s7 + $0x4] sm:$0xf]
        %v6262 = vld [vmem:[%s7 + $0x8] sm:$0xf]
        %v6263 = vld [vmem:[%s7 + $0xc] sm:$0xf]
        %v6264 = vld [vmem:[%s7 + $0x10] sm:$0xf]
        %v6265 = vld [vmem:[%s7 + $0x14] sm:$0xf]
        %v6266 = vld [vmem:[%s7 + $0x18] sm:$0x1]
        %v6267 = vld [vmem:[%s8] sm:$0x1]
        %v6269 = vlaneseq
        %v6270 = vshrl.u32 %v6269, 7
        %v6271 = vsub.s32 0, %v6270
        %v6272 = vrot.slane %v6267, %v6271
        %v6281 = vunpack.c.l.b16 %v6260
        %v6282 = vunpack.c.l.b16 %v6261
        %v6283 = vunpack.c.l.b16 %v6262
        %v6284 = vunpack.c.l.b16 %v6263
        %v6285 = vunpack.c.l.b16 %v6264
        %v6286 = vunpack.c.l.b16 %v6265
        %v6287 = vunpack.c.l.b16 %v6266
        %v6288 = vpack.c.b16 %v6282, %v6281
        %v6289 = vpack.c.b16 %v6284, %v6283
        %v6290 = vpack.c.b16 %v6286, %v6285
        %v6291 = vpack.c.b16 %v6287, %v6287
        %vm6295 = vcmask 408576
        %v6297 = vsel %vm6295, %v6259, 0
        %vm6299 = vcmask 1040384
        %v6301 = vsel %vm6299, %v6291, 0
        %6303 = vmatprep.subr.bf16.mxu0 0
        %6304 = vmatpush1.bf16.msra.mxu0 0
        %6305 = vmatprep.subr.bf16.mxu0 0
        %6306 = vmatpush1.bf16.msra.mxu0 0
        %6307 = vmatprep.subr.bf16.mxu0 0
        %6308 = vmatpush1.bf16.msra.mxu0 0
        %6309 = vmatprep.subr.bf16.mxu0 0
        %6310 = vmatpush1.bf16.msra.mxu0 0
        %6311 = vmatprep.subr.bf16.mxu0 0
        %6312 = vmatpush1.bf16.msra.mxu0 %v6301
        %6313 = vmatprep.subr.bf16.mxu0 0
        %6314 = vmatpush1.bf16.msra.mxu0 %v6290
        %6315 = vmatprep.subr.bf16.mxu0 0
        %6316 = vmatpush1.bf16.msra.mxu0 %v6289
        %6317 = vmatprep.subr.bf16.mxu0 0
        %6318 = vmatpush1.bf16.msra.mxu0 %v6288
        %6319 = vmatprep.subr.bf16.mxu0 0
        %6320 = vmatpush2.bf16.msra.mxu0 0
        %6321 = vmatprep.subr.bf16.mxu0 0
        %6322 = vmatpush2.bf16.msra.mxu0 0
        %6323 = vmatprep.subr.bf16.mxu0 0
        %6324 = vmatpush2.bf16.msra.mxu0 0
        %6325 = vmatprep.subr.bf16.mxu0 0
        %6326 = vmatpush2.bf16.msra.mxu0 0
        %6327 = vmatprep.subr.bf16.mxu0 0
        %6328 = vmatpush2.bf16.msra.mxu0 0
        %6329 = vmatprep.subr.bf16.mxu0 0
        %6330 = vmatpush2.bf16.msra.mxu0 0
        %6331 = vmatprep.subr.bf16.mxu0 0
        %6332 = vmatpush2.bf16.msra.mxu0 0
        %6333 = vmatprep.subr.bf16.mxu0 0
        %6334 = vmatpush2.bf16.msra.mxu0 0
        %6335 = vmatprep.mubr.bf16.mxu0 0
        %6336 = vmatmul.mubr.bf16.gmra.mxu0 %v6297
        %v6337 = vpop.f32.mrf.mxu0
        %v6338 = vadd.f32 %v6272, %v6337
        %v6339 = vpop.f32.mrf.mxu0
        %v6340 = vpop.f32.mrf.mxu0
        %v6341 = vpop.f32.mrf.mxu0
        %6342 = vdwg.mxu0
        %6343 = vst [vmem:[%s328] sm:$0xff] %v6338
        %s6344 = sand.u32 %s225, 1
        %s6345 = scalar_lea.sflag [#allocation3], %s6344
        %s6346 = sand.u32 %s225, 1
        %s6347 = smul.addr %s6346, 8
        %s6348 = scalar_lea.vmem [#allocation2], %s6347
        // Predicated region
        $region57: #{tpu_custom_call.1} parent=55 // pred_check
          %p6349 = pneg %p235
        $region58: #{tpu_custom_call.1} parent=55 // pred_check_branch
          %6351 = sbr.rel (%p6349) target = $region60
        $region59: #{tpu_custom_call.1} parent=55 // pred_region
          %s6353 = ssub.s32 128, 128
          %6354 = vsyncadd %s6345, %s6353
          %s6355 = smul.addr %s23, 128
          %s6356 = scalar_lea.hbm %s9, %s6355
          %s6358 = sshll.u32 %s6348, 4
          %s6359 = int_to_ptr.vmem [resolvable:$true] %s6358
          %6361 = dma.vmem_to_hbm [thread:$0]  %s6359, 128, %s6356, %s6345
        $region60: #{tpu_custom_call.1} parent=55 // pred_fallthru
          _
      $region56: #{tpu_custom_call.1} parent=5 // pred_fallthru
        _
      %p6362 = scmp.le.s32.totalorder 2, %s18
      // Predicated region
      $region61: #{tpu_custom_call.1} parent=5 // pred_check
        %p6363 = pneg %p6362
      $region62: #{tpu_custom_call.1} parent=5 // pred_check_branch
        %6365 = sbr.rel (%p6363) target = $region64
      $region63: #{tpu_custom_call.1} parent=5 // pred_region
        %s6366 = ssub.s32 %s18, 2
        // Predicated region
        $region65: #{tpu_custom_call.1} parent=63 // pred_check
          %p6367 = pneg %p241
        $region66: #{tpu_custom_call.1} parent=63 // pred_check_branch
          %6369 = sbr.rel (%p6367) target = $region68
        $region67: #{tpu_custom_call.1} parent=63 // pred_region
          %s6370 = sand.u32 %s226, 1
          %s6371 = scalar_lea.sflag [#allocation3], %s6370
          %s6372 = sand.u32 %s226, 1
          %s6373 = smul.addr %s6372, 8
          %s6374 = scalar_lea.vmem [#allocation2], %s6373
          %6375 = dma.done %s6371, 128
        $region68: #{tpu_custom_call.1} parent=63 // pred_fallthru
          _
      $region64: #{tpu_custom_call.1} parent=5 // pred_fallthru
        _
    $region6: #{tpu_custom_call.1} parent=1 // loop_footer
      %s22 = sadd.s32 1, %s18
    $region7: #{tpu_custom_call.1} parent=1 // loop_footer_branch
      %17 = sbr.rel target = $region3
    $region8: #{tpu_custom_call.1} parent=1 // loop_exit
      _
    %6376 = vsyncpa [#allocation3], 1
    %s6377 = scalar_lea.sflag [#allocation3], 1
    %6378 = vsyncpa %s6377, 1

</llo_original>
